<compile_context>
chip_gen: v7x
topology: tpu7x:2x2x1
jax: 0.10.0
libtpu: 0.0.40
codegen_flags: <defaults>
</compile_context>

<pallas_src>
import jax
import jax.numpy as jnp
import numpy as np
from jax.experimental import pallas as pl
from jax.experimental.pallas import tpu as pltpu

NUM_DEMOGRAPHICS = 2
EMBED_SIZE = 128
HIDDEN_SIZES = (512, 1024, 1024)


def _simple_nn_kernel(dem_ref, codes_ref, embed_ref,
                      w1d_ref, w1e_ref, b1_ref,
                      w2_ref, b2_ref,
                      w3_ref, b3_ref,
                      w4_ref, b4_ref,
                      o_ref):
    # Mean-pool of active-code embeddings:
    #   embed(nonzero(c)).mean(0) == (mask @ E) / sum(mask),  mask = (c != 0)
    mask = (codes_ref[...] != 0).astype(jnp.float32)                 # (tb, V)
    counts = jnp.sum(mask, axis=1, keepdims=True)                    # (tb, 1)
    emb_sum = jnp.dot(mask, embed_ref[...],
                      preferred_element_type=jnp.float32)            # (tb, EMBED)
    emb_mean = emb_sum / counts

    # fc1 split over [dem | emb_mean] (avoids a lane-misaligned concat);
    # bn1 is already folded into w1/b1 by the wrapper. Dropout == identity.
    h = (jnp.dot(emb_mean, w1e_ref[...], preferred_element_type=jnp.float32)
         + jnp.dot(dem_ref[...], w1d_ref[...], preferred_element_type=jnp.float32)
         + b1_ref[...])
    h = jnp.maximum(h, 0.0)
    h = jnp.dot(h, w2_ref[...], preferred_element_type=jnp.float32) + b2_ref[...]
    h = jnp.maximum(h, 0.0)
    h = jnp.dot(h, w3_ref[...], preferred_element_type=jnp.float32) + b3_ref[...]
    h = jnp.maximum(h, 0.0)
    h = jnp.dot(h, w4_ref[...], preferred_element_type=jnp.float32) + b4_ref[...]
    o_ref[...] = h.astype(o_ref.dtype)


def _fold_bn_into_linear(w, b, gamma, beta, mean, var, eps=1e-5):
    """Fold inference BatchNorm1d into the preceding Linear.

    BN(x @ W^T + b) = x @ (W^T * s) + ((b - mean) * s + beta),
    s = gamma / sqrt(var + eps).  Returns ((in, out) weight, (out,) bias).
    """
    s = gamma * jax.lax.rsqrt(var + eps)
    return w.T * s[None, :], (b - mean) * s + beta


def simple_nn_forward(src, params, *, tile_b=256, interpret=False):
    """src: (B, D_in) f32 — cols [0:2] demographics, cols [2:] code indicators."""
    src = src.astype(jnp.float32)
    dem = src[:, :NUM_DEMOGRAPHICS]
    codes = src[:, NUM_DEMOGRAPHICS:]
    B = src.shape[0]
    V = codes.shape[1]

    # ---- wrapper-side algebraic folding ----
    w1t, b1 = _fold_bn_into_linear(params["w1"], params["b1"], *params["bn1"])
    w2t, b2 = _fold_bn_into_linear(params["w2"], params["b2"], *params["bn2"])
    w3t, b3 = _fold_bn_into_linear(params["w3"], params["b3"], *params["bn3"])
    w4t, b4 = params["w4"].T, params["b4"]

    w1_dem = w1t[:NUM_DEMOGRAPHICS]          # (2, H1)
    w1_emb = w1t[NUM_DEMOGRAPHICS:]          # (EMBED_SIZE, H1)
    embed = params["embed"]                  # (V, EMBED_SIZE)

    h1, h2, h3 = w1t.shape[1], w2t.shape[1], w3t.shape[1]
    d_out = w4t.shape[1]

    # ---- batch tiling (sublane-aligned); amortizes launch/DMA/masked stores ----
    if B <= tile_b:
        tb = ((B + 7) // 8) * 8
    else:
        tb = tile_b
    bp = ((B + tb - 1) // tb) * tb
    if bp != B:
        pad = ((0, bp - B), (0, 0))
        dem = jnp.pad(dem, pad)
        codes = jnp.pad(codes, pad)

    row = lambda i: (i, 0)
    const = lambda i: (0, 0)

    out = pl.pallas_call(
        _simple_nn_kernel,
        out_shape=jax.ShapeDtypeStruct((bp, d_out), jnp.float32),
        grid_spec=pltpu.PrefetchScalarGridSpec(
            num_scalar_prefetch=0,
            grid=(bp // tb,),
            in_specs=[
                pl.BlockSpec((tb, NUM_DEMOGRAPHICS), row),
                pl.BlockSpec((tb, V), row),
                pl.BlockSpec((V, EMBED_SIZE), const),
                pl.BlockSpec((NUM_DEMOGRAPHICS, h1), const),
                pl.BlockSpec((EMBED_SIZE, h1), const),
                pl.BlockSpec((1, h1), const),
                pl.BlockSpec((h1, h2), const),
                pl.BlockSpec((1, h2), const),
                pl.BlockSpec((h2, h3), const),
                pl.BlockSpec((1, h3), const),
                pl.BlockSpec((h3, d_out), const),
                pl.BlockSpec((1, d_out), const),
            ],
            out_specs=pl.BlockSpec((tb, d_out), row),
        ),
        compiler_params=pltpu.CompilerParams(
            dimension_semantics=("parallel",),        # shards B across TCs on v7x
            vmem_limit_bytes=32 * 1024 * 1024,
        ),
        interpret=interpret,
    )(dem, codes, embed,
      w1_dem, w1_emb, b1.reshape(1, h1),
      w2t, b2.reshape(1, h2),
      w3t, b3.reshape(1, h3),
      w4t, b4.reshape(1, d_out))
    return out[:B]


def simple_nn_reference(src, params):
    dem = src[:, :NUM_DEMOGRAPHICS]
    codes = src[:, NUM_DEMOGRAPHICS:]
    mask = (codes != 0).astype(jnp.float32)
    emb_mean = (mask @ params["embed"]) / jnp.sum(mask, axis=1, keepdims=True)
    x = jnp.concatenate([dem, emb_mean], axis=1)

    def linear(h, w, b):
        return h @ w.T + b[None, :]

    def bn(h, stats, eps=1e-5):
        g, be, m, v = stats
        return (h - m[None, :]) / jnp.sqrt(v[None, :] + eps) * g[None, :] + be[None, :]

    h = jax.nn.relu(bn(linear(x, params["w1"], params["b1"]), params["bn1"]))
    h = jax.nn.relu(bn(linear(h, params["w2"], params["b2"]), params["bn2"]))
    h = jax.nn.relu(bn(linear(h, params["w3"], params["b3"]), params["bn3"]))
    return linear(h, params["w4"], params["b4"])


if __name__ == "__main__":
    # Small shapes consistent with the module: D_in = 2 demographics + 64 codes,
    # EMBED_SIZE=128, hidden_sizes=[512,1024,1024] (fixed by SimpleNN), cat bins=10.
    B = 16
    D_in = 66
    num_cat_bins = 10
    V = D_in - NUM_DEMOGRAPHICS
    input_dim = NUM_DEMOGRAPHICS + EMBED_SIZE     # use_max_pool=False

    keys = iter(jax.random.split(jax.random.PRNGKey(0), 32))
    nk = lambda: next(keys)

    def linear_init(fan_in, fan_out):
        bound = 1.0 / np.sqrt(fan_in)
        w = jax.random.uniform(nk(), (fan_out, fan_in), jnp.float32, -bound, bound)
        b = jax.random.uniform(nk(), (fan_out,), jnp.float32, -bound, bound)
        return w, b

    def bn_init(n):
        gamma = jax.random.uniform(nk(), (n,), jnp.float32, 0.5, 1.5)
        beta = 0.1 * jax.random.normal(nk(), (n,), jnp.float32)
        mean = 0.1 * jax.random.normal(nk(), (n,), jnp.float32)
        var = jax.random.uniform(nk(), (n,), jnp.float32, 0.5, 1.5)
        return gamma, beta, mean, var

    w1, b1 = linear_init(input_dim, HIDDEN_SIZES[0])
    w2, b2 = linear_init(HIDDEN_SIZES[0], HIDDEN_SIZES[1])
    w3, b3 = linear_init(HIDDEN_SIZES[1], HIDDEN_SIZES[2])
    w4, b4 = linear_init(HIDDEN_SIZES[2], num_cat_bins)
    params = {
        "embed": jax.random.normal(nk(), (V, EMBED_SIZE), jnp.float32),
        "w1": w1, "b1": b1, "bn1": bn_init(HIDDEN_SIZES[0]),
        "w2": w2, "b2": b2, "bn2": bn_init(HIDDEN_SIZES[1]),
        "w3": w3, "b3": b3, "bn3": bn_init(HIDDEN_SIZES[2]),
        "w4": w4, "b4": b4,
    }

    dem = jax.random.normal(nk(), (B, NUM_DEMOGRAPHICS), jnp.float32)
    codes = (jax.random.uniform(nk(), (B, V)) < 0.25).astype(jnp.float32)
    codes = codes.at[:, 0].set(1.0)   # guarantee >= 1 active code per row
    src = jnp.concatenate([dem, codes], axis=1)

    out = jax.block_until_ready(simple_nn_forward(src, params))
    ref = jax.block_until_ready(simple_nn_reference(src, params))
    np.testing.assert_allclose(np.asarray(out), np.asarray(ref), rtol=1e-4, atol=1e-4)

    print("KERNEL_OK")
</pallas_src>

<mosaic_0001>
module attributes {stable_mosaic.version = 11 : i64} {
  func.func @_simple_nn_kernel(%arg0: i32, %arg1: memref<16x2xf32, #tpu.memory_space<vmem>>, %arg2: memref<16x64xf32, #tpu.memory_space<vmem>>, %arg3: memref<64x128xf32, #tpu.memory_space<vmem>>, %arg4: memref<2x512xf32, #tpu.memory_space<vmem>>, %arg5: memref<128x512xf32, #tpu.memory_space<vmem>>, %arg6: memref<1x512xf32, #tpu.memory_space<vmem>>, %arg7: memref<512x1024xf32, #tpu.memory_space<vmem>>, %arg8: memref<1x1024xf32, #tpu.memory_space<vmem>>, %arg9: memref<1024x1024xf32, #tpu.memory_space<vmem>>, %arg10: memref<1x1024xf32, #tpu.memory_space<vmem>>, %arg11: memref<1024x10xf32, #tpu.memory_space<vmem>>, %arg12: memref<1x10xf32, #tpu.memory_space<vmem>>, %arg13: memref<16x10xf32, #tpu.memory_space<vmem>>) attributes {dimension_semantics = [#tpu.dimension_semantics<parallel>], iteration_bounds = array<i64: 1>, scalar_prefetch = 0 : i64, scratch_operands = 0 : i64, tpu.core_type = #tpu.core_type<tc>, window_params = [{transform_indices = @transform_0, window_bounds = array<i64: 16, 2>}, {transform_indices = @transform_1, window_bounds = array<i64: 16, 64>}, {pipeline_mode = #tpu.pipeline_mode<synchronous>, transform_indices = @transform_2, window_bounds = array<i64: 64, 128>}, {pipeline_mode = #tpu.pipeline_mode<synchronous>, transform_indices = @transform_3, window_bounds = array<i64: 2, 512>}, {pipeline_mode = #tpu.pipeline_mode<synchronous>, transform_indices = @transform_4, window_bounds = array<i64: 128, 512>}, {pipeline_mode = #tpu.pipeline_mode<synchronous>, transform_indices = @transform_5, window_bounds = array<i64: 1, 512>}, {pipeline_mode = #tpu.pipeline_mode<synchronous>, transform_indices = @transform_6, window_bounds = array<i64: 512, 1024>}, {pipeline_mode = #tpu.pipeline_mode<synchronous>, transform_indices = @transform_7, window_bounds = array<i64: 1, 1024>}, {pipeline_mode = #tpu.pipeline_mode<synchronous>, transform_indices = @transform_8, window_bounds = array<i64: 1024, 1024>}, {pipeline_mode = #tpu.pipeline_mode<synchronous>, transform_indices = @transform_9, window_bounds = array<i64: 1, 1024>}, {pipeline_mode = #tpu.pipeline_mode<synchronous>, transform_indices = @transform_10, window_bounds = array<i64: 1024, 10>}, {pipeline_mode = #tpu.pipeline_mode<synchronous>, transform_indices = @transform_11, window_bounds = array<i64: 1, 10>}, {transform_indices = @transform_12, window_bounds = array<i64: 16, 10>}]} {
    %c0 = arith.constant 0 : index
    %c0_0 = arith.constant 0 : index
    %0 = vector.load %arg2[%c0, %c0_0] : memref<16x64xf32, #tpu.memory_space<vmem>>, vector<16x64xf32>
    %cst = arith.constant 0.000000e+00 : f32
    %1 = vector.broadcast %cst : f32 to vector<16x64xf32>
    %2 = arith.cmpf one, %0, %1 : vector<16x64xf32>
    %3 = arith.extui %2 : vector<16x64xi1> to vector<16x64xi32>
    %4 = arith.sitofp %3 : vector<16x64xi32> to vector<16x64xf32>
    %cst_1 = arith.constant dense<0.000000e+00> : vector<16xf32>
    %5 = vector.multi_reduction <add>, %4, %cst_1 [1] : vector<16x64xf32> to vector<16xf32>
    %6 = vector.shape_cast %5 : vector<16xf32> to vector<16x1xf32>
    %c0_2 = arith.constant 0 : index
    %c0_3 = arith.constant 0 : index
    %7 = vector.load %arg3[%c0_2, %c0_3] : memref<64x128xf32, #tpu.memory_space<vmem>>, vector<64x128xf32>
    %cst_4 = arith.constant dense<0.000000e+00> : vector<16x128xf32>
    %8 = tpu.matmul %4, %7, %cst_4 {dimension_numbers = #tpu.dot_dimension_numbers<[1], [0], [0], [1], [0, 0, 1, 1], [], []>} : vector<16x64xf32>, vector<64x128xf32>, vector<16x128xf32> -> vector<16x128xf32>
    %9 = vector.broadcast %6 : vector<16x1xf32> to vector<16x128xf32>
    %10 = arith.divf %8, %9 : vector<16x128xf32>
    %c0_5 = arith.constant 0 : index
    %c0_6 = arith.constant 0 : index
    %11 = vector.load %arg5[%c0_5, %c0_6] : memref<128x512xf32, #tpu.memory_space<vmem>>, vector<128x512xf32>
    %cst_7 = arith.constant dense<0.000000e+00> : vector<16x512xf32>
    %12 = tpu.matmul %10, %11, %cst_7 {dimension_numbers = #tpu.dot_dimension_numbers<[1], [0], [0], [1], [0, 0, 1, 1], [], []>} : vector<16x128xf32>, vector<128x512xf32>, vector<16x512xf32> -> vector<16x512xf32>
    %c0_8 = arith.constant 0 : index
    %c0_9 = arith.constant 0 : index
    %13 = vector.load %arg1[%c0_8, %c0_9] : memref<16x2xf32, #tpu.memory_space<vmem>>, vector<16x2xf32>
    %c0_10 = arith.constant 0 : index
    %c0_11 = arith.constant 0 : index
    %14 = vector.load %arg4[%c0_10, %c0_11] : memref<2x512xf32, #tpu.memory_space<vmem>>, vector<2x512xf32>
    %cst_12 = arith.constant dense<0.000000e+00> : vector<16x512xf32>
    %15 = tpu.matmul %13, %14, %cst_12 {dimension_numbers = #tpu.dot_dimension_numbers<[1], [0], [0], [1], [0, 0, 1, 1], [], []>} : vector<16x2xf32>, vector<2x512xf32>, vector<16x512xf32> -> vector<16x512xf32>
    %16 = arith.addf %12, %15 : vector<16x512xf32>
    %c0_13 = arith.constant 0 : index
    %c0_14 = arith.constant 0 : index
    %17 = vector.load %arg6[%c0_13, %c0_14] : memref<1x512xf32, #tpu.memory_space<vmem>>, vector<1x512xf32>
    %18 = vector.broadcast %17 : vector<1x512xf32> to vector<16x512xf32>
    %19 = arith.addf %16, %18 : vector<16x512xf32>
    %cst_15 = arith.constant 0.000000e+00 : f32
    %20 = vector.broadcast %cst_15 : f32 to vector<16x512xf32>
    %21 = arith.maximumf %19, %20 : vector<16x512xf32>
    %c0_16 = arith.constant 0 : index
    %c0_17 = arith.constant 0 : index
    %22 = vector.load %arg7[%c0_16, %c0_17] : memref<512x1024xf32, #tpu.memory_space<vmem>>, vector<512x1024xf32>
    %cst_18 = arith.constant dense<0.000000e+00> : vector<16x1024xf32>
    %23 = tpu.matmul %21, %22, %cst_18 {dimension_numbers = #tpu.dot_dimension_numbers<[1], [0], [0], [1], [0, 0, 1, 1], [], []>} : vector<16x512xf32>, vector<512x1024xf32>, vector<16x1024xf32> -> vector<16x1024xf32>
    %c0_19 = arith.constant 0 : index
    %c0_20 = arith.constant 0 : index
    %24 = vector.load %arg8[%c0_19, %c0_20] : memref<1x1024xf32, #tpu.memory_space<vmem>>, vector<1x1024xf32>
    %25 = vector.broadcast %24 : vector<1x1024xf32> to vector<16x1024xf32>
    %26 = arith.addf %23, %25 : vector<16x1024xf32>
    %cst_21 = arith.constant 0.000000e+00 : f32
    %27 = vector.broadcast %cst_21 : f32 to vector<16x1024xf32>
    %28 = arith.maximumf %26, %27 : vector<16x1024xf32>
    %c0_22 = arith.constant 0 : index
    %c0_23 = arith.constant 0 : index
    %29 = vector.load %arg9[%c0_22, %c0_23] : memref<1024x1024xf32, #tpu.memory_space<vmem>>, vector<1024x1024xf32>
    %cst_24 = arith.constant dense<0.000000e+00> : vector<16x1024xf32>
    %30 = tpu.matmul %28, %29, %cst_24 {dimension_numbers = #tpu.dot_dimension_numbers<[1], [0], [0], [1], [0, 0, 1, 1], [], []>} : vector<16x1024xf32>, vector<1024x1024xf32>, vector<16x1024xf32> -> vector<16x1024xf32>
    %c0_25 = arith.constant 0 : index
    %c0_26 = arith.constant 0 : index
    %31 = vector.load %arg10[%c0_25, %c0_26] : memref<1x1024xf32, #tpu.memory_space<vmem>>, vector<1x1024xf32>
    %32 = vector.broadcast %31 : vector<1x1024xf32> to vector<16x1024xf32>
    %33 = arith.addf %30, %32 : vector<16x1024xf32>
    %cst_27 = arith.constant 0.000000e+00 : f32
    %34 = vector.broadcast %cst_27 : f32 to vector<16x1024xf32>
    %35 = arith.maximumf %33, %34 : vector<16x1024xf32>
    %c0_28 = arith.constant 0 : index
    %c0_29 = arith.constant 0 : index
    %36 = vector.load %arg11[%c0_28, %c0_29] : memref<1024x10xf32, #tpu.memory_space<vmem>>, vector<1024x10xf32>
    %cst_30 = arith.constant dense<0.000000e+00> : vector<16x10xf32>
    %37 = tpu.matmul %35, %36, %cst_30 {dimension_numbers = #tpu.dot_dimension_numbers<[1], [0], [0], [1], [0, 0, 1, 1], [], []>} : vector<16x1024xf32>, vector<1024x10xf32>, vector<16x10xf32> -> vector<16x10xf32>
    %c0_31 = arith.constant 0 : index
    %c0_32 = arith.constant 0 : index
    %38 = vector.load %arg12[%c0_31, %c0_32] : memref<1x10xf32, #tpu.memory_space<vmem>>, vector<1x10xf32>
    %39 = vector.broadcast %38 : vector<1x10xf32> to vector<16x10xf32>
    %40 = arith.addf %37, %39 : vector<16x10xf32>
    %c0_33 = arith.constant 0 : index
    %c0_34 = arith.constant 0 : index
    %41 = vector.load %arg13[%c0_33, %c0_34] : memref<16x10xf32, #tpu.memory_space<vmem>>, vector<16x10xf32>
    tpu.vector_store %arg13[%c0_33, %c0_34], %40 {strides = array<i32>} : memref<16x10xf32, #tpu.memory_space<vmem>>, vector<16x10xf32>,
    return
  }
  func.func @transform_0(%arg0: i32) -> (i32, i32) {
    %c0_i32 = arith.constant 0 : i32
    %c0_i32_0 = arith.constant 0 : i32
    return %arg0, %c0_i32 : i32, i32
  }
  func.func @transform_1(%arg0: i32) -> (i32, i32) {
    %c0_i32 = arith.constant 0 : i32
    %c0_i32_0 = arith.constant 0 : i32
    return %arg0, %c0_i32 : i32, i32
  }
  func.func @transform_2(%arg0: i32) -> (i32, i32) {
    %c0_i32 = arith.constant 0 : i32
    %c0_i32_0 = arith.constant 0 : i32
    %c0_i32_1 = arith.constant 0 : i32
    return %c0_i32, %c0_i32_0 : i32, i32
  }
  func.func @transform_3(%arg0: i32) -> (i32, i32) {
    %c0_i32 = arith.constant 0 : i32
    %c0_i32_0 = arith.constant 0 : i32
    %c0_i32_1 = arith.constant 0 : i32
    return %c0_i32, %c0_i32_0 : i32, i32
  }
  func.func @transform_4(%arg0: i32) -> (i32, i32) {
    %c0_i32 = arith.constant 0 : i32
    %c0_i32_0 = arith.constant 0 : i32
    %c0_i32_1 = arith.constant 0 : i32
    return %c0_i32, %c0_i32_0 : i32, i32
  }
  func.func @transform_5(%arg0: i32) -> (i32, i32) {
    %c0_i32 = arith.constant 0 : i32
    %c0_i32_0 = arith.constant 0 : i32
    %c0_i32_1 = arith.constant 0 : i32
    return %c0_i32, %c0_i32_0 : i32, i32
  }
  func.func @transform_6(%arg0: i32) -> (i32, i32) {
    %c0_i32 = arith.constant 0 : i32
    %c0_i32_0 = arith.constant 0 : i32
    %c0_i32_1 = arith.constant 0 : i32
    return %c0_i32, %c0_i32_0 : i32, i32
  }
  func.func @transform_7(%arg0: i32) -> (i32, i32) {
    %c0_i32 = arith.constant 0 : i32
    %c0_i32_0 = arith.constant 0 : i32
    %c0_i32_1 = arith.constant 0 : i32
    return %c0_i32, %c0_i32_0 : i32, i32
  }
  func.func @transform_8(%arg0: i32) -> (i32, i32) {
    %c0_i32 = arith.constant 0 : i32
    %c0_i32_0 = arith.constant 0 : i32
    %c0_i32_1 = arith.constant 0 : i32
    return %c0_i32, %c0_i32_0 : i32, i32
  }
  func.func @transform_9(%arg0: i32) -> (i32, i32) {
    %c0_i32 = arith.constant 0 : i32
    %c0_i32_0 = arith.constant 0 : i32
    %c0_i32_1 = arith.constant 0 : i32
    return %c0_i32, %c0_i32_0 : i32, i32
  }
  func.func @transform_10(%arg0: i32) -> (i32, i32) {
    %c0_i32 = arith.constant 0 : i32
    %c0_i32_0 = arith.constant 0 : i32
    %c0_i32_1 = arith.constant 0 : i32
    return %c0_i32, %c0_i32_0 : i32, i32
  }
  func.func @transform_11(%arg0: i32) -> (i32, i32) {
    %c0_i32 = arith.constant 0 : i32
    %c0_i32_0 = arith.constant 0 : i32
    %c0_i32_1 = arith.constant 0 : i32
    return %c0_i32, %c0_i32_0 : i32, i32
  }
  func.func @transform_12(%arg0: i32) -> (i32, i32) {
    %c0_i32 = arith.constant 0 : i32
    %c0_i32_0 = arith.constant 0 : i32
    return %arg0, %c0_i32 : i32, i32
  }
}

</mosaic_0001>

<llo_original>
// kernel: tpu_custom_call.1
$region0: #{tpu_custom_call.1}
  #allocation0 [shape = 'u32[]', space=smem, size = 0x4, offset = 0x4, fixed_abs, tag = 'smem constant byte address 0x4 - core index']
  #allocation1 [shape = 'u32[144,128]{1,0:T(1,128)}', space=vmem, size = 0x12000, scoped, tag = 'internal scratch']
  %s0 = inlined_call_operand.vmem [shape: f32[16,2], index: 0, kind: input, shape index: {}]
  %s1 = inlined_call_operand.hbm [shape: f32[16,64], index: 1, kind: input, shape index: {}]
  %s2 = inlined_call_operand.hbm [shape: f32[64,128], index: 2, kind: input, shape index: {}]
  %s3 = inlined_call_operand.hbm [shape: f32[2,512], index: 3, kind: input, shape index: {}]
  %s4 = inlined_call_operand.hbm [shape: f32[128,512], index: 4, kind: input, shape index: {}]
  %s5 = inlined_call_operand.hbm [shape: f32[1,512], index: 5, kind: input, shape index: {}]
  %s6 = inlined_call_operand.hbm [shape: f32[512,1024], index: 6, kind: input, shape index: {}]
  %s7 = inlined_call_operand.hbm [shape: f32[1,1024], index: 7, kind: input, shape index: {}]
  %s8 = inlined_call_operand.hbm [shape: f32[1024,1024], index: 8, kind: input, shape index: {}]
  %s9 = inlined_call_operand.hbm [shape: f32[1,1024], index: 9, kind: input, shape index: {}]
  %s10 = inlined_call_operand.vmem [shape: f32[1024,10], index: 10, kind: input, shape index: {}]
  %s11 = inlined_call_operand.hbm [shape: f32[1,10], index: 11, kind: input, shape index: {}]
  %s12 = inlined_call_operand.hbm [shape: f32[16,10], index: 12, kind: output, shape index: {}]
  %s13 = sld [smem:[#allocation0]]
  $region98: #{tpu_custom_call.1} parent=0
    _
  %s15 = ssub.s32 1, %s13
  %s16 = scalar_select 0, %s15, %s13
  $region1: #{tpu_custom_call.1} parent=0
    #allocation2 [shape = 'u8[8192]{0}', space=vmem, size = 0x2000, scoped, tag = 'input window, operand 1, single buffered']
    #allocation3 [shape = 's32[1]{0}', space=sflag, size = 0x4, scoped, tag = 'scoped memory for tpu_custom_call.1']
    #allocation4 [shape = 's32[1]{0}', space=sflag, size = 0x4, scoped, tag = 'scoped memory for tpu_custom_call.1']
    #allocation5 [shape = 'u8[32768]{0}', space=vmem, size = 0x8000, scoped, tag = 'input window, operand 2, single buffered']
    #allocation6 [shape = 's32[1]{0}', space=sflag, size = 0x4, scoped, tag = 'scoped memory for tpu_custom_call.1']
    #allocation7 [shape = 'u8[4096]{0}', space=vmem, size = 0x1000, scoped, tag = 'input window, operand 3, single buffered']
    #allocation8 [shape = 'u8[262144]{0}', space=vmem, size = 0x40000, scoped, tag = 'input window, operand 4, single buffered']
    #allocation9 [shape = 's32[1]{0}', space=sflag, size = 0x4, scoped, tag = 'scoped memory for tpu_custom_call.1']
    #allocation10 [shape = 'u8[2048]{0}', space=vmem, size = 0x800, scoped, tag = 'input window, operand 5, single buffered']
    #allocation11 [shape = 'u8[2097152]{0}', space=vmem, size = 0x200000, scoped, tag = 'input window, operand 6, single buffered']
    #allocation12 [shape = 's32[1]{0}', space=sflag, size = 0x4, scoped, tag = 'scoped memory for tpu_custom_call.1']
    #allocation13 [shape = 'u8[4096]{0}', space=vmem, size = 0x1000, scoped, tag = 'input window, operand 7, single buffered']
    #allocation14 [shape = 'u8[4194304]{0}', space=vmem, size = 0x400000, scoped, tag = 'input window, operand 8, single buffered']
    #allocation15 [shape = 's32[1]{0}', space=sflag, size = 0x4, scoped, tag = 'scoped memory for tpu_custom_call.1']
    #allocation16 [shape = 'u8[4096]{0}', space=vmem, size = 0x1000, scoped, tag = 'input window, operand 9, single buffered']
    #allocation17 [shape = 'u8[512]{0}', space=vmem, size = 0x400, scoped, tag = 'input window, operand 11, single buffered']
    #allocation18 [shape = 's32[1]{0}', space=sflag, size = 0x4, scoped, tag = 'scoped memory for tpu_custom_call.1']
    #allocation19 [shape = 'u8[8192]{0}', space=vmem, size = 0x2000, scoped, tag = 'output window, operand 0, single buffered']
    %17 = vsyncpa [#allocation3], 0
    %18 = vsyncpa [#allocation6], 0
    %19 = vsyncpa [#allocation9], 0
    %20 = vsyncpa [#allocation12], 0
    %21 = vsyncpa [#allocation15], 0
    %22 = vsyncpa [#allocation18], 0
    %23 = vsyncpa [#allocation4], 0
    // Predicated region
    $region2: #{tpu_custom_call.1} parent=1 // pred_check
      _
    $region3: #{tpu_custom_call.1} parent=1 // pred_check_branch
      %25 = sbr.rel (0) target = $region5
    $region4: #{tpu_custom_call.1} parent=1 // pred_region
      _
    $region5: #{tpu_custom_call.1} parent=1 // pred_fallthru
      _
    // Predicated region
    $region6: #{tpu_custom_call.1} parent=1 // pred_check
      _
    $region7: #{tpu_custom_call.1} parent=1 // pred_check_branch
      %27 = sbr.rel (0) target = $region9
    $region8: #{tpu_custom_call.1} parent=1 // pred_region
      %s29 = ssub.s32 256, 256
      %30 = vsyncadd [#allocation3], %s29
      %s31 = sshll.u32 [#allocation2], 4
      %s32 = int_to_ptr.vmem [resolvable:$true] %s31
      %37 = dma.hbm_to_vmem [thread:$0]  %s1, 256, %s32, [#allocation3], 128, 128, 8
    $region9: #{tpu_custom_call.1} parent=1 // pred_fallthru
      _
    // Predicated region
    $region10: #{tpu_custom_call.1} parent=1 // pred_check
      _
    $region11: #{tpu_custom_call.1} parent=1 // pred_check_branch
      %39 = sbr.rel (0) target = $region13
    $region12: #{tpu_custom_call.1} parent=1 // pred_region
      %s41 = ssub.s32 1024, 1024
      %42 = vsyncadd [#allocation6], %s41
      %s43 = sshll.u32 [#allocation5], 4
      %s44 = int_to_ptr.vmem [resolvable:$true] %s43
      %49 = dma.hbm_to_vmem [thread:$0]  %s2, 1024, %s44, [#allocation6], 128, 128, 8
    $region13: #{tpu_custom_call.1} parent=1 // pred_fallthru
      _
    // Predicated region
    $region14: #{tpu_custom_call.1} parent=1 // pred_check
      _
    $region15: #{tpu_custom_call.1} parent=1 // pred_check_branch
      %51 = sbr.rel (0) target = $region17
    $region16: #{tpu_custom_call.1} parent=1 // pred_region
      %s53 = ssub.s32 128, 128
      %54 = vsyncadd [#allocation6], %s53
      %s56 = sshll.u32 [#allocation7], 4
      %s57 = int_to_ptr.vmem [resolvable:$true] %s56
      %59 = dma.hbm_to_vmem [thread:$0]  %s3, 128, %s57, [#allocation6]
    $region17: #{tpu_custom_call.1} parent=1 // pred_fallthru
      _
    // Predicated region
    $region18: #{tpu_custom_call.1} parent=1 // pred_check
      _
    $region19: #{tpu_custom_call.1} parent=1 // pred_check_branch
      %61 = sbr.rel (0) target = $region21
    $region20: #{tpu_custom_call.1} parent=1 // pred_region
      %s63 = ssub.s32 8192, 8192
      %64 = vsyncadd [#allocation9], %s63
      %s65 = sshll.u32 [#allocation8], 4
      %s66 = int_to_ptr.vmem [resolvable:$true] %s65
      %71 = dma.hbm_to_vmem [thread:$0]  %s4, 8192, %s66, [#allocation9], 512, 512, 32
    $region21: #{tpu_custom_call.1} parent=1 // pred_fallthru
      _
    // Predicated region
    $region22: #{tpu_custom_call.1} parent=1 // pred_check
      _
    $region23: #{tpu_custom_call.1} parent=1 // pred_check_branch
      %73 = sbr.rel (0) target = $region25
    $region24: #{tpu_custom_call.1} parent=1 // pred_region
      %s75 = ssub.s32 64, 64
      %76 = vsyncadd [#allocation9], %s75
      %s78 = sshll.u32 [#allocation10], 4
      %s79 = int_to_ptr.vmem [resolvable:$true] %s78
      %81 = dma.hbm_to_vmem [thread:$0]  %s5, 64, %s79, [#allocation9]
    $region25: #{tpu_custom_call.1} parent=1 // pred_fallthru
      _
    // Predicated region
    $region26: #{tpu_custom_call.1} parent=1 // pred_check
      _
    $region27: #{tpu_custom_call.1} parent=1 // pred_check_branch
      %83 = sbr.rel (0) target = $region29
    $region28: #{tpu_custom_call.1} parent=1 // pred_region
      %s85 = ssub.s32 65536, 65536
      %86 = vsyncadd [#allocation12], %s85
      %s87 = sshll.u32 [#allocation11], 4
      %s88 = int_to_ptr.vmem [resolvable:$true] %s87
      %93 = dma.hbm_to_vmem [thread:$0]  %s6, 65536, %s88, [#allocation12], 1024, 1024, 64
    $region29: #{tpu_custom_call.1} parent=1 // pred_fallthru
      _
    // Predicated region
    $region30: #{tpu_custom_call.1} parent=1 // pred_check
      _
    $region31: #{tpu_custom_call.1} parent=1 // pred_check_branch
      %95 = sbr.rel (0) target = $region33
    $region32: #{tpu_custom_call.1} parent=1 // pred_region
      %s97 = ssub.s32 128, 128
      %98 = vsyncadd [#allocation12], %s97
      %s100 = sshll.u32 [#allocation13], 4
      %s101 = int_to_ptr.vmem [resolvable:$true] %s100
      %103 = dma.hbm_to_vmem [thread:$0]  %s7, 128, %s101, [#allocation12]
    $region33: #{tpu_custom_call.1} parent=1 // pred_fallthru
      _
    // Predicated region
    $region34: #{tpu_custom_call.1} parent=1 // pred_check
      _
    $region35: #{tpu_custom_call.1} parent=1 // pred_check_branch
      %105 = sbr.rel (0) target = $region37
    $region36: #{tpu_custom_call.1} parent=1 // pred_region
      %s107 = ssub.s32 131072, 131072
      %108 = vsyncadd [#allocation15], %s107
      %s109 = sshll.u32 [#allocation14], 4
      %s110 = int_to_ptr.vmem [resolvable:$true] %s109
      %115 = dma.hbm_to_vmem [thread:$0]  %s8, 131072, %s110, [#allocation15], 1024, 1024, 64
    $region37: #{tpu_custom_call.1} parent=1 // pred_fallthru
      _
    // Predicated region
    $region38: #{tpu_custom_call.1} parent=1 // pred_check
      _
    $region39: #{tpu_custom_call.1} parent=1 // pred_check_branch
      %117 = sbr.rel (0) target = $region41
    $region40: #{tpu_custom_call.1} parent=1 // pred_region
      %s119 = ssub.s32 128, 128
      %120 = vsyncadd [#allocation15], %s119
      %s122 = sshll.u32 [#allocation16], 4
      %s123 = int_to_ptr.vmem [resolvable:$true] %s122
      %125 = dma.hbm_to_vmem [thread:$0]  %s9, 128, %s123, [#allocation15]
    $region41: #{tpu_custom_call.1} parent=1 // pred_fallthru
      _
    // Predicated region
    $region42: #{tpu_custom_call.1} parent=1 // pred_check
      _
    $region43: #{tpu_custom_call.1} parent=1 // pred_check_branch
      %127 = sbr.rel (0) target = $region45
    $region44: #{tpu_custom_call.1} parent=1 // pred_region
      _
    $region45: #{tpu_custom_call.1} parent=1 // pred_fallthru
      _
    // Predicated region
    $region46: #{tpu_custom_call.1} parent=1 // pred_check
      _
    $region47: #{tpu_custom_call.1} parent=1 // pred_check_branch
      %129 = sbr.rel (0) target = $region49
    $region48: #{tpu_custom_call.1} parent=1 // pred_region
      %s131 = ssub.s32 16, 16
      %132 = vsyncadd [#allocation18], %s131
      %s134 = sshll.u32 [#allocation17], 4
      %s135 = int_to_ptr.vmem [resolvable:$true] %s134
      %137 = dma.hbm_to_vmem [thread:$0]  %s11, 16, %s135, [#allocation18]
    $region49: #{tpu_custom_call.1} parent=1 // pred_fallthru
      _
    // Predicated region
    $region50: #{tpu_custom_call.1} parent=1 // pred_check
      _
    $region51: #{tpu_custom_call.1} parent=1 // pred_check_branch
      %139 = sbr.rel (0) target = $region53
    $region52: #{tpu_custom_call.1} parent=1 // pred_region
      %140 = dma.done [#allocation3], 256
    $region53: #{tpu_custom_call.1} parent=1 // pred_fallthru
      _
    // Predicated region
    $region54: #{tpu_custom_call.1} parent=1 // pred_check
      _
    $region55: #{tpu_custom_call.1} parent=1 // pred_check_branch
      %142 = sbr.rel (0) target = $region57
    $region56: #{tpu_custom_call.1} parent=1 // pred_region
      %143 = dma.done [#allocation6], 1024
    $region57: #{tpu_custom_call.1} parent=1 // pred_fallthru
      _
    // Predicated region
    $region58: #{tpu_custom_call.1} parent=1 // pred_check
      _
    $region59: #{tpu_custom_call.1} parent=1 // pred_check_branch
      %145 = sbr.rel (0) target = $region61
    $region60: #{tpu_custom_call.1} parent=1 // pred_region
      %146 = dma.done [#allocation6], 128
    $region61: #{tpu_custom_call.1} parent=1 // pred_fallthru
      _
    // Predicated region
    $region62: #{tpu_custom_call.1} parent=1 // pred_check
      _
    $region63: #{tpu_custom_call.1} parent=1 // pred_check_branch
      %148 = sbr.rel (0) target = $region65
    $region64: #{tpu_custom_call.1} parent=1 // pred_region
      %149 = dma.done [#allocation9], 8192
    $region65: #{tpu_custom_call.1} parent=1 // pred_fallthru
      _
    // Predicated region
    $region66: #{tpu_custom_call.1} parent=1 // pred_check
      _
    $region67: #{tpu_custom_call.1} parent=1 // pred_check_branch
      %151 = sbr.rel (0) target = $region69
    $region68: #{tpu_custom_call.1} parent=1 // pred_region
      %152 = dma.done [#allocation9], 64
    $region69: #{tpu_custom_call.1} parent=1 // pred_fallthru
      _
    // Predicated region
    $region70: #{tpu_custom_call.1} parent=1 // pred_check
      _
    $region71: #{tpu_custom_call.1} parent=1 // pred_check_branch
      %154 = sbr.rel (0) target = $region73
    $region72: #{tpu_custom_call.1} parent=1 // pred_region
      %155 = dma.done [#allocation12], 65536
    $region73: #{tpu_custom_call.1} parent=1 // pred_fallthru
      _
    // Predicated region
    $region74: #{tpu_custom_call.1} parent=1 // pred_check
      _
    $region75: #{tpu_custom_call.1} parent=1 // pred_check_branch
      %157 = sbr.rel (0) target = $region77
    $region76: #{tpu_custom_call.1} parent=1 // pred_region
      %158 = dma.done [#allocation12], 128
    $region77: #{tpu_custom_call.1} parent=1 // pred_fallthru
      _
    // Predicated region
    $region78: #{tpu_custom_call.1} parent=1 // pred_check
      _
    $region79: #{tpu_custom_call.1} parent=1 // pred_check_branch
      %160 = sbr.rel (0) target = $region81
    $region80: #{tpu_custom_call.1} parent=1 // pred_region
      %161 = dma.done [#allocation15], 131072
    $region81: #{tpu_custom_call.1} parent=1 // pred_fallthru
      _
    // Predicated region
    $region82: #{tpu_custom_call.1} parent=1 // pred_check
      _
    $region83: #{tpu_custom_call.1} parent=1 // pred_check_branch
      %163 = sbr.rel (0) target = $region85
    $region84: #{tpu_custom_call.1} parent=1 // pred_region
      %164 = dma.done [#allocation15], 128
    $region85: #{tpu_custom_call.1} parent=1 // pred_fallthru
      _
    // Predicated region
    $region86: #{tpu_custom_call.1} parent=1 // pred_check
      _
    $region87: #{tpu_custom_call.1} parent=1 // pred_check_branch
      %166 = sbr.rel (0) target = $region89
    $region88: #{tpu_custom_call.1} parent=1 // pred_region
      %167 = dma.done [#allocation18], 16
    $region89: #{tpu_custom_call.1} parent=1 // pred_fallthru
      _
    %v168 = vld [vmem:[#allocation2] sm:$0xff]
    %v169 = vld [vmem:[#allocation2 + $0x8] sm:$0xff]
    %vm170 = vcmp.ne.f32.partialorder %v168, 0.0
    %vm171 = vcmp.ne.f32.partialorder %v169, 0.0
    %v172 = vsel %vm170, 1, 0
    %v173 = vsel %vm171, 1, 0
    %v174 = vcvt.s32.f32 %v172
    %v175 = vcvt.s32.f32 %v173
    %vm176 = vcmask 523264
    %v177 = vsel %vm176, %v174, 0.0
    %178 = vadd.xlane.f32.xlu0 %v177
    %v179 = vpop.xlane.xlu0 %178
    %v180 = vsel %vm176, %v175, 0.0
    %181 = vadd.xlane.f32.xlu0 %v180
    %v182 = vpop.xlane.xlu0 %181
    %v183 = vld [vmem:[#allocation5] sm:$0xff]
    %v184 = vld [vmem:[#allocation5 + $0x8] sm:$0xff]
    %v185 = vld [vmem:[#allocation5 + $0x10] sm:$0xff]
    %v186 = vld [vmem:[#allocation5 + $0x18] sm:$0xff]
    %v187 = vld [vmem:[#allocation5 + $0x20] sm:$0xff]
    %v188 = vld [vmem:[#allocation5 + $0x28] sm:$0xff]
    %v189 = vld [vmem:[#allocation5 + $0x30] sm:$0xff]
    %v190 = vld [vmem:[#allocation5 + $0x38] sm:$0xff]
    %v192 = vsel %vm176, %v174, 0
    %v195 = vsel %vm176, %v175, 0
    %197 = vmatprep.subr.mxu0 0.0
    %198 = vmatpush1.msra.mxu0 %v183
    %199 = vmatprep.subr.mxu0 0.0
    %200 = vmatpush1.msra.mxu0 %v184
    %201 = vmatprep.subr.mxu0 0.0
    %202 = vmatpush1.msra.mxu0 %v185
    %203 = vmatprep.subr.mxu0 0.0
    %204 = vmatpush1.msra.mxu0 %v186
    %205 = vmatprep.subr.mxu0 0.0
    %206 = vmatpush1.msra.mxu0 %v187
    %207 = vmatprep.subr.mxu0 0.0
    %208 = vmatpush1.msra.mxu0 %v188
    %209 = vmatprep.subr.mxu0 0.0
    %210 = vmatpush1.msra.mxu0 %v189
    %211 = vmatprep.subr.mxu0 0.0
    %212 = vmatpush1.msra.mxu0 %v190
    %213 = vmatprep.subr.mxu0 0.0
    %214 = vmatpush1.msra.mxu0 0.0
    %215 = vmatprep.subr.mxu0 0.0
    %216 = vmatpush1.msra.mxu0 0.0
    %217 = vmatprep.subr.mxu0 0.0
    %218 = vmatpush1.msra.mxu0 0.0
    %219 = vmatprep.subr.mxu0 0.0
    %220 = vmatpush1.msra.mxu0 0.0
    %221 = vmatprep.subr.mxu0 0.0
    %222 = vmatpush1.msra.mxu0 0.0
    %223 = vmatprep.subr.mxu0 0.0
    %224 = vmatpush1.msra.mxu0 0.0
    %225 = vmatprep.subr.mxu0 0.0
    %226 = vmatpush1.msra.mxu0 0.0
    %227 = vmatprep.subr.mxu0 0.0
    %228 = vmatpush1.msra.mxu0 0.0
    %229 = vmatprep.subr.mxu0 0.0
    %230 = vmatpush1.msra.mxu0 0.0
    %231 = vmatprep.subr.mxu0 0.0
    %232 = vmatpush1.msra.mxu0 0.0
    %233 = vmatprep.subr.mxu0 0.0
    %234 = vmatpush1.msra.mxu0 0.0
    %235 = vmatprep.subr.mxu0 0.0
    %236 = vmatpush1.msra.mxu0 0.0
    %237 = vmatprep.subr.mxu0 0.0
    %238 = vmatpush1.msra.mxu0 0.0
    %239 = vmatprep.subr.mxu0 0.0
    %240 = vmatpush1.msra.mxu0 0.0
    %241 = vmatprep.subr.mxu0 0.0
    %242 = vmatpush1.msra.mxu0 0.0
    %243 = vmatprep.subr.mxu0 0.0
    %244 = vmatpush1.msra.mxu0 0.0
    %245 = vmatprep.subr.mxu0 0.0
    %246 = vmatpush1.msra.mxu0 0.0
    %247 = vmatprep.subr.mxu0 0.0
    %248 = vmatpush1.msra.mxu0 0.0
    %249 = vmatprep.subr.mxu0 0.0
    %250 = vmatpush1.msra.mxu0 0.0
    %251 = vmatprep.subr.mxu0 0.0
    %252 = vmatpush1.msra.mxu0 0.0
    %253 = vmatprep.subr.mxu0 0.0
    %254 = vmatpush1.msra.mxu0 0.0
    %255 = vmatprep.subr.mxu0 0.0
    %256 = vmatpush1.msra.mxu0 0.0
    %257 = vmatprep.subr.mxu0 0.0
    %258 = vmatpush1.msra.mxu0 0.0
    %259 = vmatprep.subr.mxu0 0.0
    %260 = vmatpush1.msra.mxu0 0.0
    %261 = vmatprep.mubr.f32.mxu0 0.0
    %262 = vmatmul.mubr.f32.gmra.mrb[0].mxu0 %v192
    %v263 = vpop.f32.mrb[0].mxu0
    %v264 = vadd.f32 0.0, %v263
    %v265 = vpop.f32.mrb[0].mxu0
    %266 = vmatprep.mubr.f32.mxu0 0.0
    %267 = vmatmul.mubr.f32.gmra.mrb[0].mxu0 %v195
    %v268 = vpop.f32.mrb[0].mxu0
    %v269 = vadd.f32 0.0, %v268
    %v270 = vpop.f32.mrb[0].mxu0
    %271 = vdwg.mxu0
    %v272 = vrcp.pop %v179
    %v273 = vmul.f32 %v264, %v272
    %v274 = vrcp.pop %v182
    %v275 = vmul.f32 %v269, %v274
    %v276 = vld [vmem:[#allocation8] sm:$0xff]
    %v277 = vld [vmem:[#allocation8 + $0x8] sm:$0xff]
    %v278 = vld [vmem:[#allocation8 + $0x10] sm:$0xff]
    %v279 = vld [vmem:[#allocation8 + $0x18] sm:$0xff]
    %v280 = vld [vmem:[#allocation8 + $0x20] sm:$0xff]
    %v281 = vld [vmem:[#allocation8 + $0x28] sm:$0xff]
    %v282 = vld [vmem:[#allocation8 + $0x30] sm:$0xff]
    %v283 = vld [vmem:[#allocation8 + $0x38] sm:$0xff]
    %v284 = vld [vmem:[#allocation8 + $0x40] sm:$0xff]
    %v285 = vld [vmem:[#allocation8 + $0x48] sm:$0xff]
    %v286 = vld [vmem:[#allocation8 + $0x50] sm:$0xff]
    %v287 = vld [vmem:[#allocation8 + $0x58] sm:$0xff]
    %v288 = vld [vmem:[#allocation8 + $0x60] sm:$0xff]
    %v289 = vld [vmem:[#allocation8 + $0x68] sm:$0xff]
    %v290 = vld [vmem:[#allocation8 + $0x70] sm:$0xff]
    %v291 = vld [vmem:[#allocation8 + $0x78] sm:$0xff]
    %v292 = vld [vmem:[#allocation8 + $0x80] sm:$0xff]
    %v293 = vld [vmem:[#allocation8 + $0x88] sm:$0xff]
    %v294 = vld [vmem:[#allocation8 + $0x90] sm:$0xff]
    %v295 = vld [vmem:[#allocation8 + $0x98] sm:$0xff]
    %v296 = vld [vmem:[#allocation8 + $0xa0] sm:$0xff]
    %v297 = vld [vmem:[#allocation8 + $0xa8] sm:$0xff]
    %v298 = vld [vmem:[#allocation8 + $0xb0] sm:$0xff]
    %v299 = vld [vmem:[#allocation8 + $0xb8] sm:$0xff]
    %v300 = vld [vmem:[#allocation8 + $0xc0] sm:$0xff]
    %v301 = vld [vmem:[#allocation8 + $0xc8] sm:$0xff]
    %v302 = vld [vmem:[#allocation8 + $0xd0] sm:$0xff]
    %v303 = vld [vmem:[#allocation8 + $0xd8] sm:$0xff]
    %v304 = vld [vmem:[#allocation8 + $0xe0] sm:$0xff]
    %v305 = vld [vmem:[#allocation8 + $0xe8] sm:$0xff]
    %v306 = vld [vmem:[#allocation8 + $0xf0] sm:$0xff]
    %v307 = vld [vmem:[#allocation8 + $0xf8] sm:$0xff]
    %v308 = vld [vmem:[#allocation8 + $0x100] sm:$0xff]
    %v309 = vld [vmem:[#allocation8 + $0x108] sm:$0xff]
    %v310 = vld [vmem:[#allocation8 + $0x110] sm:$0xff]
    %v311 = vld [vmem:[#allocation8 + $0x118] sm:$0xff]
    %v312 = vld [vmem:[#allocation8 + $0x120] sm:$0xff]
    %v313 = vld [vmem:[#allocation8 + $0x128] sm:$0xff]
    %v314 = vld [vmem:[#allocation8 + $0x130] sm:$0xff]
    %v315 = vld [vmem:[#allocation8 + $0x138] sm:$0xff]
    %v316 = vld [vmem:[#allocation8 + $0x140] sm:$0xff]
    %v317 = vld [vmem:[#allocation8 + $0x148] sm:$0xff]
    %v318 = vld [vmem:[#allocation8 + $0x150] sm:$0xff]
    %v319 = vld [vmem:[#allocation8 + $0x158] sm:$0xff]
    %v320 = vld [vmem:[#allocation8 + $0x160] sm:$0xff]
    %v321 = vld [vmem:[#allocation8 + $0x168] sm:$0xff]
    %v322 = vld [vmem:[#allocation8 + $0x170] sm:$0xff]
    %v323 = vld [vmem:[#allocation8 + $0x178] sm:$0xff]
    %v324 = vld [vmem:[#allocation8 + $0x180] sm:$0xff]
    %v325 = vld [vmem:[#allocation8 + $0x188] sm:$0xff]
    %v326 = vld [vmem:[#allocation8 + $0x190] sm:$0xff]
    %v327 = vld [vmem:[#allocation8 + $0x198] sm:$0xff]
    %v328 = vld [vmem:[#allocation8 + $0x1a0] sm:$0xff]
    %v329 = vld [vmem:[#allocation8 + $0x1a8] sm:$0xff]
    %v330 = vld [vmem:[#allocation8 + $0x1b0] sm:$0xff]
    %v331 = vld [vmem:[#allocation8 + $0x1b8] sm:$0xff]
    %v332 = vld [vmem:[#allocation8 + $0x1c0] sm:$0xff]
    %v333 = vld [vmem:[#allocation8 + $0x1c8] sm:$0xff]
    %v334 = vld [vmem:[#allocation8 + $0x1d0] sm:$0xff]
    %v335 = vld [vmem:[#allocation8 + $0x1d8] sm:$0xff]
    %v336 = vld [vmem:[#allocation8 + $0x1e0] sm:$0xff]
    %v337 = vld [vmem:[#allocation8 + $0x1e8] sm:$0xff]
    %v338 = vld [vmem:[#allocation8 + $0x1f0] sm:$0xff]
    %v339 = vld [vmem:[#allocation8 + $0x1f8] sm:$0xff]
    %v340 = vld [vmem:[%s0] sm:$0xff]
    %v341 = vld [vmem:[%s0 + $0x8] sm:$0xff]
    %v342 = vld [vmem:[#allocation7] sm:$0xff]
    %v344 = vcombine.high %v342, %v342
    %v346 = vunpack.c.l.s4 1983009808
    %v347 = vunpack.c.0.s8 %v346
    %v348 = vlaneseq
    %v349 = vshrl.u32 %v348, 7
    %v350 = vsub.s32 %v347, %v349
    %v351 = vrot.slane %v342, %v350
    %v353 = vunpack.c.l.s4 1983009808
    %v354 = vunpack.c.0.s8 %v353
    %v355 = vlaneseq
    %v356 = vshrl.u32 %v355, 7
    %v357 = vsub.s32 %v354, %v356
    %v358 = vrot.slane %v344, %v357
    %v359 = vcombine.high %v351, %v351
    %v360 = vcombine.high %v358, %v358
    %vm361 = vcmask 15360
    %v363 = vsel %vm361, %v340, 0
    %v366 = vsel %vm361, %v341, 0
    %vm368 = vcmask 1041408
    %v369 = vsel %vm368, %v351, 0
    %v371 = vsel %vm368, %v359, 0
    %v373 = vsel %vm368, %v358, 0
    %v375 = vsel %vm368, %v360, 0
    %377 = vmatprep.subr.mxu0 %v371
    %378 = vmatpush1.msra.mxu0 %v369
    %379 = vmatprep.subr.mxu0 0.0
    %380 = vmatpush1.msra.mxu0 0.0
    %381 = vmatprep.subr.mxu0 0.0
    %382 = vmatpush1.msra.mxu0 0.0
    %383 = vmatprep.subr.mxu0 0.0
    %384 = vmatpush1.msra.mxu0 0.0
    %385 = vmatprep.subr.mxu0 0.0
    %386 = vmatpush1.msra.mxu0 0.0
    %387 = vmatprep.subr.mxu0 0.0
    %388 = vmatpush1.msra.mxu0 0.0
    %389 = vmatprep.subr.mxu0 0.0
    %390 = vmatpush1.msra.mxu0 0.0
    %391 = vmatprep.subr.mxu0 0.0
    %392 = vmatpush1.msra.mxu0 0.0
    %393 = vmatprep.subr.mxu0 0.0
    %394 = vmatpush1.msra.mxu0 0.0
    %395 = vmatprep.subr.mxu0 0.0
    %396 = vmatpush1.msra.mxu0 0.0
    %397 = vmatprep.subr.mxu0 0.0
    %398 = vmatpush1.msra.mxu0 0.0
    %399 = vmatprep.subr.mxu0 0.0
    %400 = vmatpush1.msra.mxu0 0.0
    %401 = vmatprep.subr.mxu0 0.0
    %402 = vmatpush1.msra.mxu0 0.0
    %403 = vmatprep.subr.mxu0 0.0
    %404 = vmatpush1.msra.mxu0 0.0
    %405 = vmatprep.subr.mxu0 0.0
    %406 = vmatpush1.msra.mxu0 0.0
    %407 = vmatprep.subr.mxu0 0.0
    %408 = vmatpush1.msra.mxu0 0.0
    %409 = vmatprep.subr.mxu0 0.0
    %410 = vmatpush1.msra.mxu0 0.0
    %411 = vmatprep.subr.mxu0 0.0
    %412 = vmatpush1.msra.mxu0 0.0
    %413 = vmatprep.subr.mxu0 0.0
    %414 = vmatpush1.msra.mxu0 0.0
    %415 = vmatprep.subr.mxu0 0.0
    %416 = vmatpush1.msra.mxu0 0.0
    %417 = vmatprep.subr.mxu0 0.0
    %418 = vmatpush1.msra.mxu0 0.0
    %419 = vmatprep.subr.mxu0 0.0
    %420 = vmatpush1.msra.mxu0 0.0
    %421 = vmatprep.subr.mxu0 0.0
    %422 = vmatpush1.msra.mxu0 0.0
    %423 = vmatprep.subr.mxu0 0.0
    %424 = vmatpush1.msra.mxu0 0.0
    %425 = vmatprep.subr.mxu0 0.0
    %426 = vmatpush1.msra.mxu0 0.0
    %427 = vmatprep.subr.mxu0 0.0
    %428 = vmatpush1.msra.mxu0 0.0
    %429 = vmatprep.subr.mxu0 0.0
    %430 = vmatpush1.msra.mxu0 0.0
    %431 = vmatprep.subr.mxu0 0.0
    %432 = vmatpush1.msra.mxu0 0.0
    %433 = vmatprep.subr.mxu0 0.0
    %434 = vmatpush1.msra.mxu0 0.0
    %435 = vmatprep.subr.mxu0 0.0
    %436 = vmatpush1.msra.mxu0 0.0
    %437 = vmatprep.subr.mxu0 0.0
    %438 = vmatpush1.msra.mxu0 0.0
    %439 = vmatprep.subr.mxu0 0.0
    %440 = vmatpush1.msra.mxu0 0.0
    %441 = vmatprep.mubr.f32.mxu0 0.0
    %442 = vmatmul.mubr.f32.gmra.mrb[0].mxu0 %v363
    %v443 = vpop.f32.mrb[0].mxu0
    %v444 = vadd.f32 0.0, %v443
    %v445 = vpop.f32.mrb[0].mxu0
    %v446 = vadd.f32 0.0, %v445
    %447 = vmatprep.mubr.f32.mxu0 0.0
    %448 = vmatmul.mubr.f32.gmra.mrb[0].mxu0 %v366
    %v449 = vpop.f32.mrb[0].mxu0
    %v450 = vadd.f32 0.0, %v449
    %v451 = vpop.f32.mrb[0].mxu0
    %v452 = vadd.f32 0.0, %v451
    %453 = vdwg.mxu0
    %454 = vmatprep.subr.mxu0 %v375
    %455 = vmatpush1.msra.mxu0 %v373
    %456 = vmatprep.subr.mxu0 0.0
    %457 = vmatpush1.msra.mxu0 0.0
    %458 = vmatprep.subr.mxu0 0.0
    %459 = vmatpush1.msra.mxu0 0.0
    %460 = vmatprep.subr.mxu0 0.0
    %461 = vmatpush1.msra.mxu0 0.0
    %462 = vmatprep.subr.mxu0 0.0
    %463 = vmatpush1.msra.mxu0 0.0
    %464 = vmatprep.subr.mxu0 0.0
    %465 = vmatpush1.msra.mxu0 0.0
    %466 = vmatprep.subr.mxu0 0.0
    %467 = vmatpush1.msra.mxu0 0.0
    %468 = vmatprep.subr.mxu0 0.0
    %469 = vmatpush1.msra.mxu0 0.0
    %470 = vmatprep.subr.mxu0 0.0
    %471 = vmatpush1.msra.mxu0 0.0
    %472 = vmatprep.subr.mxu0 0.0
    %473 = vmatpush1.msra.mxu0 0.0
    %474 = vmatprep.subr.mxu0 0.0
    %475 = vmatpush1.msra.mxu0 0.0
    %476 = vmatprep.subr.mxu0 0.0
    %477 = vmatpush1.msra.mxu0 0.0
    %478 = vmatprep.subr.mxu0 0.0
    %479 = vmatpush1.msra.mxu0 0.0
    %480 = vmatprep.subr.mxu0 0.0
    %481 = vmatpush1.msra.mxu0 0.0
    %482 = vmatprep.subr.mxu0 0.0
    %483 = vmatpush1.msra.mxu0 0.0
    %484 = vmatprep.subr.mxu0 0.0
    %485 = vmatpush1.msra.mxu0 0.0
    %486 = vmatprep.subr.mxu0 0.0
    %487 = vmatpush1.msra.mxu0 0.0
    %488 = vmatprep.subr.mxu0 0.0
    %489 = vmatpush1.msra.mxu0 0.0
    %490 = vmatprep.subr.mxu0 0.0
    %491 = vmatpush1.msra.mxu0 0.0
    %492 = vmatprep.subr.mxu0 0.0
    %493 = vmatpush1.msra.mxu0 0.0
    %494 = vmatprep.subr.mxu0 0.0
    %495 = vmatpush1.msra.mxu0 0.0
    %496 = vmatprep.subr.mxu0 0.0
    %497 = vmatpush1.msra.mxu0 0.0
    %498 = vmatprep.subr.mxu0 0.0
    %499 = vmatpush1.msra.mxu0 0.0
    %500 = vmatprep.subr.mxu0 0.0
    %501 = vmatpush1.msra.mxu0 0.0
    %502 = vmatprep.subr.mxu0 0.0
    %503 = vmatpush1.msra.mxu0 0.0
    %504 = vmatprep.subr.mxu0 0.0
    %505 = vmatpush1.msra.mxu0 0.0
    %506 = vmatprep.subr.mxu0 0.0
    %507 = vmatpush1.msra.mxu0 0.0
    %508 = vmatprep.subr.mxu0 0.0
    %509 = vmatpush1.msra.mxu0 0.0
    %510 = vmatprep.subr.mxu0 0.0
    %511 = vmatpush1.msra.mxu0 0.0
    %512 = vmatprep.subr.mxu0 0.0
    %513 = vmatpush1.msra.mxu0 0.0
    %514 = vmatprep.subr.mxu0 0.0
    %515 = vmatpush1.msra.mxu0 0.0
    %516 = vmatprep.subr.mxu0 0.0
    %517 = vmatpush1.msra.mxu0 0.0
    %518 = vmatprep.mubr.f32.mxu0 0.0
    %519 = vmatmul.mubr.f32.gmra.mrb[0].mxu0 %v363
    %v520 = vpop.f32.mrb[0].mxu0
    %v521 = vadd.f32 0.0, %v520
    %v522 = vpop.f32.mrb[0].mxu0
    %v523 = vadd.f32 0.0, %v522
    %524 = vmatprep.mubr.f32.mxu0 0.0
    %525 = vmatmul.mubr.f32.gmra.mrb[0].mxu0 %v366
    %v526 = vpop.f32.mrb[0].mxu0
    %v527 = vadd.f32 0.0, %v526
    %v528 = vpop.f32.mrb[0].mxu0
    %v529 = vadd.f32 0.0, %v528
    %530 = vdwg.mxu0
    %531 = vmatprep.subr.mxu0 %v277
    %532 = vmatpush1.msra.mxu0 %v276
    %533 = vmatprep.subr.mxu0 %v281
    %534 = vmatpush1.msra.mxu0 %v280
    %535 = vmatprep.subr.mxu0 %v285
    %536 = vmatpush1.msra.mxu0 %v284
    %537 = vmatprep.subr.mxu0 %v289
    %538 = vmatpush1.msra.mxu0 %v288
    %539 = vmatprep.subr.mxu0 %v293
    %540 = vmatpush1.msra.mxu0 %v292
    %541 = vmatprep.subr.mxu0 %v297
    %542 = vmatpush1.msra.mxu0 %v296
    %543 = vmatprep.subr.mxu0 %v301
    %544 = vmatpush1.msra.mxu0 %v300
    %545 = vmatprep.subr.mxu0 %v305
    %546 = vmatpush1.msra.mxu0 %v304
    %547 = vmatprep.subr.mxu0 %v309
    %548 = vmatpush1.msra.mxu0 %v308
    %549 = vmatprep.subr.mxu0 %v313
    %550 = vmatpush1.msra.mxu0 %v312
    %551 = vmatprep.subr.mxu0 %v317
    %552 = vmatpush1.msra.mxu0 %v316
    %553 = vmatprep.subr.mxu0 %v321
    %554 = vmatpush1.msra.mxu0 %v320
    %555 = vmatprep.subr.mxu0 %v325
    %556 = vmatpush1.msra.mxu0 %v324
    %557 = vmatprep.subr.mxu0 %v329
    %558 = vmatpush1.msra.mxu0 %v328
    %559 = vmatprep.subr.mxu0 %v333
    %560 = vmatpush1.msra.mxu0 %v332
    %561 = vmatprep.subr.mxu0 %v337
    %562 = vmatpush1.msra.mxu0 %v336
    %563 = vmatprep.subr.mxu0 0.0
    %564 = vmatpush1.msra.mxu0 0.0
    %565 = vmatprep.subr.mxu0 0.0
    %566 = vmatpush1.msra.mxu0 0.0
    %567 = vmatprep.subr.mxu0 0.0
    %568 = vmatpush1.msra.mxu0 0.0
    %569 = vmatprep.subr.mxu0 0.0
    %570 = vmatpush1.msra.mxu0 0.0
    %571 = vmatprep.subr.mxu0 0.0
    %572 = vmatpush1.msra.mxu0 0.0
    %573 = vmatprep.subr.mxu0 0.0
    %574 = vmatpush1.msra.mxu0 0.0
    %575 = vmatprep.subr.mxu0 0.0
    %576 = vmatpush1.msra.mxu0 0.0
    %577 = vmatprep.subr.mxu0 0.0
    %578 = vmatpush1.msra.mxu0 0.0
    %579 = vmatprep.subr.mxu0 0.0
    %580 = vmatpush1.msra.mxu0 0.0
    %581 = vmatprep.subr.mxu0 0.0
    %582 = vmatpush1.msra.mxu0 0.0
    %583 = vmatprep.subr.mxu0 0.0
    %584 = vmatpush1.msra.mxu0 0.0
    %585 = vmatprep.subr.mxu0 0.0
    %586 = vmatpush1.msra.mxu0 0.0
    %587 = vmatprep.subr.mxu0 0.0
    %588 = vmatpush1.msra.mxu0 0.0
    %589 = vmatprep.subr.mxu0 0.0
    %590 = vmatpush1.msra.mxu0 0.0
    %591 = vmatprep.subr.mxu0 0.0
    %592 = vmatpush1.msra.mxu0 0.0
    %593 = vmatprep.subr.mxu0 0.0
    %594 = vmatpush1.msra.mxu0 0.0
    %595 = vmatprep.mubr.f32.mxu0 0.0
    %596 = vmatmul.mubr.f32.gmra.mrb[0].mxu0 %v273
    %v597 = vpop.f32.mrb[0].mxu0
    %v598 = vadd.f32 %v444, %v597
    %v599 = vpop.f32.mrb[0].mxu0
    %v600 = vadd.f32 %v446, %v599
    %601 = vmatprep.mubr.f32.mxu0 0.0
    %602 = vmatmul.mubr.f32.gmra.mrb[0].mxu0 %v275
    %v603 = vpop.f32.mrb[0].mxu0
    %v604 = vadd.f32 %v450, %v603
    %v605 = vpop.f32.mrb[0].mxu0
    %v606 = vadd.f32 %v452, %v605
    %607 = vdwg.mxu0
    %608 = vmatprep.subr.mxu0 %v279
    %609 = vmatpush1.msra.mxu0 %v278
    %610 = vmatprep.subr.mxu0 %v283
    %611 = vmatpush1.msra.mxu0 %v282
    %612 = vmatprep.subr.mxu0 %v287
    %613 = vmatpush1.msra.mxu0 %v286
    %614 = vmatprep.subr.mxu0 %v291
    %615 = vmatpush1.msra.mxu0 %v290
    %616 = vmatprep.subr.mxu0 %v295
    %617 = vmatpush1.msra.mxu0 %v294
    %618 = vmatprep.subr.mxu0 %v299
    %619 = vmatpush1.msra.mxu0 %v298
    %620 = vmatprep.subr.mxu0 %v303
    %621 = vmatpush1.msra.mxu0 %v302
    %622 = vmatprep.subr.mxu0 %v307
    %623 = vmatpush1.msra.mxu0 %v306
    %624 = vmatprep.subr.mxu0 %v311
    %625 = vmatpush1.msra.mxu0 %v310
    %626 = vmatprep.subr.mxu0 %v315
    %627 = vmatpush1.msra.mxu0 %v314
    %628 = vmatprep.subr.mxu0 %v319
    %629 = vmatpush1.msra.mxu0 %v318
    %630 = vmatprep.subr.mxu0 %v323
    %631 = vmatpush1.msra.mxu0 %v322
    %632 = vmatprep.subr.mxu0 %v327
    %633 = vmatpush1.msra.mxu0 %v326
    %634 = vmatprep.subr.mxu0 %v331
    %635 = vmatpush1.msra.mxu0 %v330
    %636 = vmatprep.subr.mxu0 %v335
    %637 = vmatpush1.msra.mxu0 %v334
    %638 = vmatprep.subr.mxu0 %v339
    %639 = vmatpush1.msra.mxu0 %v338
    %640 = vmatprep.subr.mxu0 0.0
    %641 = vmatpush1.msra.mxu0 0.0
    %642 = vmatprep.subr.mxu0 0.0
    %643 = vmatpush1.msra.mxu0 0.0
    %644 = vmatprep.subr.mxu0 0.0
    %645 = vmatpush1.msra.mxu0 0.0
    %646 = vmatprep.subr.mxu0 0.0
    %647 = vmatpush1.msra.mxu0 0.0
    %648 = vmatprep.subr.mxu0 0.0
    %649 = vmatpush1.msra.mxu0 0.0
    %650 = vmatprep.subr.mxu0 0.0
    %651 = vmatpush1.msra.mxu0 0.0
    %652 = vmatprep.subr.mxu0 0.0
    %653 = vmatpush1.msra.mxu0 0.0
    %654 = vmatprep.subr.mxu0 0.0
    %655 = vmatpush1.msra.mxu0 0.0
    %656 = vmatprep.subr.mxu0 0.0
    %657 = vmatpush1.msra.mxu0 0.0
    %658 = vmatprep.subr.mxu0 0.0
    %659 = vmatpush1.msra.mxu0 0.0
    %660 = vmatprep.subr.mxu0 0.0
    %661 = vmatpush1.msra.mxu0 0.0
    %662 = vmatprep.subr.mxu0 0.0
    %663 = vmatpush1.msra.mxu0 0.0
    %664 = vmatprep.subr.mxu0 0.0
    %665 = vmatpush1.msra.mxu0 0.0
    %666 = vmatprep.subr.mxu0 0.0
    %667 = vmatpush1.msra.mxu0 0.0
    %668 = vmatprep.subr.mxu0 0.0
    %669 = vmatpush1.msra.mxu0 0.0
    %670 = vmatprep.subr.mxu0 0.0
    %671 = vmatpush1.msra.mxu0 0.0
    %672 = vmatprep.mubr.f32.mxu0 0.0
    %673 = vmatmul.mubr.f32.gmra.mrb[0].mxu0 %v273
    %v674 = vpop.f32.mrb[0].mxu0
    %v675 = vadd.f32 %v521, %v674
    %v676 = vpop.f32.mrb[0].mxu0
    %v677 = vadd.f32 %v523, %v676
    %678 = vmatprep.mubr.f32.mxu0 0.0
    %679 = vmatmul.mubr.f32.gmra.mrb[0].mxu0 %v275
    %v680 = vpop.f32.mrb[0].mxu0
    %v681 = vadd.f32 %v527, %v680
    %v682 = vpop.f32.mrb[0].mxu0
    %v683 = vadd.f32 %v529, %v682
    %684 = vdwg.mxu0
    %v685 = vld [vmem:[#allocation10] sm:$0xf]
    %v687 = vlaneseq
    %v688 = vshrl.u32 %v687, 7
    %v689 = vsub.s32 0, %v688
    %v690 = vrot.slane %v685, %v689
    %v691 = vlaneseq
    %v692 = vshrl.u32 %v691, 7
    %v693 = vsub.s32 1, %v692
    %v694 = vrot.slane %v685, %v693
    %v695 = vlaneseq
    %v696 = vshrl.u32 %v695, 7
    %v697 = vsub.s32 2, %v696
    %v698 = vrot.slane %v685, %v697
    %v699 = vlaneseq
    %v700 = vshrl.u32 %v699, 7
    %v701 = vsub.s32 3, %v700
    %v702 = vrot.slane %v685, %v701
    %v707 = vadd.f32 %v598, %v690
    %v708 = vadd.f32 %v600, %v694
    %v709 = vadd.f32 %v675, %v698
    %v710 = vadd.f32 %v677, %v702
    %v711 = vadd.f32 %v604, %v690
    %v712 = vadd.f32 %v606, %v694
    %v713 = vadd.f32 %v681, %v698
    %v714 = vadd.f32 %v683, %v702
    %v715 = vmax.f32 %v707, 0.0
    %v716 = vmax.f32 %v708, 0.0
    %v717 = vmax.f32 %v709, 0.0
    %v718 = vmax.f32 %v710, 0.0
    %v719 = vmax.f32 %v711, 0.0
    %v720 = vmax.f32 %v712, 0.0
    %v721 = vmax.f32 %v713, 0.0
    %v722 = vmax.f32 %v714, 0.0
    %v723 = vld [vmem:[#allocation11] sm:$0xff]
    %v724 = vld [vmem:[#allocation11 + $0x8] sm:$0xff]
    %v725 = vld [vmem:[#allocation11 + $0x10] sm:$0xff]
    %v726 = vld [vmem:[#allocation11 + $0x18] sm:$0xff]
    %v727 = vld [vmem:[#allocation11 + $0x20] sm:$0xff]
    %v728 = vld [vmem:[#allocation11 + $0x28] sm:$0xff]
    %v729 = vld [vmem:[#allocation11 + $0x30] sm:$0xff]
    %v730 = vld [vmem:[#allocation11 + $0x38] sm:$0xff]
    %v731 = vld [vmem:[#allocation11 + $0x40] sm:$0xff]
    %v732 = vld [vmem:[#allocation11 + $0x48] sm:$0xff]
    %v733 = vld [vmem:[#allocation11 + $0x50] sm:$0xff]
    %v734 = vld [vmem:[#allocation11 + $0x58] sm:$0xff]
    %v735 = vld [vmem:[#allocation11 + $0x60] sm:$0xff]
    %v736 = vld [vmem:[#allocation11 + $0x68] sm:$0xff]
    %v737 = vld [vmem:[#allocation11 + $0x70] sm:$0xff]
    %v738 = vld [vmem:[#allocation11 + $0x78] sm:$0xff]
    %v739 = vld [vmem:[#allocation11 + $0x80] sm:$0xff]
    %v740 = vld [vmem:[#allocation11 + $0x88] sm:$0xff]
    %v741 = vld [vmem:[#allocation11 + $0x90] sm:$0xff]
    %v742 = vld [vmem:[#allocation11 + $0x98] sm:$0xff]
    %v743 = vld [vmem:[#allocation11 + $0xa0] sm:$0xff]
    %v744 = vld [vmem:[#allocation11 + $0xa8] sm:$0xff]
    %v745 = vld [vmem:[#allocation11 + $0xb0] sm:$0xff]
    %v746 = vld [vmem:[#allocation11 + $0xb8] sm:$0xff]
    %v747 = vld [vmem:[#allocation11 + $0xc0] sm:$0xff]
    %v748 = vld [vmem:[#allocation11 + $0xc8] sm:$0xff]
    %v749 = vld [vmem:[#allocation11 + $0xd0] sm:$0xff]
    %v750 = vld [vmem:[#allocation11 + $0xd8] sm:$0xff]
    %v751 = vld [vmem:[#allocation11 + $0xe0] sm:$0xff]
    %v752 = vld [vmem:[#allocation11 + $0xe8] sm:$0xff]
    %v753 = vld [vmem:[#allocation11 + $0xf0] sm:$0xff]
    %v754 = vld [vmem:[#allocation11 + $0xf8] sm:$0xff]
    %v755 = vld [vmem:[#allocation11 + $0x100] sm:$0xff]
    %v756 = vld [vmem:[#allocation11 + $0x108] sm:$0xff]
    %v757 = vld [vmem:[#allocation11 + $0x110] sm:$0xff]
    %v758 = vld [vmem:[#allocation11 + $0x118] sm:$0xff]
    %v759 = vld [vmem:[#allocation11 + $0x120] sm:$0xff]
    %v760 = vld [vmem:[#allocation11 + $0x128] sm:$0xff]
    %v761 = vld [vmem:[#allocation11 + $0x130] sm:$0xff]
    %v762 = vld [vmem:[#allocation11 + $0x138] sm:$0xff]
    %v763 = vld [vmem:[#allocation11 + $0x140] sm:$0xff]
    %v764 = vld [vmem:[#allocation11 + $0x148] sm:$0xff]
    %v765 = vld [vmem:[#allocation11 + $0x150] sm:$0xff]
    %v766 = vld [vmem:[#allocation11 + $0x158] sm:$0xff]
    %v767 = vld [vmem:[#allocation11 + $0x160] sm:$0xff]
    %v768 = vld [vmem:[#allocation11 + $0x168] sm:$0xff]
    %v769 = vld [vmem:[#allocation11 + $0x170] sm:$0xff]
    %v770 = vld [vmem:[#allocation11 + $0x178] sm:$0xff]
    %v771 = vld [vmem:[#allocation11 + $0x180] sm:$0xff]
    %v772 = vld [vmem:[#allocation11 + $0x188] sm:$0xff]
    %v773 = vld [vmem:[#allocation11 + $0x190] sm:$0xff]
    %v774 = vld [vmem:[#allocation11 + $0x198] sm:$0xff]
    %v775 = vld [vmem:[#allocation11 + $0x1a0] sm:$0xff]
    %v776 = vld [vmem:[#allocation11 + $0x1a8] sm:$0xff]
    %v777 = vld [vmem:[#allocation11 + $0x1b0] sm:$0xff]
    %v778 = vld [vmem:[#allocation11 + $0x1b8] sm:$0xff]
    %v779 = vld [vmem:[#allocation11 + $0x1c0] sm:$0xff]
    %v780 = vld [vmem:[#allocation11 + $0x1c8] sm:$0xff]
    %v781 = vld [vmem:[#allocation11 + $0x1d0] sm:$0xff]
    %v782 = vld [vmem:[#allocation11 + $0x1d8] sm:$0xff]
    %v783 = vld [vmem:[#allocation11 + $0x1e0] sm:$0xff]
    %v784 = vld [vmem:[#allocation11 + $0x1e8] sm:$0xff]
    %v785 = vld [vmem:[#allocation11 + $0x1f0] sm:$0xff]
    %v786 = vld [vmem:[#allocation11 + $0x1f8] sm:$0xff]
    %v787 = vld [vmem:[#allocation11 + $0x200] sm:$0xff]
    %v788 = vld [vmem:[#allocation11 + $0x208] sm:$0xff]
    %v789 = vld [vmem:[#allocation11 + $0x210] sm:$0xff]
    %v790 = vld [vmem:[#allocation11 + $0x218] sm:$0xff]
    %v791 = vld [vmem:[#allocation11 + $0x220] sm:$0xff]
    %v792 = vld [vmem:[#allocation11 + $0x228] sm:$0xff]
    %v793 = vld [vmem:[#allocation11 + $0x230] sm:$0xff]
    %v794 = vld [vmem:[#allocation11 + $0x238] sm:$0xff]
    %v795 = vld [vmem:[#allocation11 + $0x240] sm:$0xff]
    %v796 = vld [vmem:[#allocation11 + $0x248] sm:$0xff]
    %v797 = vld [vmem:[#allocation11 + $0x250] sm:$0xff]
    %v798 = vld [vmem:[#allocation11 + $0x258] sm:$0xff]
    %v799 = vld [vmem:[#allocation11 + $0x260] sm:$0xff]
    %v800 = vld [vmem:[#allocation11 + $0x268] sm:$0xff]
    %v801 = vld [vmem:[#allocation11 + $0x270] sm:$0xff]
    %v802 = vld [vmem:[#allocation11 + $0x278] sm:$0xff]
    %v803 = vld [vmem:[#allocation11 + $0x280] sm:$0xff]
    %v804 = vld [vmem:[#allocation11 + $0x288] sm:$0xff]
    %v805 = vld [vmem:[#allocation11 + $0x290] sm:$0xff]
    %v806 = vld [vmem:[#allocation11 + $0x298] sm:$0xff]
    %v807 = vld [vmem:[#allocation11 + $0x2a0] sm:$0xff]
    %v808 = vld [vmem:[#allocation11 + $0x2a8] sm:$0xff]
    %v809 = vld [vmem:[#allocation11 + $0x2b0] sm:$0xff]
    %v810 = vld [vmem:[#allocation11 + $0x2b8] sm:$0xff]
    %v811 = vld [vmem:[#allocation11 + $0x2c0] sm:$0xff]
    %v812 = vld [vmem:[#allocation11 + $0x2c8] sm:$0xff]
    %v813 = vld [vmem:[#allocation11 + $0x2d0] sm:$0xff]
    %v814 = vld [vmem:[#allocation11 + $0x2d8] sm:$0xff]
    %v815 = vld [vmem:[#allocation11 + $0x2e0] sm:$0xff]
    %v816 = vld [vmem:[#allocation11 + $0x2e8] sm:$0xff]
    %v817 = vld [vmem:[#allocation11 + $0x2f0] sm:$0xff]
    %v818 = vld [vmem:[#allocation11 + $0x2f8] sm:$0xff]
    %v819 = vld [vmem:[#allocation11 + $0x300] sm:$0xff]
    %v820 = vld [vmem:[#allocation11 + $0x308] sm:$0xff]
    %v821 = vld [vmem:[#allocation11 + $0x310] sm:$0xff]
    %v822 = vld [vmem:[#allocation11 + $0x318] sm:$0xff]
    %v823 = vld [vmem:[#allocation11 + $0x320] sm:$0xff]
    %v824 = vld [vmem:[#allocation11 + $0x328] sm:$0xff]
    %v825 = vld [vmem:[#allocation11 + $0x330] sm:$0xff]
    %v826 = vld [vmem:[#allocation11 + $0x338] sm:$0xff]
    %v827 = vld [vmem:[#allocation11 + $0x340] sm:$0xff]
    %v828 = vld [vmem:[#allocation11 + $0x348] sm:$0xff]
    %v829 = vld [vmem:[#allocation11 + $0x350] sm:$0xff]
    %v830 = vld [vmem:[#allocation11 + $0x358] sm:$0xff]
    %v831 = vld [vmem:[#allocation11 + $0x360] sm:$0xff]
    %v832 = vld [vmem:[#allocation11 + $0x368] sm:$0xff]
    %v833 = vld [vmem:[#allocation11 + $0x370] sm:$0xff]
    %v834 = vld [vmem:[#allocation11 + $0x378] sm:$0xff]
    %v835 = vld [vmem:[#allocation11 + $0x380] sm:$0xff]
    %v836 = vld [vmem:[#allocation11 + $0x388] sm:$0xff]
    %v837 = vld [vmem:[#allocation11 + $0x390] sm:$0xff]
    %v838 = vld [vmem:[#allocation11 + $0x398] sm:$0xff]
    %v839 = vld [vmem:[#allocation11 + $0x3a0] sm:$0xff]
    %v840 = vld [vmem:[#allocation11 + $0x3a8] sm:$0xff]
    %v841 = vld [vmem:[#allocation11 + $0x3b0] sm:$0xff]
    %v842 = vld [vmem:[#allocation11 + $0x3b8] sm:$0xff]
    %v843 = vld [vmem:[#allocation11 + $0x3c0] sm:$0xff]
    %v844 = vld [vmem:[#allocation11 + $0x3c8] sm:$0xff]
    %v845 = vld [vmem:[#allocation11 + $0x3d0] sm:$0xff]
    %v846 = vld [vmem:[#allocation11 + $0x3d8] sm:$0xff]
    %v847 = vld [vmem:[#allocation11 + $0x3e0] sm:$0xff]
    %v848 = vld [vmem:[#allocation11 + $0x3e8] sm:$0xff]
    %v849 = vld [vmem:[#allocation11 + $0x3f0] sm:$0xff]
    %v850 = vld [vmem:[#allocation11 + $0x3f8] sm:$0xff]
    %v851 = vld [vmem:[#allocation11 + $0x400] sm:$0xff]
    %v852 = vld [vmem:[#allocation11 + $0x408] sm:$0xff]
    %v853 = vld [vmem:[#allocation11 + $0x410] sm:$0xff]
    %v854 = vld [vmem:[#allocation11 + $0x418] sm:$0xff]
    %v855 = vld [vmem:[#allocation11 + $0x420] sm:$0xff]
    %v856 = vld [vmem:[#allocation11 + $0x428] sm:$0xff]
    %v857 = vld [vmem:[#allocation11 + $0x430] sm:$0xff]
    %v858 = vld [vmem:[#allocation11 + $0x438] sm:$0xff]
    %v859 = vld [vmem:[#allocation11 + $0x440] sm:$0xff]
    %v860 = vld [vmem:[#allocation11 + $0x448] sm:$0xff]
    %v861 = vld [vmem:[#allocation11 + $0x450] sm:$0xff]
    %v862 = vld [vmem:[#allocation11 + $0x458] sm:$0xff]
    %v863 = vld [vmem:[#allocation11 + $0x460] sm:$0xff]
    %v864 = vld [vmem:[#allocation11 + $0x468] sm:$0xff]
    %v865 = vld [vmem:[#allocation11 + $0x470] sm:$0xff]
    %v866 = vld [vmem:[#allocation11 + $0x478] sm:$0xff]
    %v867 = vld [vmem:[#allocation11 + $0x480] sm:$0xff]
    %v868 = vld [vmem:[#allocation11 + $0x488] sm:$0xff]
    %v869 = vld [vmem:[#allocation11 + $0x490] sm:$0xff]
    %v870 = vld [vmem:[#allocation11 + $0x498] sm:$0xff]
    %v871 = vld [vmem:[#allocation11 + $0x4a0] sm:$0xff]
    %v872 = vld [vmem:[#allocation11 + $0x4a8] sm:$0xff]
    %v873 = vld [vmem:[#allocation11 + $0x4b0] sm:$0xff]
    %v874 = vld [vmem:[#allocation11 + $0x4b8] sm:$0xff]
    %v875 = vld [vmem:[#allocation11 + $0x4c0] sm:$0xff]
    %v876 = vld [vmem:[#allocation11 + $0x4c8] sm:$0xff]
    %v877 = vld [vmem:[#allocation11 + $0x4d0] sm:$0xff]
    %v878 = vld [vmem:[#allocation11 + $0x4d8] sm:$0xff]
    %v879 = vld [vmem:[#allocation11 + $0x4e0] sm:$0xff]
    %v880 = vld [vmem:[#allocation11 + $0x4e8] sm:$0xff]
    %v881 = vld [vmem:[#allocation11 + $0x4f0] sm:$0xff]
    %v882 = vld [vmem:[#allocation11 + $0x4f8] sm:$0xff]
    %v883 = vld [vmem:[#allocation11 + $0x500] sm:$0xff]
    %v884 = vld [vmem:[#allocation11 + $0x508] sm:$0xff]
    %v885 = vld [vmem:[#allocation11 + $0x510] sm:$0xff]
    %v886 = vld [vmem:[#allocation11 + $0x518] sm:$0xff]
    %v887 = vld [vmem:[#allocation11 + $0x520] sm:$0xff]
    %v888 = vld [vmem:[#allocation11 + $0x528] sm:$0xff]
    %v889 = vld [vmem:[#allocation11 + $0x530] sm:$0xff]
    %v890 = vld [vmem:[#allocation11 + $0x538] sm:$0xff]
    %v891 = vld [vmem:[#allocation11 + $0x540] sm:$0xff]
    %v892 = vld [vmem:[#allocation11 + $0x548] sm:$0xff]
    %v893 = vld [vmem:[#allocation11 + $0x550] sm:$0xff]
    %v894 = vld [vmem:[#allocation11 + $0x558] sm:$0xff]
    %v895 = vld [vmem:[#allocation11 + $0x560] sm:$0xff]
    %v896 = vld [vmem:[#allocation11 + $0x568] sm:$0xff]
    %v897 = vld [vmem:[#allocation11 + $0x570] sm:$0xff]
    %v898 = vld [vmem:[#allocation11 + $0x578] sm:$0xff]
    %v899 = vld [vmem:[#allocation11 + $0x580] sm:$0xff]
    %v900 = vld [vmem:[#allocation11 + $0x588] sm:$0xff]
    %v901 = vld [vmem:[#allocation11 + $0x590] sm:$0xff]
    %v902 = vld [vmem:[#allocation11 + $0x598] sm:$0xff]
    %v903 = vld [vmem:[#allocation11 + $0x5a0] sm:$0xff]
    %v904 = vld [vmem:[#allocation11 + $0x5a8] sm:$0xff]
    %v905 = vld [vmem:[#allocation11 + $0x5b0] sm:$0xff]
    %v906 = vld [vmem:[#allocation11 + $0x5b8] sm:$0xff]
    %v907 = vld [vmem:[#allocation11 + $0x5c0] sm:$0xff]
    %v908 = vld [vmem:[#allocation11 + $0x5c8] sm:$0xff]
    %v909 = vld [vmem:[#allocation11 + $0x5d0] sm:$0xff]
    %v910 = vld [vmem:[#allocation11 + $0x5d8] sm:$0xff]
    %v911 = vld [vmem:[#allocation11 + $0x5e0] sm:$0xff]
    %v912 = vld [vmem:[#allocation11 + $0x5e8] sm:$0xff]
    %v913 = vld [vmem:[#allocation11 + $0x5f0] sm:$0xff]
    %v914 = vld [vmem:[#allocation11 + $0x5f8] sm:$0xff]
    %v915 = vld [vmem:[#allocation11 + $0x600] sm:$0xff]
    %v916 = vld [vmem:[#allocation11 + $0x608] sm:$0xff]
    %v917 = vld [vmem:[#allocation11 + $0x610] sm:$0xff]
    %v918 = vld [vmem:[#allocation11 + $0x618] sm:$0xff]
    %v919 = vld [vmem:[#allocation11 + $0x620] sm:$0xff]
    %v920 = vld [vmem:[#allocation11 + $0x628] sm:$0xff]
    %v921 = vld [vmem:[#allocation11 + $0x630] sm:$0xff]
    %v922 = vld [vmem:[#allocation11 + $0x638] sm:$0xff]
    %v923 = vld [vmem:[#allocation11 + $0x640] sm:$0xff]
    %v924 = vld [vmem:[#allocation11 + $0x648] sm:$0xff]
    %v925 = vld [vmem:[#allocation11 + $0x650] sm:$0xff]
    %v926 = vld [vmem:[#allocation11 + $0x658] sm:$0xff]
    %v927 = vld [vmem:[#allocation11 + $0x660] sm:$0xff]
    %v928 = vld [vmem:[#allocation11 + $0x668] sm:$0xff]
    %v929 = vld [vmem:[#allocation11 + $0x670] sm:$0xff]
    %v930 = vld [vmem:[#allocation11 + $0x678] sm:$0xff]
    %v931 = vld [vmem:[#allocation11 + $0x680] sm:$0xff]
    %v932 = vld [vmem:[#allocation11 + $0x688] sm:$0xff]
    %v933 = vld [vmem:[#allocation11 + $0x690] sm:$0xff]
    %v934 = vld [vmem:[#allocation11 + $0x698] sm:$0xff]
    %v935 = vld [vmem:[#allocation11 + $0x6a0] sm:$0xff]
    %v936 = vld [vmem:[#allocation11 + $0x6a8] sm:$0xff]
    %v937 = vld [vmem:[#allocation11 + $0x6b0] sm:$0xff]
    %v938 = vld [vmem:[#allocation11 + $0x6b8] sm:$0xff]
    %v939 = vld [vmem:[#allocation11 + $0x6c0] sm:$0xff]
    %v940 = vld [vmem:[#allocation11 + $0x6c8] sm:$0xff]
    %v941 = vld [vmem:[#allocation11 + $0x6d0] sm:$0xff]
    %v942 = vld [vmem:[#allocation11 + $0x6d8] sm:$0xff]
    %v943 = vld [vmem:[#allocation11 + $0x6e0] sm:$0xff]
    %v944 = vld [vmem:[#allocation11 + $0x6e8] sm:$0xff]
    %v945 = vld [vmem:[#allocation11 + $0x6f0] sm:$0xff]
    %v946 = vld [vmem:[#allocation11 + $0x6f8] sm:$0xff]
    %v947 = vld [vmem:[#allocation11 + $0x700] sm:$0xff]
    %v948 = vld [vmem:[#allocation11 + $0x708] sm:$0xff]
    %v949 = vld [vmem:[#allocation11 + $0x710] sm:$0xff]
    %v950 = vld [vmem:[#allocation11 + $0x718] sm:$0xff]
    %v951 = vld [vmem:[#allocation11 + $0x720] sm:$0xff]
    %v952 = vld [vmem:[#allocation11 + $0x728] sm:$0xff]
    %v953 = vld [vmem:[#allocation11 + $0x730] sm:$0xff]
    %v954 = vld [vmem:[#allocation11 + $0x738] sm:$0xff]
    %v955 = vld [vmem:[#allocation11 + $0x740] sm:$0xff]
    %v956 = vld [vmem:[#allocation11 + $0x748] sm:$0xff]
    %v957 = vld [vmem:[#allocation11 + $0x750] sm:$0xff]
    %v958 = vld [vmem:[#allocation11 + $0x758] sm:$0xff]
    %v959 = vld [vmem:[#allocation11 + $0x760] sm:$0xff]
    %v960 = vld [vmem:[#allocation11 + $0x768] sm:$0xff]
    %v961 = vld [vmem:[#allocation11 + $0x770] sm:$0xff]
    %v962 = vld [vmem:[#allocation11 + $0x778] sm:$0xff]
    %v963 = vld [vmem:[#allocation11 + $0x780] sm:$0xff]
    %v964 = vld [vmem:[#allocation11 + $0x788] sm:$0xff]
    %v965 = vld [vmem:[#allocation11 + $0x790] sm:$0xff]
    %v966 = vld [vmem:[#allocation11 + $0x798] sm:$0xff]
    %v967 = vld [vmem:[#allocation11 + $0x7a0] sm:$0xff]
    %v968 = vld [vmem:[#allocation11 + $0x7a8] sm:$0xff]
    %v969 = vld [vmem:[#allocation11 + $0x7b0] sm:$0xff]
    %v970 = vld [vmem:[#allocation11 + $0x7b8] sm:$0xff]
    %v971 = vld [vmem:[#allocation11 + $0x7c0] sm:$0xff]
    %v972 = vld [vmem:[#allocation11 + $0x7c8] sm:$0xff]
    %v973 = vld [vmem:[#allocation11 + $0x7d0] sm:$0xff]
    %v974 = vld [vmem:[#allocation11 + $0x7d8] sm:$0xff]
    %v975 = vld [vmem:[#allocation11 + $0x7e0] sm:$0xff]
    %v976 = vld [vmem:[#allocation11 + $0x7e8] sm:$0xff]
    %v977 = vld [vmem:[#allocation11 + $0x7f0] sm:$0xff]
    %v978 = vld [vmem:[#allocation11 + $0x7f8] sm:$0xff]
    %v979 = vld [vmem:[#allocation11 + $0x800] sm:$0xff]
    %v980 = vld [vmem:[#allocation11 + $0x808] sm:$0xff]
    %v981 = vld [vmem:[#allocation11 + $0x810] sm:$0xff]
    %v982 = vld [vmem:[#allocation11 + $0x818] sm:$0xff]
    %v983 = vld [vmem:[#allocation11 + $0x820] sm:$0xff]
    %v984 = vld [vmem:[#allocation11 + $0x828] sm:$0xff]
    %v985 = vld [vmem:[#allocation11 + $0x830] sm:$0xff]
    %v986 = vld [vmem:[#allocation11 + $0x838] sm:$0xff]
    %v987 = vld [vmem:[#allocation11 + $0x840] sm:$0xff]
    %v988 = vld [vmem:[#allocation11 + $0x848] sm:$0xff]
    %v989 = vld [vmem:[#allocation11 + $0x850] sm:$0xff]
    %v990 = vld [vmem:[#allocation11 + $0x858] sm:$0xff]
    %v991 = vld [vmem:[#allocation11 + $0x860] sm:$0xff]
    %v992 = vld [vmem:[#allocation11 + $0x868] sm:$0xff]
    %v993 = vld [vmem:[#allocation11 + $0x870] sm:$0xff]
    %v994 = vld [vmem:[#allocation11 + $0x878] sm:$0xff]
    %v995 = vld [vmem:[#allocation11 + $0x880] sm:$0xff]
    %v996 = vld [vmem:[#allocation11 + $0x888] sm:$0xff]
    %v997 = vld [vmem:[#allocation11 + $0x890] sm:$0xff]
    %v998 = vld [vmem:[#allocation11 + $0x898] sm:$0xff]
    %v999 = vld [vmem:[#allocation11 + $0x8a0] sm:$0xff]
    %v1000 = vld [vmem:[#allocation11 + $0x8a8] sm:$0xff]
    %v1001 = vld [vmem:[#allocation11 + $0x8b0] sm:$0xff]
    %v1002 = vld [vmem:[#allocation11 + $0x8b8] sm:$0xff]
    %v1003 = vld [vmem:[#allocation11 + $0x8c0] sm:$0xff]
    %v1004 = vld [vmem:[#allocation11 + $0x8c8] sm:$0xff]
    %v1005 = vld [vmem:[#allocation11 + $0x8d0] sm:$0xff]
    %v1006 = vld [vmem:[#allocation11 + $0x8d8] sm:$0xff]
    %v1007 = vld [vmem:[#allocation11 + $0x8e0] sm:$0xff]
    %v1008 = vld [vmem:[#allocation11 + $0x8e8] sm:$0xff]
    %v1009 = vld [vmem:[#allocation11 + $0x8f0] sm:$0xff]
    %v1010 = vld [vmem:[#allocation11 + $0x8f8] sm:$0xff]
    %v1011 = vld [vmem:[#allocation11 + $0x900] sm:$0xff]
    %v1012 = vld [vmem:[#allocation11 + $0x908] sm:$0xff]
    %v1013 = vld [vmem:[#allocation11 + $0x910] sm:$0xff]
    %v1014 = vld [vmem:[#allocation11 + $0x918] sm:$0xff]
    %v1015 = vld [vmem:[#allocation11 + $0x920] sm:$0xff]
    %v1016 = vld [vmem:[#allocation11 + $0x928] sm:$0xff]
    %v1017 = vld [vmem:[#allocation11 + $0x930] sm:$0xff]
    %v1018 = vld [vmem:[#allocation11 + $0x938] sm:$0xff]
    %v1019 = vld [vmem:[#allocation11 + $0x940] sm:$0xff]
    %v1020 = vld [vmem:[#allocation11 + $0x948] sm:$0xff]
    %v1021 = vld [vmem:[#allocation11 + $0x950] sm:$0xff]
    %v1022 = vld [vmem:[#allocation11 + $0x958] sm:$0xff]
    %v1023 = vld [vmem:[#allocation11 + $0x960] sm:$0xff]
    %v1024 = vld [vmem:[#allocation11 + $0x968] sm:$0xff]
    %v1025 = vld [vmem:[#allocation11 + $0x970] sm:$0xff]
    %v1026 = vld [vmem:[#allocation11 + $0x978] sm:$0xff]
    %v1027 = vld [vmem:[#allocation11 + $0x980] sm:$0xff]
    %v1028 = vld [vmem:[#allocation11 + $0x988] sm:$0xff]
    %v1029 = vld [vmem:[#allocation11 + $0x990] sm:$0xff]
    %v1030 = vld [vmem:[#allocation11 + $0x998] sm:$0xff]
    %v1031 = vld [vmem:[#allocation11 + $0x9a0] sm:$0xff]
    %v1032 = vld [vmem:[#allocation11 + $0x9a8] sm:$0xff]
    %v1033 = vld [vmem:[#allocation11 + $0x9b0] sm:$0xff]
    %v1034 = vld [vmem:[#allocation11 + $0x9b8] sm:$0xff]
    %v1035 = vld [vmem:[#allocation11 + $0x9c0] sm:$0xff]
    %v1036 = vld [vmem:[#allocation11 + $0x9c8] sm:$0xff]
    %v1037 = vld [vmem:[#allocation11 + $0x9d0] sm:$0xff]
    %v1038 = vld [vmem:[#allocation11 + $0x9d8] sm:$0xff]
    %v1039 = vld [vmem:[#allocation11 + $0x9e0] sm:$0xff]
    %v1040 = vld [vmem:[#allocation11 + $0x9e8] sm:$0xff]
    %v1041 = vld [vmem:[#allocation11 + $0x9f0] sm:$0xff]
    %v1042 = vld [vmem:[#allocation11 + $0x9f8] sm:$0xff]
    %v1043 = vld [vmem:[#allocation11 + $0xa00] sm:$0xff]
    %v1044 = vld [vmem:[#allocation11 + $0xa08] sm:$0xff]
    %v1045 = vld [vmem:[#allocation11 + $0xa10] sm:$0xff]
    %v1046 = vld [vmem:[#allocation11 + $0xa18] sm:$0xff]
    %v1047 = vld [vmem:[#allocation11 + $0xa20] sm:$0xff]
    %v1048 = vld [vmem:[#allocation11 + $0xa28] sm:$0xff]
    %v1049 = vld [vmem:[#allocation11 + $0xa30] sm:$0xff]
    %v1050 = vld [vmem:[#allocation11 + $0xa38] sm:$0xff]
    %v1051 = vld [vmem:[#allocation11 + $0xa40] sm:$0xff]
    %v1052 = vld [vmem:[#allocation11 + $0xa48] sm:$0xff]
    %v1053 = vld [vmem:[#allocation11 + $0xa50] sm:$0xff]
    %v1054 = vld [vmem:[#allocation11 + $0xa58] sm:$0xff]
    %v1055 = vld [vmem:[#allocation11 + $0xa60] sm:$0xff]
    %v1056 = vld [vmem:[#allocation11 + $0xa68] sm:$0xff]
    %v1057 = vld [vmem:[#allocation11 + $0xa70] sm:$0xff]
    %v1058 = vld [vmem:[#allocation11 + $0xa78] sm:$0xff]
    %v1059 = vld [vmem:[#allocation11 + $0xa80] sm:$0xff]
    %v1060 = vld [vmem:[#allocation11 + $0xa88] sm:$0xff]
    %v1061 = vld [vmem:[#allocation11 + $0xa90] sm:$0xff]
    %v1062 = vld [vmem:[#allocation11 + $0xa98] sm:$0xff]
    %v1063 = vld [vmem:[#allocation11 + $0xaa0] sm:$0xff]
    %v1064 = vld [vmem:[#allocation11 + $0xaa8] sm:$0xff]
    %v1065 = vld [vmem:[#allocation11 + $0xab0] sm:$0xff]
    %v1066 = vld [vmem:[#allocation11 + $0xab8] sm:$0xff]
    %v1067 = vld [vmem:[#allocation11 + $0xac0] sm:$0xff]
    %v1068 = vld [vmem:[#allocation11 + $0xac8] sm:$0xff]
    %v1069 = vld [vmem:[#allocation11 + $0xad0] sm:$0xff]
    %v1070 = vld [vmem:[#allocation11 + $0xad8] sm:$0xff]
    %v1071 = vld [vmem:[#allocation11 + $0xae0] sm:$0xff]
    %v1072 = vld [vmem:[#allocation11 + $0xae8] sm:$0xff]
    %v1073 = vld [vmem:[#allocation11 + $0xaf0] sm:$0xff]
    %v1074 = vld [vmem:[#allocation11 + $0xaf8] sm:$0xff]
    %v1075 = vld [vmem:[#allocation11 + $0xb00] sm:$0xff]
    %v1076 = vld [vmem:[#allocation11 + $0xb08] sm:$0xff]
    %v1077 = vld [vmem:[#allocation11 + $0xb10] sm:$0xff]
    %v1078 = vld [vmem:[#allocation11 + $0xb18] sm:$0xff]
    %v1079 = vld [vmem:[#allocation11 + $0xb20] sm:$0xff]
    %v1080 = vld [vmem:[#allocation11 + $0xb28] sm:$0xff]
    %v1081 = vld [vmem:[#allocation11 + $0xb30] sm:$0xff]
    %v1082 = vld [vmem:[#allocation11 + $0xb38] sm:$0xff]
    %v1083 = vld [vmem:[#allocation11 + $0xb40] sm:$0xff]
    %v1084 = vld [vmem:[#allocation11 + $0xb48] sm:$0xff]
    %v1085 = vld [vmem:[#allocation11 + $0xb50] sm:$0xff]
    %v1086 = vld [vmem:[#allocation11 + $0xb58] sm:$0xff]
    %v1087 = vld [vmem:[#allocation11 + $0xb60] sm:$0xff]
    %v1088 = vld [vmem:[#allocation11 + $0xb68] sm:$0xff]
    %v1089 = vld [vmem:[#allocation11 + $0xb70] sm:$0xff]
    %v1090 = vld [vmem:[#allocation11 + $0xb78] sm:$0xff]
    %v1091 = vld [vmem:[#allocation11 + $0xb80] sm:$0xff]
    %v1092 = vld [vmem:[#allocation11 + $0xb88] sm:$0xff]
    %v1093 = vld [vmem:[#allocation11 + $0xb90] sm:$0xff]
    %v1094 = vld [vmem:[#allocation11 + $0xb98] sm:$0xff]
    %v1095 = vld [vmem:[#allocation11 + $0xba0] sm:$0xff]
    %v1096 = vld [vmem:[#allocation11 + $0xba8] sm:$0xff]
    %v1097 = vld [vmem:[#allocation11 + $0xbb0] sm:$0xff]
    %v1098 = vld [vmem:[#allocation11 + $0xbb8] sm:$0xff]
    %v1099 = vld [vmem:[#allocation11 + $0xbc0] sm:$0xff]
    %v1100 = vld [vmem:[#allocation11 + $0xbc8] sm:$0xff]
    %v1101 = vld [vmem:[#allocation11 + $0xbd0] sm:$0xff]
    %v1102 = vld [vmem:[#allocation11 + $0xbd8] sm:$0xff]
    %v1103 = vld [vmem:[#allocation11 + $0xbe0] sm:$0xff]
    %v1104 = vld [vmem:[#allocation11 + $0xbe8] sm:$0xff]
    %v1105 = vld [vmem:[#allocation11 + $0xbf0] sm:$0xff]
    %v1106 = vld [vmem:[#allocation11 + $0xbf8] sm:$0xff]
    %v1107 = vld [vmem:[#allocation11 + $0xc00] sm:$0xff]
    %v1108 = vld [vmem:[#allocation11 + $0xc08] sm:$0xff]
    %v1109 = vld [vmem:[#allocation11 + $0xc10] sm:$0xff]
    %v1110 = vld [vmem:[#allocation11 + $0xc18] sm:$0xff]
    %v1111 = vld [vmem:[#allocation11 + $0xc20] sm:$0xff]
    %v1112 = vld [vmem:[#allocation11 + $0xc28] sm:$0xff]
    %v1113 = vld [vmem:[#allocation11 + $0xc30] sm:$0xff]
    %v1114 = vld [vmem:[#allocation11 + $0xc38] sm:$0xff]
    %v1115 = vld [vmem:[#allocation11 + $0xc40] sm:$0xff]
    %v1116 = vld [vmem:[#allocation11 + $0xc48] sm:$0xff]
    %v1117 = vld [vmem:[#allocation11 + $0xc50] sm:$0xff]
    %v1118 = vld [vmem:[#allocation11 + $0xc58] sm:$0xff]
    %v1119 = vld [vmem:[#allocation11 + $0xc60] sm:$0xff]
    %v1120 = vld [vmem:[#allocation11 + $0xc68] sm:$0xff]
    %v1121 = vld [vmem:[#allocation11 + $0xc70] sm:$0xff]
    %v1122 = vld [vmem:[#allocation11 + $0xc78] sm:$0xff]
    %v1123 = vld [vmem:[#allocation11 + $0xc80] sm:$0xff]
    %v1124 = vld [vmem:[#allocation11 + $0xc88] sm:$0xff]
    %v1125 = vld [vmem:[#allocation11 + $0xc90] sm:$0xff]
    %v1126 = vld [vmem:[#allocation11 + $0xc98] sm:$0xff]
    %v1127 = vld [vmem:[#allocation11 + $0xca0] sm:$0xff]
    %v1128 = vld [vmem:[#allocation11 + $0xca8] sm:$0xff]
    %v1129 = vld [vmem:[#allocation11 + $0xcb0] sm:$0xff]
    %v1130 = vld [vmem:[#allocation11 + $0xcb8] sm:$0xff]
    %v1131 = vld [vmem:[#allocation11 + $0xcc0] sm:$0xff]
    %v1132 = vld [vmem:[#allocation11 + $0xcc8] sm:$0xff]
    %v1133 = vld [vmem:[#allocation11 + $0xcd0] sm:$0xff]
    %v1134 = vld [vmem:[#allocation11 + $0xcd8] sm:$0xff]
    %v1135 = vld [vmem:[#allocation11 + $0xce0] sm:$0xff]
    %v1136 = vld [vmem:[#allocation11 + $0xce8] sm:$0xff]
    %v1137 = vld [vmem:[#allocation11 + $0xcf0] sm:$0xff]
    %v1138 = vld [vmem:[#allocation11 + $0xcf8] sm:$0xff]
    %v1139 = vld [vmem:[#allocation11 + $0xd00] sm:$0xff]
    %v1140 = vld [vmem:[#allocation11 + $0xd08] sm:$0xff]
    %v1141 = vld [vmem:[#allocation11 + $0xd10] sm:$0xff]
    %v1142 = vld [vmem:[#allocation11 + $0xd18] sm:$0xff]
    %v1143 = vld [vmem:[#allocation11 + $0xd20] sm:$0xff]
    %v1144 = vld [vmem:[#allocation11 + $0xd28] sm:$0xff]
    %v1145 = vld [vmem:[#allocation11 + $0xd30] sm:$0xff]
    %v1146 = vld [vmem:[#allocation11 + $0xd38] sm:$0xff]
    %v1147 = vld [vmem:[#allocation11 + $0xd40] sm:$0xff]
    %v1148 = vld [vmem:[#allocation11 + $0xd48] sm:$0xff]
    %v1149 = vld [vmem:[#allocation11 + $0xd50] sm:$0xff]
    %v1150 = vld [vmem:[#allocation11 + $0xd58] sm:$0xff]
    %v1151 = vld [vmem:[#allocation11 + $0xd60] sm:$0xff]
    %v1152 = vld [vmem:[#allocation11 + $0xd68] sm:$0xff]
    %v1153 = vld [vmem:[#allocation11 + $0xd70] sm:$0xff]
    %v1154 = vld [vmem:[#allocation11 + $0xd78] sm:$0xff]
    %v1155 = vld [vmem:[#allocation11 + $0xd80] sm:$0xff]
    %v1156 = vld [vmem:[#allocation11 + $0xd88] sm:$0xff]
    %v1157 = vld [vmem:[#allocation11 + $0xd90] sm:$0xff]
    %v1158 = vld [vmem:[#allocation11 + $0xd98] sm:$0xff]
    %v1159 = vld [vmem:[#allocation11 + $0xda0] sm:$0xff]
    %v1160 = vld [vmem:[#allocation11 + $0xda8] sm:$0xff]
    %v1161 = vld [vmem:[#allocation11 + $0xdb0] sm:$0xff]
    %v1162 = vld [vmem:[#allocation11 + $0xdb8] sm:$0xff]
    %v1163 = vld [vmem:[#allocation11 + $0xdc0] sm:$0xff]
    %v1164 = vld [vmem:[#allocation11 + $0xdc8] sm:$0xff]
    %v1165 = vld [vmem:[#allocation11 + $0xdd0] sm:$0xff]
    %v1166 = vld [vmem:[#allocation11 + $0xdd8] sm:$0xff]
    %v1167 = vld [vmem:[#allocation11 + $0xde0] sm:$0xff]
    %v1168 = vld [vmem:[#allocation11 + $0xde8] sm:$0xff]
    %v1169 = vld [vmem:[#allocation11 + $0xdf0] sm:$0xff]
    %v1170 = vld [vmem:[#allocation11 + $0xdf8] sm:$0xff]
    %v1171 = vld [vmem:[#allocation11 + $0xe00] sm:$0xff]
    %v1172 = vld [vmem:[#allocation11 + $0xe08] sm:$0xff]
    %v1173 = vld [vmem:[#allocation11 + $0xe10] sm:$0xff]
    %v1174 = vld [vmem:[#allocation11 + $0xe18] sm:$0xff]
    %v1175 = vld [vmem:[#allocation11 + $0xe20] sm:$0xff]
    %v1176 = vld [vmem:[#allocation11 + $0xe28] sm:$0xff]
    %v1177 = vld [vmem:[#allocation11 + $0xe30] sm:$0xff]
    %v1178 = vld [vmem:[#allocation11 + $0xe38] sm:$0xff]
    %v1179 = vld [vmem:[#allocation11 + $0xe40] sm:$0xff]
    %v1180 = vld [vmem:[#allocation11 + $0xe48] sm:$0xff]
    %v1181 = vld [vmem:[#allocation11 + $0xe50] sm:$0xff]
    %v1182 = vld [vmem:[#allocation11 + $0xe58] sm:$0xff]
    %v1183 = vld [vmem:[#allocation11 + $0xe60] sm:$0xff]
    %v1184 = vld [vmem:[#allocation11 + $0xe68] sm:$0xff]
    %v1185 = vld [vmem:[#allocation11 + $0xe70] sm:$0xff]
    %v1186 = vld [vmem:[#allocation11 + $0xe78] sm:$0xff]
    %v1187 = vld [vmem:[#allocation11 + $0xe80] sm:$0xff]
    %v1188 = vld [vmem:[#allocation11 + $0xe88] sm:$0xff]
    %v1189 = vld [vmem:[#allocation11 + $0xe90] sm:$0xff]
    %v1190 = vld [vmem:[#allocation11 + $0xe98] sm:$0xff]
    %v1191 = vld [vmem:[#allocation11 + $0xea0] sm:$0xff]
    %v1192 = vld [vmem:[#allocation11 + $0xea8] sm:$0xff]
    %v1193 = vld [vmem:[#allocation11 + $0xeb0] sm:$0xff]
    %v1194 = vld [vmem:[#allocation11 + $0xeb8] sm:$0xff]
    %v1195 = vld [vmem:[#allocation11 + $0xec0] sm:$0xff]
    %v1196 = vld [vmem:[#allocation11 + $0xec8] sm:$0xff]
    %v1197 = vld [vmem:[#allocation11 + $0xed0] sm:$0xff]
    %v1198 = vld [vmem:[#allocation11 + $0xed8] sm:$0xff]
    %v1199 = vld [vmem:[#allocation11 + $0xee0] sm:$0xff]
    %v1200 = vld [vmem:[#allocation11 + $0xee8] sm:$0xff]
    %v1201 = vld [vmem:[#allocation11 + $0xef0] sm:$0xff]
    %v1202 = vld [vmem:[#allocation11 + $0xef8] sm:$0xff]
    %v1203 = vld [vmem:[#allocation11 + $0xf00] sm:$0xff]
    %v1204 = vld [vmem:[#allocation11 + $0xf08] sm:$0xff]
    %v1205 = vld [vmem:[#allocation11 + $0xf10] sm:$0xff]
    %v1206 = vld [vmem:[#allocation11 + $0xf18] sm:$0xff]
    %v1207 = vld [vmem:[#allocation11 + $0xf20] sm:$0xff]
    %v1208 = vld [vmem:[#allocation11 + $0xf28] sm:$0xff]
    %v1209 = vld [vmem:[#allocation11 + $0xf30] sm:$0xff]
    %v1210 = vld [vmem:[#allocation11 + $0xf38] sm:$0xff]
    %v1211 = vld [vmem:[#allocation11 + $0xf40] sm:$0xff]
    %v1212 = vld [vmem:[#allocation11 + $0xf48] sm:$0xff]
    %v1213 = vld [vmem:[#allocation11 + $0xf50] sm:$0xff]
    %v1214 = vld [vmem:[#allocation11 + $0xf58] sm:$0xff]
    %v1215 = vld [vmem:[#allocation11 + $0xf60] sm:$0xff]
    %v1216 = vld [vmem:[#allocation11 + $0xf68] sm:$0xff]
    %v1217 = vld [vmem:[#allocation11 + $0xf70] sm:$0xff]
    %v1218 = vld [vmem:[#allocation11 + $0xf78] sm:$0xff]
    %v1219 = vld [vmem:[#allocation11 + $0xf80] sm:$0xff]
    %v1220 = vld [vmem:[#allocation11 + $0xf88] sm:$0xff]
    %v1221 = vld [vmem:[#allocation11 + $0xf90] sm:$0xff]
    %v1222 = vld [vmem:[#allocation11 + $0xf98] sm:$0xff]
    %v1223 = vld [vmem:[#allocation11 + $0xfa0] sm:$0xff]
    %v1224 = vld [vmem:[#allocation11 + $0xfa8] sm:$0xff]
    %v1225 = vld [vmem:[#allocation11 + $0xfb0] sm:$0xff]
    %v1226 = vld [vmem:[#allocation11 + $0xfb8] sm:$0xff]
    %v1227 = vld [vmem:[#allocation11 + $0xfc0] sm:$0xff]
    %v1228 = vld [vmem:[#allocation11 + $0xfc8] sm:$0xff]
    %v1229 = vld [vmem:[#allocation11 + $0xfd0] sm:$0xff]
    %v1230 = vld [vmem:[#allocation11 + $0xfd8] sm:$0xff]
    %v1231 = vld [vmem:[#allocation11 + $0xfe0] sm:$0xff]
    %v1232 = vld [vmem:[#allocation11 + $0xfe8] sm:$0xff]
    %v1233 = vld [vmem:[#allocation11 + $0xff0] sm:$0xff]
    %v1234 = vld [vmem:[#allocation11 + $0xff8] sm:$0xff]
    %v1235 = vld [vmem:[#allocation13] sm:$0xff]
    %v1237 = vlaneseq
    %v1238 = vshrl.u32 %v1237, 7
    %v1239 = vsub.s32 0, %v1238
    %v1240 = vrot.slane %v1235, %v1239
    %v1241 = vlaneseq
    %v1242 = vshrl.u32 %v1241, 7
    %v1243 = vsub.s32 1, %v1242
    %v1244 = vrot.slane %v1235, %v1243
    %v1245 = vlaneseq
    %v1246 = vshrl.u32 %v1245, 7
    %v1247 = vsub.s32 2, %v1246
    %v1248 = vrot.slane %v1235, %v1247
    %v1249 = vlaneseq
    %v1250 = vshrl.u32 %v1249, 7
    %v1251 = vsub.s32 3, %v1250
    %v1252 = vrot.slane %v1235, %v1251
    %v1253 = vlaneseq
    %v1254 = vshrl.u32 %v1253, 7
    %v1255 = vsub.s32 4, %v1254
    %v1256 = vrot.slane %v1235, %v1255
    %v1257 = vlaneseq
    %v1258 = vshrl.u32 %v1257, 7
    %v1259 = vsub.s32 5, %v1258
    %v1260 = vrot.slane %v1235, %v1259
    %v1261 = vlaneseq
    %v1262 = vshrl.u32 %v1261, 7
    %v1263 = vsub.s32 6, %v1262
    %v1264 = vrot.slane %v1235, %v1263
    %v1265 = vlaneseq
    %v1266 = vshrl.u32 %v1265, 7
    %v1267 = vsub.s32 7, %v1266
    %v1268 = vrot.slane %v1235, %v1267
    %1277 = vmatprep.subr.mxu0 %v724
    %1278 = vmatpush1.msra.mxu0 %v723
    %1279 = vmatprep.subr.mxu0 %v732
    %1280 = vmatpush1.msra.mxu0 %v731
    %1281 = vmatprep.subr.mxu0 %v740
    %1282 = vmatpush1.msra.mxu0 %v739
    %1283 = vmatprep.subr.mxu0 %v748
    %1284 = vmatpush1.msra.mxu0 %v747
    %1285 = vmatprep.subr.mxu0 %v756
    %1286 = vmatpush1.msra.mxu0 %v755
    %1287 = vmatprep.subr.mxu0 %v764
    %1288 = vmatpush1.msra.mxu0 %v763
    %1289 = vmatprep.subr.mxu0 %v772
    %1290 = vmatpush1.msra.mxu0 %v771
    %1291 = vmatprep.subr.mxu0 %v780
    %1292 = vmatpush1.msra.mxu0 %v779
    %1293 = vmatprep.subr.mxu0 %v788
    %1294 = vmatpush1.msra.mxu0 %v787
    %1295 = vmatprep.subr.mxu0 %v796
    %1296 = vmatpush1.msra.mxu0 %v795
    %1297 = vmatprep.subr.mxu0 %v804
    %1298 = vmatpush1.msra.mxu0 %v803
    %1299 = vmatprep.subr.mxu0 %v812
    %1300 = vmatpush1.msra.mxu0 %v811
    %1301 = vmatprep.subr.mxu0 %v820
    %1302 = vmatpush1.msra.mxu0 %v819
    %1303 = vmatprep.subr.mxu0 %v828
    %1304 = vmatpush1.msra.mxu0 %v827
    %1305 = vmatprep.subr.mxu0 %v836
    %1306 = vmatpush1.msra.mxu0 %v835
    %1307 = vmatprep.subr.mxu0 %v844
    %1308 = vmatpush1.msra.mxu0 %v843
    %1309 = vmatprep.subr.mxu0 %v852
    %1310 = vmatpush1.msra.mxu0 %v851
    %1311 = vmatprep.subr.mxu0 %v860
    %1312 = vmatpush1.msra.mxu0 %v859
    %1313 = vmatprep.subr.mxu0 %v868
    %1314 = vmatpush1.msra.mxu0 %v867
    %1315 = vmatprep.subr.mxu0 %v876
    %1316 = vmatpush1.msra.mxu0 %v875
    %1317 = vmatprep.subr.mxu0 %v884
    %1318 = vmatpush1.msra.mxu0 %v883
    %1319 = vmatprep.subr.mxu0 %v892
    %1320 = vmatpush1.msra.mxu0 %v891
    %1321 = vmatprep.subr.mxu0 %v900
    %1322 = vmatpush1.msra.mxu0 %v899
    %1323 = vmatprep.subr.mxu0 %v908
    %1324 = vmatpush1.msra.mxu0 %v907
    %1325 = vmatprep.subr.mxu0 %v916
    %1326 = vmatpush1.msra.mxu0 %v915
    %1327 = vmatprep.subr.mxu0 %v924
    %1328 = vmatpush1.msra.mxu0 %v923
    %1329 = vmatprep.subr.mxu0 %v932
    %1330 = vmatpush1.msra.mxu0 %v931
    %1331 = vmatprep.subr.mxu0 %v940
    %1332 = vmatpush1.msra.mxu0 %v939
    %1333 = vmatprep.subr.mxu0 %v948
    %1334 = vmatpush1.msra.mxu0 %v947
    %1335 = vmatprep.subr.mxu0 %v956
    %1336 = vmatpush1.msra.mxu0 %v955
    %1337 = vmatprep.subr.mxu0 %v964
    %1338 = vmatpush1.msra.mxu0 %v963
    %1339 = vmatprep.subr.mxu0 %v972
    %1340 = vmatpush1.msra.mxu0 %v971
    %1341 = vmatprep.mubr.f32.mxu0 %v716
    %1342 = vmatmul.mubr.f32.gmra.mrb[0].mxu0 %v715
    %v1343 = vpop.f32.mrb[0].mxu0
    %v1344 = vadd.f32 %v1240, %v1343
    %v1345 = vpop.f32.mrb[0].mxu0
    %v1346 = vadd.f32 %v1244, %v1345
    %1347 = vmatprep.mubr.f32.mxu0 %v720
    %1348 = vmatmul.mubr.f32.gmra.mrb[0].mxu0 %v719
    %v1349 = vpop.f32.mrb[0].mxu0
    %v1350 = vadd.f32 %v1240, %v1349
    %v1351 = vpop.f32.mrb[0].mxu0
    %v1352 = vadd.f32 %v1244, %v1351
    %1353 = vdwg.mxu0
    %1354 = vmatprep.subr.mxu0 %v980
    %1355 = vmatpush1.msra.mxu0 %v979
    %1356 = vmatprep.subr.mxu0 %v988
    %1357 = vmatpush1.msra.mxu0 %v987
    %1358 = vmatprep.subr.mxu0 %v996
    %1359 = vmatpush1.msra.mxu0 %v995
    %1360 = vmatprep.subr.mxu0 %v1004
    %1361 = vmatpush1.msra.mxu0 %v1003
    %1362 = vmatprep.subr.mxu0 %v1012
    %1363 = vmatpush1.msra.mxu0 %v1011
    %1364 = vmatprep.subr.mxu0 %v1020
    %1365 = vmatpush1.msra.mxu0 %v1019
    %1366 = vmatprep.subr.mxu0 %v1028
    %1367 = vmatpush1.msra.mxu0 %v1027
    %1368 = vmatprep.subr.mxu0 %v1036
    %1369 = vmatpush1.msra.mxu0 %v1035
    %1370 = vmatprep.subr.mxu0 %v1044
    %1371 = vmatpush1.msra.mxu0 %v1043
    %1372 = vmatprep.subr.mxu0 %v1052
    %1373 = vmatpush1.msra.mxu0 %v1051
    %1374 = vmatprep.subr.mxu0 %v1060
    %1375 = vmatpush1.msra.mxu0 %v1059
    %1376 = vmatprep.subr.mxu0 %v1068
    %1377 = vmatpush1.msra.mxu0 %v1067
    %1378 = vmatprep.subr.mxu0 %v1076
    %1379 = vmatpush1.msra.mxu0 %v1075
    %1380 = vmatprep.subr.mxu0 %v1084
    %1381 = vmatpush1.msra.mxu0 %v1083
    %1382 = vmatprep.subr.mxu0 %v1092
    %1383 = vmatpush1.msra.mxu0 %v1091
    %1384 = vmatprep.subr.mxu0 %v1100
    %1385 = vmatpush1.msra.mxu0 %v1099
    %1386 = vmatprep.subr.mxu0 %v1108
    %1387 = vmatpush1.msra.mxu0 %v1107
    %1388 = vmatprep.subr.mxu0 %v1116
    %1389 = vmatpush1.msra.mxu0 %v1115
    %1390 = vmatprep.subr.mxu0 %v1124
    %1391 = vmatpush1.msra.mxu0 %v1123
    %1392 = vmatprep.subr.mxu0 %v1132
    %1393 = vmatpush1.msra.mxu0 %v1131
    %1394 = vmatprep.subr.mxu0 %v1140
    %1395 = vmatpush1.msra.mxu0 %v1139
    %1396 = vmatprep.subr.mxu0 %v1148
    %1397 = vmatpush1.msra.mxu0 %v1147
    %1398 = vmatprep.subr.mxu0 %v1156
    %1399 = vmatpush1.msra.mxu0 %v1155
    %1400 = vmatprep.subr.mxu0 %v1164
    %1401 = vmatpush1.msra.mxu0 %v1163
    %1402 = vmatprep.subr.mxu0 %v1172
    %1403 = vmatpush1.msra.mxu0 %v1171
    %1404 = vmatprep.subr.mxu0 %v1180
    %1405 = vmatpush1.msra.mxu0 %v1179
    %1406 = vmatprep.subr.mxu0 %v1188
    %1407 = vmatpush1.msra.mxu0 %v1187
    %1408 = vmatprep.subr.mxu0 %v1196
    %1409 = vmatpush1.msra.mxu0 %v1195
    %1410 = vmatprep.subr.mxu0 %v1204
    %1411 = vmatpush1.msra.mxu0 %v1203
    %1412 = vmatprep.subr.mxu0 %v1212
    %1413 = vmatpush1.msra.mxu0 %v1211
    %1414 = vmatprep.subr.mxu0 %v1220
    %1415 = vmatpush1.msra.mxu0 %v1219
    %1416 = vmatprep.subr.mxu0 %v1228
    %1417 = vmatpush1.msra.mxu0 %v1227
    %1418 = vmatprep.mubr.f32.mxu0 %v718
    %1419 = vmatmul.mubr.f32.gmra.mrb[0].mxu0 %v717
    %v1420 = vpop.f32.mrb[0].mxu0
    %v1421 = vadd.f32 %v1344, %v1420
    %v1422 = vpop.f32.mrb[0].mxu0
    %v1423 = vadd.f32 %v1346, %v1422
    %1424 = vmatprep.mubr.f32.mxu0 %v722
    %1425 = vmatmul.mubr.f32.gmra.mrb[0].mxu0 %v721
    %v1426 = vpop.f32.mrb[0].mxu0
    %v1427 = vadd.f32 %v1350, %v1426
    %v1428 = vpop.f32.mrb[0].mxu0
    %v1429 = vadd.f32 %v1352, %v1428
    %1430 = vdwg.mxu0
    %1431 = vmatprep.subr.mxu0 %v726
    %1432 = vmatpush1.msra.mxu0 %v725
    %1433 = vmatprep.subr.mxu0 %v734
    %1434 = vmatpush1.msra.mxu0 %v733
    %1435 = vmatprep.subr.mxu0 %v742
    %1436 = vmatpush1.msra.mxu0 %v741
    %1437 = vmatprep.subr.mxu0 %v750
    %1438 = vmatpush1.msra.mxu0 %v749
    %1439 = vmatprep.subr.mxu0 %v758
    %1440 = vmatpush1.msra.mxu0 %v757
    %1441 = vmatprep.subr.mxu0 %v766
    %1442 = vmatpush1.msra.mxu0 %v765
    %1443 = vmatprep.subr.mxu0 %v774
    %1444 = vmatpush1.msra.mxu0 %v773
    %1445 = vmatprep.subr.mxu0 %v782
    %1446 = vmatpush1.msra.mxu0 %v781
    %1447 = vmatprep.subr.mxu0 %v790
    %1448 = vmatpush1.msra.mxu0 %v789
    %1449 = vmatprep.subr.mxu0 %v798
    %1450 = vmatpush1.msra.mxu0 %v797
    %1451 = vmatprep.subr.mxu0 %v806
    %1452 = vmatpush1.msra.mxu0 %v805
    %1453 = vmatprep.subr.mxu0 %v814
    %1454 = vmatpush1.msra.mxu0 %v813
    %1455 = vmatprep.subr.mxu0 %v822
    %1456 = vmatpush1.msra.mxu0 %v821
    %1457 = vmatprep.subr.mxu0 %v830
    %1458 = vmatpush1.msra.mxu0 %v829
    %1459 = vmatprep.subr.mxu0 %v838
    %1460 = vmatpush1.msra.mxu0 %v837
    %1461 = vmatprep.subr.mxu0 %v846
    %1462 = vmatpush1.msra.mxu0 %v845
    %1463 = vmatprep.subr.mxu0 %v854
    %1464 = vmatpush1.msra.mxu0 %v853
    %1465 = vmatprep.subr.mxu0 %v862
    %1466 = vmatpush1.msra.mxu0 %v861
    %1467 = vmatprep.subr.mxu0 %v870
    %1468 = vmatpush1.msra.mxu0 %v869
    %1469 = vmatprep.subr.mxu0 %v878
    %1470 = vmatpush1.msra.mxu0 %v877
    %1471 = vmatprep.subr.mxu0 %v886
    %1472 = vmatpush1.msra.mxu0 %v885
    %1473 = vmatprep.subr.mxu0 %v894
    %1474 = vmatpush1.msra.mxu0 %v893
    %1475 = vmatprep.subr.mxu0 %v902
    %1476 = vmatpush1.msra.mxu0 %v901
    %1477 = vmatprep.subr.mxu0 %v910
    %1478 = vmatpush1.msra.mxu0 %v909
    %1479 = vmatprep.subr.mxu0 %v918
    %1480 = vmatpush1.msra.mxu0 %v917
    %1481 = vmatprep.subr.mxu0 %v926
    %1482 = vmatpush1.msra.mxu0 %v925
    %1483 = vmatprep.subr.mxu0 %v934
    %1484 = vmatpush1.msra.mxu0 %v933
    %1485 = vmatprep.subr.mxu0 %v942
    %1486 = vmatpush1.msra.mxu0 %v941
    %1487 = vmatprep.subr.mxu0 %v950
    %1488 = vmatpush1.msra.mxu0 %v949
    %1489 = vmatprep.subr.mxu0 %v958
    %1490 = vmatpush1.msra.mxu0 %v957
    %1491 = vmatprep.subr.mxu0 %v966
    %1492 = vmatpush1.msra.mxu0 %v965
    %1493 = vmatprep.subr.mxu0 %v974
    %1494 = vmatpush1.msra.mxu0 %v973
    %1495 = vmatprep.mubr.f32.mxu0 %v716
    %1496 = vmatmul.mubr.f32.gmra.mrb[0].mxu0 %v715
    %v1497 = vpop.f32.mrb[0].mxu0
    %v1498 = vadd.f32 %v1248, %v1497
    %v1499 = vpop.f32.mrb[0].mxu0
    %v1500 = vadd.f32 %v1252, %v1499
    %1501 = vmatprep.mubr.f32.mxu0 %v720
    %1502 = vmatmul.mubr.f32.gmra.mrb[0].mxu0 %v719
    %v1503 = vpop.f32.mrb[0].mxu0
    %v1504 = vadd.f32 %v1248, %v1503
    %v1505 = vpop.f32.mrb[0].mxu0
    %v1506 = vadd.f32 %v1252, %v1505
    %1507 = vdwg.mxu0
    %1508 = vmatprep.subr.mxu0 %v982
    %1509 = vmatpush1.msra.mxu0 %v981
    %1510 = vmatprep.subr.mxu0 %v990
    %1511 = vmatpush1.msra.mxu0 %v989
    %1512 = vmatprep.subr.mxu0 %v998
    %1513 = vmatpush1.msra.mxu0 %v997
    %1514 = vmatprep.subr.mxu0 %v1006
    %1515 = vmatpush1.msra.mxu0 %v1005
    %1516 = vmatprep.subr.mxu0 %v1014
    %1517 = vmatpush1.msra.mxu0 %v1013
    %1518 = vmatprep.subr.mxu0 %v1022
    %1519 = vmatpush1.msra.mxu0 %v1021
    %1520 = vmatprep.subr.mxu0 %v1030
    %1521 = vmatpush1.msra.mxu0 %v1029
    %1522 = vmatprep.subr.mxu0 %v1038
    %1523 = vmatpush1.msra.mxu0 %v1037
    %1524 = vmatprep.subr.mxu0 %v1046
    %1525 = vmatpush1.msra.mxu0 %v1045
    %1526 = vmatprep.subr.mxu0 %v1054
    %1527 = vmatpush1.msra.mxu0 %v1053
    %1528 = vmatprep.subr.mxu0 %v1062
    %1529 = vmatpush1.msra.mxu0 %v1061
    %1530 = vmatprep.subr.mxu0 %v1070
    %1531 = vmatpush1.msra.mxu0 %v1069
    %1532 = vmatprep.subr.mxu0 %v1078
    %1533 = vmatpush1.msra.mxu0 %v1077
    %1534 = vmatprep.subr.mxu0 %v1086
    %1535 = vmatpush1.msra.mxu0 %v1085
    %1536 = vmatprep.subr.mxu0 %v1094
    %1537 = vmatpush1.msra.mxu0 %v1093
    %1538 = vmatprep.subr.mxu0 %v1102
    %1539 = vmatpush1.msra.mxu0 %v1101
    %1540 = vmatprep.subr.mxu0 %v1110
    %1541 = vmatpush1.msra.mxu0 %v1109
    %1542 = vmatprep.subr.mxu0 %v1118
    %1543 = vmatpush1.msra.mxu0 %v1117
    %1544 = vmatprep.subr.mxu0 %v1126
    %1545 = vmatpush1.msra.mxu0 %v1125
    %1546 = vmatprep.subr.mxu0 %v1134
    %1547 = vmatpush1.msra.mxu0 %v1133
    %1548 = vmatprep.subr.mxu0 %v1142
    %1549 = vmatpush1.msra.mxu0 %v1141
    %1550 = vmatprep.subr.mxu0 %v1150
    %1551 = vmatpush1.msra.mxu0 %v1149
    %1552 = vmatprep.subr.mxu0 %v1158
    %1553 = vmatpush1.msra.mxu0 %v1157
    %1554 = vmatprep.subr.mxu0 %v1166
    %1555 = vmatpush1.msra.mxu0 %v1165
    %1556 = vmatprep.subr.mxu0 %v1174
    %1557 = vmatpush1.msra.mxu0 %v1173
    %1558 = vmatprep.subr.mxu0 %v1182
    %1559 = vmatpush1.msra.mxu0 %v1181
    %1560 = vmatprep.subr.mxu0 %v1190
    %1561 = vmatpush1.msra.mxu0 %v1189
    %1562 = vmatprep.subr.mxu0 %v1198
    %1563 = vmatpush1.msra.mxu0 %v1197
    %1564 = vmatprep.subr.mxu0 %v1206
    %1565 = vmatpush1.msra.mxu0 %v1205
    %1566 = vmatprep.subr.mxu0 %v1214
    %1567 = vmatpush1.msra.mxu0 %v1213
    %1568 = vmatprep.subr.mxu0 %v1222
    %1569 = vmatpush1.msra.mxu0 %v1221
    %1570 = vmatprep.subr.mxu0 %v1230
    %1571 = vmatpush1.msra.mxu0 %v1229
    %1572 = vmatprep.mubr.f32.mxu0 %v718
    %1573 = vmatmul.mubr.f32.gmra.mrb[0].mxu0 %v717
    %v1574 = vpop.f32.mrb[0].mxu0
    %v1575 = vadd.f32 %v1498, %v1574
    %v1576 = vpop.f32.mrb[0].mxu0
    %v1577 = vadd.f32 %v1500, %v1576
    %1578 = vmatprep.mubr.f32.mxu0 %v722
    %1579 = vmatmul.mubr.f32.gmra.mrb[0].mxu0 %v721
    %v1580 = vpop.f32.mrb[0].mxu0
    %v1581 = vadd.f32 %v1504, %v1580
    %v1582 = vpop.f32.mrb[0].mxu0
    %v1583 = vadd.f32 %v1506, %v1582
    %1584 = vdwg.mxu0
    %1585 = vmatprep.subr.mxu0 %v728
    %1586 = vmatpush1.msra.mxu0 %v727
    %1587 = vmatprep.subr.mxu0 %v736
    %1588 = vmatpush1.msra.mxu0 %v735
    %1589 = vmatprep.subr.mxu0 %v744
    %1590 = vmatpush1.msra.mxu0 %v743
    %1591 = vmatprep.subr.mxu0 %v752
    %1592 = vmatpush1.msra.mxu0 %v751
    %1593 = vmatprep.subr.mxu0 %v760
    %1594 = vmatpush1.msra.mxu0 %v759
    %1595 = vmatprep.subr.mxu0 %v768
    %1596 = vmatpush1.msra.mxu0 %v767
    %1597 = vmatprep.subr.mxu0 %v776
    %1598 = vmatpush1.msra.mxu0 %v775
    %1599 = vmatprep.subr.mxu0 %v784
    %1600 = vmatpush1.msra.mxu0 %v783
    %1601 = vmatprep.subr.mxu0 %v792
    %1602 = vmatpush1.msra.mxu0 %v791
    %1603 = vmatprep.subr.mxu0 %v800
    %1604 = vmatpush1.msra.mxu0 %v799
    %1605 = vmatprep.subr.mxu0 %v808
    %1606 = vmatpush1.msra.mxu0 %v807
    %1607 = vmatprep.subr.mxu0 %v816
    %1608 = vmatpush1.msra.mxu0 %v815
    %1609 = vmatprep.subr.mxu0 %v824
    %1610 = vmatpush1.msra.mxu0 %v823
    %1611 = vmatprep.subr.mxu0 %v832
    %1612 = vmatpush1.msra.mxu0 %v831
    %1613 = vmatprep.subr.mxu0 %v840
    %1614 = vmatpush1.msra.mxu0 %v839
    %1615 = vmatprep.subr.mxu0 %v848
    %1616 = vmatpush1.msra.mxu0 %v847
    %1617 = vmatprep.subr.mxu0 %v856
    %1618 = vmatpush1.msra.mxu0 %v855
    %1619 = vmatprep.subr.mxu0 %v864
    %1620 = vmatpush1.msra.mxu0 %v863
    %1621 = vmatprep.subr.mxu0 %v872
    %1622 = vmatpush1.msra.mxu0 %v871
    %1623 = vmatprep.subr.mxu0 %v880
    %1624 = vmatpush1.msra.mxu0 %v879
    %1625 = vmatprep.subr.mxu0 %v888
    %1626 = vmatpush1.msra.mxu0 %v887
    %1627 = vmatprep.subr.mxu0 %v896
    %1628 = vmatpush1.msra.mxu0 %v895
    %1629 = vmatprep.subr.mxu0 %v904
    %1630 = vmatpush1.msra.mxu0 %v903
    %1631 = vmatprep.subr.mxu0 %v912
    %1632 = vmatpush1.msra.mxu0 %v911
    %1633 = vmatprep.subr.mxu0 %v920
    %1634 = vmatpush1.msra.mxu0 %v919
    %1635 = vmatprep.subr.mxu0 %v928
    %1636 = vmatpush1.msra.mxu0 %v927
    %1637 = vmatprep.subr.mxu0 %v936
    %1638 = vmatpush1.msra.mxu0 %v935
    %1639 = vmatprep.subr.mxu0 %v944
    %1640 = vmatpush1.msra.mxu0 %v943
    %1641 = vmatprep.subr.mxu0 %v952
    %1642 = vmatpush1.msra.mxu0 %v951
    %1643 = vmatprep.subr.mxu0 %v960
    %1644 = vmatpush1.msra.mxu0 %v959
    %1645 = vmatprep.subr.mxu0 %v968
    %1646 = vmatpush1.msra.mxu0 %v967
    %1647 = vmatprep.subr.mxu0 %v976
    %1648 = vmatpush1.msra.mxu0 %v975
    %1649 = vmatprep.mubr.f32.mxu0 %v716
    %1650 = vmatmul.mubr.f32.gmra.mrb[0].mxu0 %v715
    %v1651 = vpop.f32.mrb[0].mxu0
    %v1652 = vadd.f32 %v1256, %v1651
    %v1653 = vpop.f32.mrb[0].mxu0
    %v1654 = vadd.f32 %v1260, %v1653
    %1655 = vmatprep.mubr.f32.mxu0 %v720
    %1656 = vmatmul.mubr.f32.gmra.mrb[0].mxu0 %v719
    %v1657 = vpop.f32.mrb[0].mxu0
    %v1658 = vadd.f32 %v1256, %v1657
    %v1659 = vpop.f32.mrb[0].mxu0
    %v1660 = vadd.f32 %v1260, %v1659
    %1661 = vdwg.mxu0
    %1662 = vmatprep.subr.mxu0 %v984
    %1663 = vmatpush1.msra.mxu0 %v983
    %1664 = vmatprep.subr.mxu0 %v992
    %1665 = vmatpush1.msra.mxu0 %v991
    %1666 = vmatprep.subr.mxu0 %v1000
    %1667 = vmatpush1.msra.mxu0 %v999
    %1668 = vmatprep.subr.mxu0 %v1008
    %1669 = vmatpush1.msra.mxu0 %v1007
    %1670 = vmatprep.subr.mxu0 %v1016
    %1671 = vmatpush1.msra.mxu0 %v1015
    %1672 = vmatprep.subr.mxu0 %v1024
    %1673 = vmatpush1.msra.mxu0 %v1023
    %1674 = vmatprep.subr.mxu0 %v1032
    %1675 = vmatpush1.msra.mxu0 %v1031
    %1676 = vmatprep.subr.mxu0 %v1040
    %1677 = vmatpush1.msra.mxu0 %v1039
    %1678 = vmatprep.subr.mxu0 %v1048
    %1679 = vmatpush1.msra.mxu0 %v1047
    %1680 = vmatprep.subr.mxu0 %v1056
    %1681 = vmatpush1.msra.mxu0 %v1055
    %1682 = vmatprep.subr.mxu0 %v1064
    %1683 = vmatpush1.msra.mxu0 %v1063
    %1684 = vmatprep.subr.mxu0 %v1072
    %1685 = vmatpush1.msra.mxu0 %v1071
    %1686 = vmatprep.subr.mxu0 %v1080
    %1687 = vmatpush1.msra.mxu0 %v1079
    %1688 = vmatprep.subr.mxu0 %v1088
    %1689 = vmatpush1.msra.mxu0 %v1087
    %1690 = vmatprep.subr.mxu0 %v1096
    %1691 = vmatpush1.msra.mxu0 %v1095
    %1692 = vmatprep.subr.mxu0 %v1104
    %1693 = vmatpush1.msra.mxu0 %v1103
    %1694 = vmatprep.subr.mxu0 %v1112
    %1695 = vmatpush1.msra.mxu0 %v1111
    %1696 = vmatprep.subr.mxu0 %v1120
    %1697 = vmatpush1.msra.mxu0 %v1119
    %1698 = vmatprep.subr.mxu0 %v1128
    %1699 = vmatpush1.msra.mxu0 %v1127
    %1700 = vmatprep.subr.mxu0 %v1136
    %1701 = vmatpush1.msra.mxu0 %v1135
    %1702 = vmatprep.subr.mxu0 %v1144
    %1703 = vmatpush1.msra.mxu0 %v1143
    %1704 = vmatprep.subr.mxu0 %v1152
    %1705 = vmatpush1.msra.mxu0 %v1151
    %1706 = vmatprep.subr.mxu0 %v1160
    %1707 = vmatpush1.msra.mxu0 %v1159
    %1708 = vmatprep.subr.mxu0 %v1168
    %1709 = vmatpush1.msra.mxu0 %v1167
    %1710 = vmatprep.subr.mxu0 %v1176
    %1711 = vmatpush1.msra.mxu0 %v1175
    %1712 = vmatprep.subr.mxu0 %v1184
    %1713 = vmatpush1.msra.mxu0 %v1183
    %1714 = vmatprep.subr.mxu0 %v1192
    %1715 = vmatpush1.msra.mxu0 %v1191
    %1716 = vmatprep.subr.mxu0 %v1200
    %1717 = vmatpush1.msra.mxu0 %v1199
    %1718 = vmatprep.subr.mxu0 %v1208
    %1719 = vmatpush1.msra.mxu0 %v1207
    %1720 = vmatprep.subr.mxu0 %v1216
    %1721 = vmatpush1.msra.mxu0 %v1215
    %1722 = vmatprep.subr.mxu0 %v1224
    %1723 = vmatpush1.msra.mxu0 %v1223
    %1724 = vmatprep.subr.mxu0 %v1232
    %1725 = vmatpush1.msra.mxu0 %v1231
    %1726 = vmatprep.mubr.f32.mxu0 %v718
    %1727 = vmatmul.mubr.f32.gmra.mrb[0].mxu0 %v717
    %v1728 = vpop.f32.mrb[0].mxu0
    %v1729 = vadd.f32 %v1652, %v1728
    %v1730 = vpop.f32.mrb[0].mxu0
    %v1731 = vadd.f32 %v1654, %v1730
    %1732 = vmatprep.mubr.f32.mxu0 %v722
    %1733 = vmatmul.mubr.f32.gmra.mrb[0].mxu0 %v721
    %v1734 = vpop.f32.mrb[0].mxu0
    %v1735 = vadd.f32 %v1658, %v1734
    %v1736 = vpop.f32.mrb[0].mxu0
    %v1737 = vadd.f32 %v1660, %v1736
    %1738 = vdwg.mxu0
    %1739 = vmatprep.subr.mxu0 %v730
    %1740 = vmatpush1.msra.mxu0 %v729
    %1741 = vmatprep.subr.mxu0 %v738
    %1742 = vmatpush1.msra.mxu0 %v737
    %1743 = vmatprep.subr.mxu0 %v746
    %1744 = vmatpush1.msra.mxu0 %v745
    %1745 = vmatprep.subr.mxu0 %v754
    %1746 = vmatpush1.msra.mxu0 %v753
    %1747 = vmatprep.subr.mxu0 %v762
    %1748 = vmatpush1.msra.mxu0 %v761
    %1749 = vmatprep.subr.mxu0 %v770
    %1750 = vmatpush1.msra.mxu0 %v769
    %1751 = vmatprep.subr.mxu0 %v778
    %1752 = vmatpush1.msra.mxu0 %v777
    %1753 = vmatprep.subr.mxu0 %v786
    %1754 = vmatpush1.msra.mxu0 %v785
    %1755 = vmatprep.subr.mxu0 %v794
    %1756 = vmatpush1.msra.mxu0 %v793
    %1757 = vmatprep.subr.mxu0 %v802
    %1758 = vmatpush1.msra.mxu0 %v801
    %1759 = vmatprep.subr.mxu0 %v810
    %1760 = vmatpush1.msra.mxu0 %v809
    %1761 = vmatprep.subr.mxu0 %v818
    %1762 = vmatpush1.msra.mxu0 %v817
    %1763 = vmatprep.subr.mxu0 %v826
    %1764 = vmatpush1.msra.mxu0 %v825
    %1765 = vmatprep.subr.mxu0 %v834
    %1766 = vmatpush1.msra.mxu0 %v833
    %1767 = vmatprep.subr.mxu0 %v842
    %1768 = vmatpush1.msra.mxu0 %v841
    %1769 = vmatprep.subr.mxu0 %v850
    %1770 = vmatpush1.msra.mxu0 %v849
    %1771 = vmatprep.subr.mxu0 %v858
    %1772 = vmatpush1.msra.mxu0 %v857
    %1773 = vmatprep.subr.mxu0 %v866
    %1774 = vmatpush1.msra.mxu0 %v865
    %1775 = vmatprep.subr.mxu0 %v874
    %1776 = vmatpush1.msra.mxu0 %v873
    %1777 = vmatprep.subr.mxu0 %v882
    %1778 = vmatpush1.msra.mxu0 %v881
    %1779 = vmatprep.subr.mxu0 %v890
    %1780 = vmatpush1.msra.mxu0 %v889
    %1781 = vmatprep.subr.mxu0 %v898
    %1782 = vmatpush1.msra.mxu0 %v897
    %1783 = vmatprep.subr.mxu0 %v906
    %1784 = vmatpush1.msra.mxu0 %v905
    %1785 = vmatprep.subr.mxu0 %v914
    %1786 = vmatpush1.msra.mxu0 %v913
    %1787 = vmatprep.subr.mxu0 %v922
    %1788 = vmatpush1.msra.mxu0 %v921
    %1789 = vmatprep.subr.mxu0 %v930
    %1790 = vmatpush1.msra.mxu0 %v929
    %1791 = vmatprep.subr.mxu0 %v938
    %1792 = vmatpush1.msra.mxu0 %v937
    %1793 = vmatprep.subr.mxu0 %v946
    %1794 = vmatpush1.msra.mxu0 %v945
    %1795 = vmatprep.subr.mxu0 %v954
    %1796 = vmatpush1.msra.mxu0 %v953
    %1797 = vmatprep.subr.mxu0 %v962
    %1798 = vmatpush1.msra.mxu0 %v961
    %1799 = vmatprep.subr.mxu0 %v970
    %1800 = vmatpush1.msra.mxu0 %v969
    %1801 = vmatprep.subr.mxu0 %v978
    %1802 = vmatpush1.msra.mxu0 %v977
    %1803 = vmatprep.mubr.f32.mxu0 %v716
    %1804 = vmatmul.mubr.f32.gmra.mrb[0].mxu0 %v715
    %v1805 = vpop.f32.mrb[0].mxu0
    %v1806 = vadd.f32 %v1264, %v1805
    %v1807 = vpop.f32.mrb[0].mxu0
    %v1808 = vadd.f32 %v1268, %v1807
    %1809 = vmatprep.mubr.f32.mxu0 %v720
    %1810 = vmatmul.mubr.f32.gmra.mrb[0].mxu0 %v719
    %v1811 = vpop.f32.mrb[0].mxu0
    %v1812 = vadd.f32 %v1264, %v1811
    %v1813 = vpop.f32.mrb[0].mxu0
    %v1814 = vadd.f32 %v1268, %v1813
    %1815 = vdwg.mxu0
    %1816 = vmatprep.subr.mxu0 %v986
    %1817 = vmatpush1.msra.mxu0 %v985
    %1818 = vmatprep.subr.mxu0 %v994
    %1819 = vmatpush1.msra.mxu0 %v993
    %1820 = vmatprep.subr.mxu0 %v1002
    %1821 = vmatpush1.msra.mxu0 %v1001
    %1822 = vmatprep.subr.mxu0 %v1010
    %1823 = vmatpush1.msra.mxu0 %v1009
    %1824 = vmatprep.subr.mxu0 %v1018
    %1825 = vmatpush1.msra.mxu0 %v1017
    %1826 = vmatprep.subr.mxu0 %v1026
    %1827 = vmatpush1.msra.mxu0 %v1025
    %1828 = vmatprep.subr.mxu0 %v1034
    %1829 = vmatpush1.msra.mxu0 %v1033
    %1830 = vmatprep.subr.mxu0 %v1042
    %1831 = vmatpush1.msra.mxu0 %v1041
    %1832 = vmatprep.subr.mxu0 %v1050
    %1833 = vmatpush1.msra.mxu0 %v1049
    %1834 = vmatprep.subr.mxu0 %v1058
    %1835 = vmatpush1.msra.mxu0 %v1057
    %1836 = vmatprep.subr.mxu0 %v1066
    %1837 = vmatpush1.msra.mxu0 %v1065
    %1838 = vmatprep.subr.mxu0 %v1074
    %1839 = vmatpush1.msra.mxu0 %v1073
    %1840 = vmatprep.subr.mxu0 %v1082
    %1841 = vmatpush1.msra.mxu0 %v1081
    %1842 = vmatprep.subr.mxu0 %v1090
    %1843 = vmatpush1.msra.mxu0 %v1089
    %1844 = vmatprep.subr.mxu0 %v1098
    %1845 = vmatpush1.msra.mxu0 %v1097
    %1846 = vmatprep.subr.mxu0 %v1106
    %1847 = vmatpush1.msra.mxu0 %v1105
    %1848 = vmatprep.subr.mxu0 %v1114
    %1849 = vmatpush1.msra.mxu0 %v1113
    %1850 = vmatprep.subr.mxu0 %v1122
    %1851 = vmatpush1.msra.mxu0 %v1121
    %1852 = vmatprep.subr.mxu0 %v1130
    %1853 = vmatpush1.msra.mxu0 %v1129
    %1854 = vmatprep.subr.mxu0 %v1138
    %1855 = vmatpush1.msra.mxu0 %v1137
    %1856 = vmatprep.subr.mxu0 %v1146
    %1857 = vmatpush1.msra.mxu0 %v1145
    %1858 = vmatprep.subr.mxu0 %v1154
    %1859 = vmatpush1.msra.mxu0 %v1153
    %1860 = vmatprep.subr.mxu0 %v1162
    %1861 = vmatpush1.msra.mxu0 %v1161
    %1862 = vmatprep.subr.mxu0 %v1170
    %1863 = vmatpush1.msra.mxu0 %v1169
    %1864 = vmatprep.subr.mxu0 %v1178
    %1865 = vmatpush1.msra.mxu0 %v1177
    %1866 = vmatprep.subr.mxu0 %v1186
    %1867 = vmatpush1.msra.mxu0 %v1185
    %1868 = vmatprep.subr.mxu0 %v1194
    %1869 = vmatpush1.msra.mxu0 %v1193
    %1870 = vmatprep.subr.mxu0 %v1202
    %1871 = vmatpush1.msra.mxu0 %v1201
    %1872 = vmatprep.subr.mxu0 %v1210
    %1873 = vmatpush1.msra.mxu0 %v1209
    %1874 = vmatprep.subr.mxu0 %v1218
    %1875 = vmatpush1.msra.mxu0 %v1217
    %1876 = vmatprep.subr.mxu0 %v1226
    %1877 = vmatpush1.msra.mxu0 %v1225
    %1878 = vmatprep.subr.mxu0 %v1234
    %1879 = vmatpush1.msra.mxu0 %v1233
    %1880 = vmatprep.mubr.f32.mxu0 %v718
    %1881 = vmatmul.mubr.f32.gmra.mrb[0].mxu0 %v717
    %v1882 = vpop.f32.mrb[0].mxu0
    %v1883 = vadd.f32 %v1806, %v1882
    %v1884 = vpop.f32.mrb[0].mxu0
    %v1885 = vadd.f32 %v1808, %v1884
    %1886 = vmatprep.mubr.f32.mxu0 %v722
    %1887 = vmatmul.mubr.f32.gmra.mrb[0].mxu0 %v721
    %v1888 = vpop.f32.mrb[0].mxu0
    %v1889 = vadd.f32 %v1812, %v1888
    %v1890 = vpop.f32.mrb[0].mxu0
    %v1891 = vadd.f32 %v1814, %v1890
    %1892 = vdwg.mxu0
    %v1893 = vmax.f32 %v1421, 0.0
    %v1894 = vmax.f32 %v1423, 0.0
    %v1895 = vmax.f32 %v1575, 0.0
    %v1896 = vmax.f32 %v1577, 0.0
    %v1897 = vmax.f32 %v1729, 0.0
    %v1898 = vmax.f32 %v1731, 0.0
    %v1899 = vmax.f32 %v1883, 0.0
    %v1900 = vmax.f32 %v1885, 0.0
    %v1901 = vmax.f32 %v1427, 0.0
    %v1902 = vmax.f32 %v1429, 0.0
    %v1903 = vmax.f32 %v1581, 0.0
    %v1904 = vmax.f32 %v1583, 0.0
    %v1905 = vmax.f32 %v1735, 0.0
    %v1906 = vmax.f32 %v1737, 0.0
    %v1907 = vmax.f32 %v1889, 0.0
    %v1908 = vmax.f32 %v1891, 0.0
    %v1909 = vld [vmem:[#allocation14] sm:$0xff]
    %v1910 = vld [vmem:[#allocation14 + $0x8] sm:$0xff]
    %v1911 = vld [vmem:[#allocation14 + $0x10] sm:$0xff]
    %v1912 = vld [vmem:[#allocation14 + $0x18] sm:$0xff]
    %v1913 = vld [vmem:[#allocation14 + $0x20] sm:$0xff]
    %v1914 = vld [vmem:[#allocation14 + $0x28] sm:$0xff]
    %v1915 = vld [vmem:[#allocation14 + $0x30] sm:$0xff]
    %v1916 = vld [vmem:[#allocation14 + $0x38] sm:$0xff]
    %v1917 = vld [vmem:[#allocation14 + $0x40] sm:$0xff]
    %v1918 = vld [vmem:[#allocation14 + $0x48] sm:$0xff]
    %v1919 = vld [vmem:[#allocation14 + $0x50] sm:$0xff]
    %v1920 = vld [vmem:[#allocation14 + $0x58] sm:$0xff]
    %v1921 = vld [vmem:[#allocation14 + $0x60] sm:$0xff]
    %v1922 = vld [vmem:[#allocation14 + $0x68] sm:$0xff]
    %v1923 = vld [vmem:[#allocation14 + $0x70] sm:$0xff]
    %v1924 = vld [vmem:[#allocation14 + $0x78] sm:$0xff]
    %v1925 = vld [vmem:[#allocation14 + $0x80] sm:$0xff]
    %v1926 = vld [vmem:[#allocation14 + $0x88] sm:$0xff]
    %v1927 = vld [vmem:[#allocation14 + $0x90] sm:$0xff]
    %v1928 = vld [vmem:[#allocation14 + $0x98] sm:$0xff]
    %v1929 = vld [vmem:[#allocation14 + $0xa0] sm:$0xff]
    %v1930 = vld [vmem:[#allocation14 + $0xa8] sm:$0xff]
    %v1931 = vld [vmem:[#allocation14 + $0xb0] sm:$0xff]
    %v1932 = vld [vmem:[#allocation14 + $0xb8] sm:$0xff]
    %v1933 = vld [vmem:[#allocation14 + $0xc0] sm:$0xff]
    %v1934 = vld [vmem:[#allocation14 + $0xc8] sm:$0xff]
    %v1935 = vld [vmem:[#allocation14 + $0xd0] sm:$0xff]
    %v1936 = vld [vmem:[#allocation14 + $0xd8] sm:$0xff]
    %v1937 = vld [vmem:[#allocation14 + $0xe0] sm:$0xff]
    %v1938 = vld [vmem:[#allocation14 + $0xe8] sm:$0xff]
    %v1939 = vld [vmem:[#allocation14 + $0xf0] sm:$0xff]
    %v1940 = vld [vmem:[#allocation14 + $0xf8] sm:$0xff]
    %v1941 = vld [vmem:[#allocation14 + $0x100] sm:$0xff]
    %v1942 = vld [vmem:[#allocation14 + $0x108] sm:$0xff]
    %v1943 = vld [vmem:[#allocation14 + $0x110] sm:$0xff]
    %v1944 = vld [vmem:[#allocation14 + $0x118] sm:$0xff]
    %v1945 = vld [vmem:[#allocation14 + $0x120] sm:$0xff]
    %v1946 = vld [vmem:[#allocation14 + $0x128] sm:$0xff]
    %v1947 = vld [vmem:[#allocation14 + $0x130] sm:$0xff]
    %v1948 = vld [vmem:[#allocation14 + $0x138] sm:$0xff]
    %v1949 = vld [vmem:[#allocation14 + $0x140] sm:$0xff]
    %v1950 = vld [vmem:[#allocation14 + $0x148] sm:$0xff]
    %v1951 = vld [vmem:[#allocation14 + $0x150] sm:$0xff]
    %v1952 = vld [vmem:[#allocation14 + $0x158] sm:$0xff]
    %v1953 = vld [vmem:[#allocation14 + $0x160] sm:$0xff]
    %v1954 = vld [vmem:[#allocation14 + $0x168] sm:$0xff]
    %v1955 = vld [vmem:[#allocation14 + $0x170] sm:$0xff]
    %v1956 = vld [vmem:[#allocation14 + $0x178] sm:$0xff]
    %v1957 = vld [vmem:[#allocation14 + $0x180] sm:$0xff]
    %v1958 = vld [vmem:[#allocation14 + $0x188] sm:$0xff]
    %v1959 = vld [vmem:[#allocation14 + $0x190] sm:$0xff]
    %v1960 = vld [vmem:[#allocation14 + $0x198] sm:$0xff]
    %v1961 = vld [vmem:[#allocation14 + $0x1a0] sm:$0xff]
    %v1962 = vld [vmem:[#allocation14 + $0x1a8] sm:$0xff]
    %v1963 = vld [vmem:[#allocation14 + $0x1b0] sm:$0xff]
    %v1964 = vld [vmem:[#allocation14 + $0x1b8] sm:$0xff]
    %v1965 = vld [vmem:[#allocation14 + $0x1c0] sm:$0xff]
    %v1966 = vld [vmem:[#allocation14 + $0x1c8] sm:$0xff]
    %v1967 = vld [vmem:[#allocation14 + $0x1d0] sm:$0xff]
    %v1968 = vld [vmem:[#allocation14 + $0x1d8] sm:$0xff]
    %v1969 = vld [vmem:[#allocation14 + $0x1e0] sm:$0xff]
    %v1970 = vld [vmem:[#allocation14 + $0x1e8] sm:$0xff]
    %v1971 = vld [vmem:[#allocation14 + $0x1f0] sm:$0xff]
    %v1972 = vld [vmem:[#allocation14 + $0x1f8] sm:$0xff]
    %v1973 = vld [vmem:[#allocation14 + $0x200] sm:$0xff]
    %v1974 = vld [vmem:[#allocation14 + $0x208] sm:$0xff]
    %v1975 = vld [vmem:[#allocation14 + $0x210] sm:$0xff]
    %v1976 = vld [vmem:[#allocation14 + $0x218] sm:$0xff]
    %v1977 = vld [vmem:[#allocation14 + $0x220] sm:$0xff]
    %v1978 = vld [vmem:[#allocation14 + $0x228] sm:$0xff]
    %v1979 = vld [vmem:[#allocation14 + $0x230] sm:$0xff]
    %v1980 = vld [vmem:[#allocation14 + $0x238] sm:$0xff]
    %v1981 = vld [vmem:[#allocation14 + $0x240] sm:$0xff]
    %v1982 = vld [vmem:[#allocation14 + $0x248] sm:$0xff]
    %v1983 = vld [vmem:[#allocation14 + $0x250] sm:$0xff]
    %v1984 = vld [vmem:[#allocation14 + $0x258] sm:$0xff]
    %v1985 = vld [vmem:[#allocation14 + $0x260] sm:$0xff]
    %v1986 = vld [vmem:[#allocation14 + $0x268] sm:$0xff]
    %v1987 = vld [vmem:[#allocation14 + $0x270] sm:$0xff]
    %v1988 = vld [vmem:[#allocation14 + $0x278] sm:$0xff]
    %v1989 = vld [vmem:[#allocation14 + $0x280] sm:$0xff]
    %v1990 = vld [vmem:[#allocation14 + $0x288] sm:$0xff]
    %v1991 = vld [vmem:[#allocation14 + $0x290] sm:$0xff]
    %v1992 = vld [vmem:[#allocation14 + $0x298] sm:$0xff]
    %v1993 = vld [vmem:[#allocation14 + $0x2a0] sm:$0xff]
    %v1994 = vld [vmem:[#allocation14 + $0x2a8] sm:$0xff]
    %v1995 = vld [vmem:[#allocation14 + $0x2b0] sm:$0xff]
    %v1996 = vld [vmem:[#allocation14 + $0x2b8] sm:$0xff]
    %v1997 = vld [vmem:[#allocation14 + $0x2c0] sm:$0xff]
    %v1998 = vld [vmem:[#allocation14 + $0x2c8] sm:$0xff]
    %v1999 = vld [vmem:[#allocation14 + $0x2d0] sm:$0xff]
    %v2000 = vld [vmem:[#allocation14 + $0x2d8] sm:$0xff]
    %v2001 = vld [vmem:[#allocation14 + $0x2e0] sm:$0xff]
    %v2002 = vld [vmem:[#allocation14 + $0x2e8] sm:$0xff]
    %v2003 = vld [vmem:[#allocation14 + $0x2f0] sm:$0xff]
    %v2004 = vld [vmem:[#allocation14 + $0x2f8] sm:$0xff]
    %v2005 = vld [vmem:[#allocation14 + $0x300] sm:$0xff]
    %v2006 = vld [vmem:[#allocation14 + $0x308] sm:$0xff]
    %v2007 = vld [vmem:[#allocation14 + $0x310] sm:$0xff]
    %v2008 = vld [vmem:[#allocation14 + $0x318] sm:$0xff]
    %v2009 = vld [vmem:[#allocation14 + $0x320] sm:$0xff]
    %v2010 = vld [vmem:[#allocation14 + $0x328] sm:$0xff]
    %v2011 = vld [vmem:[#allocation14 + $0x330] sm:$0xff]
    %v2012 = vld [vmem:[#allocation14 + $0x338] sm:$0xff]
    %v2013 = vld [vmem:[#allocation14 + $0x340] sm:$0xff]
    %v2014 = vld [vmem:[#allocation14 + $0x348] sm:$0xff]
    %v2015 = vld [vmem:[#allocation14 + $0x350] sm:$0xff]
    %v2016 = vld [vmem:[#allocation14 + $0x358] sm:$0xff]
    %v2017 = vld [vmem:[#allocation14 + $0x360] sm:$0xff]
    %v2018 = vld [vmem:[#allocation14 + $0x368] sm:$0xff]
    %v2019 = vld [vmem:[#allocation14 + $0x370] sm:$0xff]
    %v2020 = vld [vmem:[#allocation14 + $0x378] sm:$0xff]
    %v2021 = vld [vmem:[#allocation14 + $0x380] sm:$0xff]
    %v2022 = vld [vmem:[#allocation14 + $0x388] sm:$0xff]
    %v2023 = vld [vmem:[#allocation14 + $0x390] sm:$0xff]
    %v2024 = vld [vmem:[#allocation14 + $0x398] sm:$0xff]
    %v2025 = vld [vmem:[#allocation14 + $0x3a0] sm:$0xff]
    %v2026 = vld [vmem:[#allocation14 + $0x3a8] sm:$0xff]
    %v2027 = vld [vmem:[#allocation14 + $0x3b0] sm:$0xff]
    %v2028 = vld [vmem:[#allocation14 + $0x3b8] sm:$0xff]
    %v2029 = vld [vmem:[#allocation14 + $0x3c0] sm:$0xff]
    %v2030 = vld [vmem:[#allocation14 + $0x3c8] sm:$0xff]
    %v2031 = vld [vmem:[#allocation14 + $0x3d0] sm:$0xff]
    %v2032 = vld [vmem:[#allocation14 + $0x3d8] sm:$0xff]
    %v2033 = vld [vmem:[#allocation14 + $0x3e0] sm:$0xff]
    %v2034 = vld [vmem:[#allocation14 + $0x3e8] sm:$0xff]
    %v2035 = vld [vmem:[#allocation14 + $0x3f0] sm:$0xff]
    %v2036 = vld [vmem:[#allocation14 + $0x3f8] sm:$0xff]
    %v2037 = vld [vmem:[#allocation14 + $0x400] sm:$0xff]
    %v2038 = vld [vmem:[#allocation14 + $0x408] sm:$0xff]
    %v2039 = vld [vmem:[#allocation14 + $0x410] sm:$0xff]
    %v2040 = vld [vmem:[#allocation14 + $0x418] sm:$0xff]
    %v2041 = vld [vmem:[#allocation14 + $0x420] sm:$0xff]
    %v2042 = vld [vmem:[#allocation14 + $0x428] sm:$0xff]
    %v2043 = vld [vmem:[#allocation14 + $0x430] sm:$0xff]
    %v2044 = vld [vmem:[#allocation14 + $0x438] sm:$0xff]
    %v2045 = vld [vmem:[#allocation14 + $0x440] sm:$0xff]
    %v2046 = vld [vmem:[#allocation14 + $0x448] sm:$0xff]
    %v2047 = vld [vmem:[#allocation14 + $0x450] sm:$0xff]
    %v2048 = vld [vmem:[#allocation14 + $0x458] sm:$0xff]
    %v2049 = vld [vmem:[#allocation14 + $0x460] sm:$0xff]
    %v2050 = vld [vmem:[#allocation14 + $0x468] sm:$0xff]
    %v2051 = vld [vmem:[#allocation14 + $0x470] sm:$0xff]
    %v2052 = vld [vmem:[#allocation14 + $0x478] sm:$0xff]
    %v2053 = vld [vmem:[#allocation14 + $0x480] sm:$0xff]
    %v2054 = vld [vmem:[#allocation14 + $0x488] sm:$0xff]
    %v2055 = vld [vmem:[#allocation14 + $0x490] sm:$0xff]
    %v2056 = vld [vmem:[#allocation14 + $0x498] sm:$0xff]
    %v2057 = vld [vmem:[#allocation14 + $0x4a0] sm:$0xff]
    %v2058 = vld [vmem:[#allocation14 + $0x4a8] sm:$0xff]
    %v2059 = vld [vmem:[#allocation14 + $0x4b0] sm:$0xff]
    %v2060 = vld [vmem:[#allocation14 + $0x4b8] sm:$0xff]
    %v2061 = vld [vmem:[#allocation14 + $0x4c0] sm:$0xff]
    %v2062 = vld [vmem:[#allocation14 + $0x4c8] sm:$0xff]
    %v2063 = vld [vmem:[#allocation14 + $0x4d0] sm:$0xff]
    %v2064 = vld [vmem:[#allocation14 + $0x4d8] sm:$0xff]
    %v2065 = vld [vmem:[#allocation14 + $0x4e0] sm:$0xff]
    %v2066 = vld [vmem:[#allocation14 + $0x4e8] sm:$0xff]
    %v2067 = vld [vmem:[#allocation14 + $0x4f0] sm:$0xff]
    %v2068 = vld [vmem:[#allocation14 + $0x4f8] sm:$0xff]
    %v2069 = vld [vmem:[#allocation14 + $0x500] sm:$0xff]
    %v2070 = vld [vmem:[#allocation14 + $0x508] sm:$0xff]
    %v2071 = vld [vmem:[#allocation14 + $0x510] sm:$0xff]
    %v2072 = vld [vmem:[#allocation14 + $0x518] sm:$0xff]
    %v2073 = vld [vmem:[#allocation14 + $0x520] sm:$0xff]
    %v2074 = vld [vmem:[#allocation14 + $0x528] sm:$0xff]
    %v2075 = vld [vmem:[#allocation14 + $0x530] sm:$0xff]
    %v2076 = vld [vmem:[#allocation14 + $0x538] sm:$0xff]
    %v2077 = vld [vmem:[#allocation14 + $0x540] sm:$0xff]
    %v2078 = vld [vmem:[#allocation14 + $0x548] sm:$0xff]
    %v2079 = vld [vmem:[#allocation14 + $0x550] sm:$0xff]
    %v2080 = vld [vmem:[#allocation14 + $0x558] sm:$0xff]
    %v2081 = vld [vmem:[#allocation14 + $0x560] sm:$0xff]
    %v2082 = vld [vmem:[#allocation14 + $0x568] sm:$0xff]
    %v2083 = vld [vmem:[#allocation14 + $0x570] sm:$0xff]
    %v2084 = vld [vmem:[#allocation14 + $0x578] sm:$0xff]
    %v2085 = vld [vmem:[#allocation14 + $0x580] sm:$0xff]
    %v2086 = vld [vmem:[#allocation14 + $0x588] sm:$0xff]
    %v2087 = vld [vmem:[#allocation14 + $0x590] sm:$0xff]
    %v2088 = vld [vmem:[#allocation14 + $0x598] sm:$0xff]
    %v2089 = vld [vmem:[#allocation14 + $0x5a0] sm:$0xff]
    %v2090 = vld [vmem:[#allocation14 + $0x5a8] sm:$0xff]
    %v2091 = vld [vmem:[#allocation14 + $0x5b0] sm:$0xff]
    %v2092 = vld [vmem:[#allocation14 + $0x5b8] sm:$0xff]
    %v2093 = vld [vmem:[#allocation14 + $0x5c0] sm:$0xff]
    %v2094 = vld [vmem:[#allocation14 + $0x5c8] sm:$0xff]
    %v2095 = vld [vmem:[#allocation14 + $0x5d0] sm:$0xff]
    %v2096 = vld [vmem:[#allocation14 + $0x5d8] sm:$0xff]
    %v2097 = vld [vmem:[#allocation14 + $0x5e0] sm:$0xff]
    %v2098 = vld [vmem:[#allocation14 + $0x5e8] sm:$0xff]
    %v2099 = vld [vmem:[#allocation14 + $0x5f0] sm:$0xff]
    %v2100 = vld [vmem:[#allocation14 + $0x5f8] sm:$0xff]
    %v2101 = vld [vmem:[#allocation14 + $0x600] sm:$0xff]
    %v2102 = vld [vmem:[#allocation14 + $0x608] sm:$0xff]
    %v2103 = vld [vmem:[#allocation14 + $0x610] sm:$0xff]
    %v2104 = vld [vmem:[#allocation14 + $0x618] sm:$0xff]
    %v2105 = vld [vmem:[#allocation14 + $0x620] sm:$0xff]
    %v2106 = vld [vmem:[#allocation14 + $0x628] sm:$0xff]
    %v2107 = vld [vmem:[#allocation14 + $0x630] sm:$0xff]
    %v2108 = vld [vmem:[#allocation14 + $0x638] sm:$0xff]
    %v2109 = vld [vmem:[#allocation14 + $0x640] sm:$0xff]
    %v2110 = vld [vmem:[#allocation14 + $0x648] sm:$0xff]
    %v2111 = vld [vmem:[#allocation14 + $0x650] sm:$0xff]
    %v2112 = vld [vmem:[#allocation14 + $0x658] sm:$0xff]
    %v2113 = vld [vmem:[#allocation14 + $0x660] sm:$0xff]
    %v2114 = vld [vmem:[#allocation14 + $0x668] sm:$0xff]
    %v2115 = vld [vmem:[#allocation14 + $0x670] sm:$0xff]
    %v2116 = vld [vmem:[#allocation14 + $0x678] sm:$0xff]
    %v2117 = vld [vmem:[#allocation14 + $0x680] sm:$0xff]
    %v2118 = vld [vmem:[#allocation14 + $0x688] sm:$0xff]
    %v2119 = vld [vmem:[#allocation14 + $0x690] sm:$0xff]
    %v2120 = vld [vmem:[#allocation14 + $0x698] sm:$0xff]
    %v2121 = vld [vmem:[#allocation14 + $0x6a0] sm:$0xff]
    %v2122 = vld [vmem:[#allocation14 + $0x6a8] sm:$0xff]
    %v2123 = vld [vmem:[#allocation14 + $0x6b0] sm:$0xff]
    %v2124 = vld [vmem:[#allocation14 + $0x6b8] sm:$0xff]
    %v2125 = vld [vmem:[#allocation14 + $0x6c0] sm:$0xff]
    %v2126 = vld [vmem:[#allocation14 + $0x6c8] sm:$0xff]
    %v2127 = vld [vmem:[#allocation14 + $0x6d0] sm:$0xff]
    %v2128 = vld [vmem:[#allocation14 + $0x6d8] sm:$0xff]
    %v2129 = vld [vmem:[#allocation14 + $0x6e0] sm:$0xff]
    %v2130 = vld [vmem:[#allocation14 + $0x6e8] sm:$0xff]
    %v2131 = vld [vmem:[#allocation14 + $0x6f0] sm:$0xff]
    %v2132 = vld [vmem:[#allocation14 + $0x6f8] sm:$0xff]
    %v2133 = vld [vmem:[#allocation14 + $0x700] sm:$0xff]
    %v2134 = vld [vmem:[#allocation14 + $0x708] sm:$0xff]
    %v2135 = vld [vmem:[#allocation14 + $0x710] sm:$0xff]
    %v2136 = vld [vmem:[#allocation14 + $0x718] sm:$0xff]
    %v2137 = vld [vmem:[#allocation14 + $0x720] sm:$0xff]
    %v2138 = vld [vmem:[#allocation14 + $0x728] sm:$0xff]
    %v2139 = vld [vmem:[#allocation14 + $0x730] sm:$0xff]
    %v2140 = vld [vmem:[#allocation14 + $0x738] sm:$0xff]
    %v2141 = vld [vmem:[#allocation14 + $0x740] sm:$0xff]
    %v2142 = vld [vmem:[#allocation14 + $0x748] sm:$0xff]
    %v2143 = vld [vmem:[#allocation14 + $0x750] sm:$0xff]
    %v2144 = vld [vmem:[#allocation14 + $0x758] sm:$0xff]
    %v2145 = vld [vmem:[#allocation14 + $0x760] sm:$0xff]
    %v2146 = vld [vmem:[#allocation14 + $0x768] sm:$0xff]
    %v2147 = vld [vmem:[#allocation14 + $0x770] sm:$0xff]
    %v2148 = vld [vmem:[#allocation14 + $0x778] sm:$0xff]
    %v2149 = vld [vmem:[#allocation14 + $0x780] sm:$0xff]
    %v2150 = vld [vmem:[#allocation14 + $0x788] sm:$0xff]
    %v2151 = vld [vmem:[#allocation14 + $0x790] sm:$0xff]
    %v2152 = vld [vmem:[#allocation14 + $0x798] sm:$0xff]
    %v2153 = vld [vmem:[#allocation14 + $0x7a0] sm:$0xff]
    %v2154 = vld [vmem:[#allocation14 + $0x7a8] sm:$0xff]
    %v2155 = vld [vmem:[#allocation14 + $0x7b0] sm:$0xff]
    %v2156 = vld [vmem:[#allocation14 + $0x7b8] sm:$0xff]
    %v2157 = vld [vmem:[#allocation14 + $0x7c0] sm:$0xff]
    %v2158 = vld [vmem:[#allocation14 + $0x7c8] sm:$0xff]
    %v2159 = vld [vmem:[#allocation14 + $0x7d0] sm:$0xff]
    %v2160 = vld [vmem:[#allocation14 + $0x7d8] sm:$0xff]
    %v2161 = vld [vmem:[#allocation14 + $0x7e0] sm:$0xff]
    %v2162 = vld [vmem:[#allocation14 + $0x7e8] sm:$0xff]
    %v2163 = vld [vmem:[#allocation14 + $0x7f0] sm:$0xff]
    %v2164 = vld [vmem:[#allocation14 + $0x7f8] sm:$0xff]
    %v2165 = vld [vmem:[#allocation14 + $0x800] sm:$0xff]
    %v2166 = vld [vmem:[#allocation14 + $0x808] sm:$0xff]
    %v2167 = vld [vmem:[#allocation14 + $0x810] sm:$0xff]
    %v2168 = vld [vmem:[#allocation14 + $0x818] sm:$0xff]
    %v2169 = vld [vmem:[#allocation14 + $0x820] sm:$0xff]
    %v2170 = vld [vmem:[#allocation14 + $0x828] sm:$0xff]
    %v2171 = vld [vmem:[#allocation14 + $0x830] sm:$0xff]
    %v2172 = vld [vmem:[#allocation14 + $0x838] sm:$0xff]
    %v2173 = vld [vmem:[#allocation14 + $0x840] sm:$0xff]
    %v2174 = vld [vmem:[#allocation14 + $0x848] sm:$0xff]
    %v2175 = vld [vmem:[#allocation14 + $0x850] sm:$0xff]
    %v2176 = vld [vmem:[#allocation14 + $0x858] sm:$0xff]
    %v2177 = vld [vmem:[#allocation14 + $0x860] sm:$0xff]
    %v2178 = vld [vmem:[#allocation14 + $0x868] sm:$0xff]
    %v2179 = vld [vmem:[#allocation14 + $0x870] sm:$0xff]
    %v2180 = vld [vmem:[#allocation14 + $0x878] sm:$0xff]
    %v2181 = vld [vmem:[#allocation14 + $0x880] sm:$0xff]
    %v2182 = vld [vmem:[#allocation14 + $0x888] sm:$0xff]
    %v2183 = vld [vmem:[#allocation14 + $0x890] sm:$0xff]
    %v2184 = vld [vmem:[#allocation14 + $0x898] sm:$0xff]
    %v2185 = vld [vmem:[#allocation14 + $0x8a0] sm:$0xff]
    %v2186 = vld [vmem:[#allocation14 + $0x8a8] sm:$0xff]
    %v2187 = vld [vmem:[#allocation14 + $0x8b0] sm:$0xff]
    %v2188 = vld [vmem:[#allocation14 + $0x8b8] sm:$0xff]
    %v2189 = vld [vmem:[#allocation14 + $0x8c0] sm:$0xff]
    %v2190 = vld [vmem:[#allocation14 + $0x8c8] sm:$0xff]
    %v2191 = vld [vmem:[#allocation14 + $0x8d0] sm:$0xff]
    %v2192 = vld [vmem:[#allocation14 + $0x8d8] sm:$0xff]
    %v2193 = vld [vmem:[#allocation14 + $0x8e0] sm:$0xff]
    %v2194 = vld [vmem:[#allocation14 + $0x8e8] sm:$0xff]
    %v2195 = vld [vmem:[#allocation14 + $0x8f0] sm:$0xff]
    %v2196 = vld [vmem:[#allocation14 + $0x8f8] sm:$0xff]
    %v2197 = vld [vmem:[#allocation14 + $0x900] sm:$0xff]
    %v2198 = vld [vmem:[#allocation14 + $0x908] sm:$0xff]
    %v2199 = vld [vmem:[#allocation14 + $0x910] sm:$0xff]
    %v2200 = vld [vmem:[#allocation14 + $0x918] sm:$0xff]
    %v2201 = vld [vmem:[#allocation14 + $0x920] sm:$0xff]
    %v2202 = vld [vmem:[#allocation14 + $0x928] sm:$0xff]
    %v2203 = vld [vmem:[#allocation14 + $0x930] sm:$0xff]
    %v2204 = vld [vmem:[#allocation14 + $0x938] sm:$0xff]
    %v2205 = vld [vmem:[#allocation14 + $0x940] sm:$0xff]
    %v2206 = vld [vmem:[#allocation14 + $0x948] sm:$0xff]
    %v2207 = vld [vmem:[#allocation14 + $0x950] sm:$0xff]
    %v2208 = vld [vmem:[#allocation14 + $0x958] sm:$0xff]
    %v2209 = vld [vmem:[#allocation14 + $0x960] sm:$0xff]
    %v2210 = vld [vmem:[#allocation14 + $0x968] sm:$0xff]
    %v2211 = vld [vmem:[#allocation14 + $0x970] sm:$0xff]
    %v2212 = vld [vmem:[#allocation14 + $0x978] sm:$0xff]
    %v2213 = vld [vmem:[#allocation14 + $0x980] sm:$0xff]
    %v2214 = vld [vmem:[#allocation14 + $0x988] sm:$0xff]
    %v2215 = vld [vmem:[#allocation14 + $0x990] sm:$0xff]
    %v2216 = vld [vmem:[#allocation14 + $0x998] sm:$0xff]
    %v2217 = vld [vmem:[#allocation14 + $0x9a0] sm:$0xff]
    %v2218 = vld [vmem:[#allocation14 + $0x9a8] sm:$0xff]
    %v2219 = vld [vmem:[#allocation14 + $0x9b0] sm:$0xff]
    %v2220 = vld [vmem:[#allocation14 + $0x9b8] sm:$0xff]
    %v2221 = vld [vmem:[#allocation14 + $0x9c0] sm:$0xff]
    %v2222 = vld [vmem:[#allocation14 + $0x9c8] sm:$0xff]
    %v2223 = vld [vmem:[#allocation14 + $0x9d0] sm:$0xff]
    %v2224 = vld [vmem:[#allocation14 + $0x9d8] sm:$0xff]
    %v2225 = vld [vmem:[#allocation14 + $0x9e0] sm:$0xff]
    %v2226 = vld [vmem:[#allocation14 + $0x9e8] sm:$0xff]
    %v2227 = vld [vmem:[#allocation14 + $0x9f0] sm:$0xff]
    %v2228 = vld [vmem:[#allocation14 + $0x9f8] sm:$0xff]
    %v2229 = vld [vmem:[#allocation14 + $0xa00] sm:$0xff]
    %v2230 = vld [vmem:[#allocation14 + $0xa08] sm:$0xff]
    %v2231 = vld [vmem:[#allocation14 + $0xa10] sm:$0xff]
    %v2232 = vld [vmem:[#allocation14 + $0xa18] sm:$0xff]
    %v2233 = vld [vmem:[#allocation14 + $0xa20] sm:$0xff]
    %v2234 = vld [vmem:[#allocation14 + $0xa28] sm:$0xff]
    %v2235 = vld [vmem:[#allocation14 + $0xa30] sm:$0xff]
    %v2236 = vld [vmem:[#allocation14 + $0xa38] sm:$0xff]
    %v2237 = vld [vmem:[#allocation14 + $0xa40] sm:$0xff]
    %v2238 = vld [vmem:[#allocation14 + $0xa48] sm:$0xff]
    %v2239 = vld [vmem:[#allocation14 + $0xa50] sm:$0xff]
    %v2240 = vld [vmem:[#allocation14 + $0xa58] sm:$0xff]
    %v2241 = vld [vmem:[#allocation14 + $0xa60] sm:$0xff]
    %v2242 = vld [vmem:[#allocation14 + $0xa68] sm:$0xff]
    %v2243 = vld [vmem:[#allocation14 + $0xa70] sm:$0xff]
    %v2244 = vld [vmem:[#allocation14 + $0xa78] sm:$0xff]
    %v2245 = vld [vmem:[#allocation14 + $0xa80] sm:$0xff]
    %v2246 = vld [vmem:[#allocation14 + $0xa88] sm:$0xff]
    %v2247 = vld [vmem:[#allocation14 + $0xa90] sm:$0xff]
    %v2248 = vld [vmem:[#allocation14 + $0xa98] sm:$0xff]
    %v2249 = vld [vmem:[#allocation14 + $0xaa0] sm:$0xff]
    %v2250 = vld [vmem:[#allocation14 + $0xaa8] sm:$0xff]
    %v2251 = vld [vmem:[#allocation14 + $0xab0] sm:$0xff]
    %v2252 = vld [vmem:[#allocation14 + $0xab8] sm:$0xff]
    %v2253 = vld [vmem:[#allocation14 + $0xac0] sm:$0xff]
    %v2254 = vld [vmem:[#allocation14 + $0xac8] sm:$0xff]
    %v2255 = vld [vmem:[#allocation14 + $0xad0] sm:$0xff]
    %v2256 = vld [vmem:[#allocation14 + $0xad8] sm:$0xff]
    %v2257 = vld [vmem:[#allocation14 + $0xae0] sm:$0xff]
    %v2258 = vld [vmem:[#allocation14 + $0xae8] sm:$0xff]
    %v2259 = vld [vmem:[#allocation14 + $0xaf0] sm:$0xff]
    %v2260 = vld [vmem:[#allocation14 + $0xaf8] sm:$0xff]
    %v2261 = vld [vmem:[#allocation14 + $0xb00] sm:$0xff]
    %v2262 = vld [vmem:[#allocation14 + $0xb08] sm:$0xff]
    %v2263 = vld [vmem:[#allocation14 + $0xb10] sm:$0xff]
    %v2264 = vld [vmem:[#allocation14 + $0xb18] sm:$0xff]
    %v2265 = vld [vmem:[#allocation14 + $0xb20] sm:$0xff]
    %v2266 = vld [vmem:[#allocation14 + $0xb28] sm:$0xff]
    %v2267 = vld [vmem:[#allocation14 + $0xb30] sm:$0xff]
    %v2268 = vld [vmem:[#allocation14 + $0xb38] sm:$0xff]
    %v2269 = vld [vmem:[#allocation14 + $0xb40] sm:$0xff]
    %v2270 = vld [vmem:[#allocation14 + $0xb48] sm:$0xff]
    %v2271 = vld [vmem:[#allocation14 + $0xb50] sm:$0xff]
    %v2272 = vld [vmem:[#allocation14 + $0xb58] sm:$0xff]
    %v2273 = vld [vmem:[#allocation14 + $0xb60] sm:$0xff]
    %v2274 = vld [vmem:[#allocation14 + $0xb68] sm:$0xff]
    %v2275 = vld [vmem:[#allocation14 + $0xb70] sm:$0xff]
    %v2276 = vld [vmem:[#allocation14 + $0xb78] sm:$0xff]
    %v2277 = vld [vmem:[#allocation14 + $0xb80] sm:$0xff]
    %v2278 = vld [vmem:[#allocation14 + $0xb88] sm:$0xff]
    %v2279 = vld [vmem:[#allocation14 + $0xb90] sm:$0xff]
    %v2280 = vld [vmem:[#allocation14 + $0xb98] sm:$0xff]
    %v2281 = vld [vmem:[#allocation14 + $0xba0] sm:$0xff]
    %v2282 = vld [vmem:[#allocation14 + $0xba8] sm:$0xff]
    %v2283 = vld [vmem:[#allocation14 + $0xbb0] sm:$0xff]
    %v2284 = vld [vmem:[#allocation14 + $0xbb8] sm:$0xff]
    %v2285 = vld [vmem:[#allocation14 + $0xbc0] sm:$0xff]
    %v2286 = vld [vmem:[#allocation14 + $0xbc8] sm:$0xff]
    %v2287 = vld [vmem:[#allocation14 + $0xbd0] sm:$0xff]
    %v2288 = vld [vmem:[#allocation14 + $0xbd8] sm:$0xff]
    %v2289 = vld [vmem:[#allocation14 + $0xbe0] sm:$0xff]
    %v2290 = vld [vmem:[#allocation14 + $0xbe8] sm:$0xff]
    %v2291 = vld [vmem:[#allocation14 + $0xbf0] sm:$0xff]
    %v2292 = vld [vmem:[#allocation14 + $0xbf8] sm:$0xff]
    %v2293 = vld [vmem:[#allocation14 + $0xc00] sm:$0xff]
    %v2294 = vld [vmem:[#allocation14 + $0xc08] sm:$0xff]
    %v2295 = vld [vmem:[#allocation14 + $0xc10] sm:$0xff]
    %v2296 = vld [vmem:[#allocation14 + $0xc18] sm:$0xff]
    %v2297 = vld [vmem:[#allocation14 + $0xc20] sm:$0xff]
    %v2298 = vld [vmem:[#allocation14 + $0xc28] sm:$0xff]
    %v2299 = vld [vmem:[#allocation14 + $0xc30] sm:$0xff]
    %v2300 = vld [vmem:[#allocation14 + $0xc38] sm:$0xff]
    %v2301 = vld [vmem:[#allocation14 + $0xc40] sm:$0xff]
    %v2302 = vld [vmem:[#allocation14 + $0xc48] sm:$0xff]
    %v2303 = vld [vmem:[#allocation14 + $0xc50] sm:$0xff]
    %v2304 = vld [vmem:[#allocation14 + $0xc58] sm:$0xff]
    %v2305 = vld [vmem:[#allocation14 + $0xc60] sm:$0xff]
    %v2306 = vld [vmem:[#allocation14 + $0xc68] sm:$0xff]
    %v2307 = vld [vmem:[#allocation14 + $0xc70] sm:$0xff]
    %v2308 = vld [vmem:[#allocation14 + $0xc78] sm:$0xff]
    %v2309 = vld [vmem:[#allocation14 + $0xc80] sm:$0xff]
    %v2310 = vld [vmem:[#allocation14 + $0xc88] sm:$0xff]
    %v2311 = vld [vmem:[#allocation14 + $0xc90] sm:$0xff]
    %v2312 = vld [vmem:[#allocation14 + $0xc98] sm:$0xff]
    %v2313 = vld [vmem:[#allocation14 + $0xca0] sm:$0xff]
    %v2314 = vld [vmem:[#allocation14 + $0xca8] sm:$0xff]
    %v2315 = vld [vmem:[#allocation14 + $0xcb0] sm:$0xff]
    %v2316 = vld [vmem:[#allocation14 + $0xcb8] sm:$0xff]
    %v2317 = vld [vmem:[#allocation14 + $0xcc0] sm:$0xff]
    %v2318 = vld [vmem:[#allocation14 + $0xcc8] sm:$0xff]
    %v2319 = vld [vmem:[#allocation14 + $0xcd0] sm:$0xff]
    %v2320 = vld [vmem:[#allocation14 + $0xcd8] sm:$0xff]
    %v2321 = vld [vmem:[#allocation14 + $0xce0] sm:$0xff]
    %v2322 = vld [vmem:[#allocation14 + $0xce8] sm:$0xff]
    %v2323 = vld [vmem:[#allocation14 + $0xcf0] sm:$0xff]
    %v2324 = vld [vmem:[#allocation14 + $0xcf8] sm:$0xff]
    %v2325 = vld [vmem:[#allocation14 + $0xd00] sm:$0xff]
    %v2326 = vld [vmem:[#allocation14 + $0xd08] sm:$0xff]
    %v2327 = vld [vmem:[#allocation14 + $0xd10] sm:$0xff]
    %v2328 = vld [vmem:[#allocation14 + $0xd18] sm:$0xff]
    %v2329 = vld [vmem:[#allocation14 + $0xd20] sm:$0xff]
    %v2330 = vld [vmem:[#allocation14 + $0xd28] sm:$0xff]
    %v2331 = vld [vmem:[#allocation14 + $0xd30] sm:$0xff]
    %v2332 = vld [vmem:[#allocation14 + $0xd38] sm:$0xff]
    %v2333 = vld [vmem:[#allocation14 + $0xd40] sm:$0xff]
    %v2334 = vld [vmem:[#allocation14 + $0xd48] sm:$0xff]
    %v2335 = vld [vmem:[#allocation14 + $0xd50] sm:$0xff]
    %v2336 = vld [vmem:[#allocation14 + $0xd58] sm:$0xff]
    %v2337 = vld [vmem:[#allocation14 + $0xd60] sm:$0xff]
    %v2338 = vld [vmem:[#allocation14 + $0xd68] sm:$0xff]
    %v2339 = vld [vmem:[#allocation14 + $0xd70] sm:$0xff]
    %v2340 = vld [vmem:[#allocation14 + $0xd78] sm:$0xff]
    %v2341 = vld [vmem:[#allocation14 + $0xd80] sm:$0xff]
    %v2342 = vld [vmem:[#allocation14 + $0xd88] sm:$0xff]
    %v2343 = vld [vmem:[#allocation14 + $0xd90] sm:$0xff]
    %v2344 = vld [vmem:[#allocation14 + $0xd98] sm:$0xff]
    %v2345 = vld [vmem:[#allocation14 + $0xda0] sm:$0xff]
    %v2346 = vld [vmem:[#allocation14 + $0xda8] sm:$0xff]
    %v2347 = vld [vmem:[#allocation14 + $0xdb0] sm:$0xff]
    %v2348 = vld [vmem:[#allocation14 + $0xdb8] sm:$0xff]
    %v2349 = vld [vmem:[#allocation14 + $0xdc0] sm:$0xff]
    %v2350 = vld [vmem:[#allocation14 + $0xdc8] sm:$0xff]
    %v2351 = vld [vmem:[#allocation14 + $0xdd0] sm:$0xff]
    %v2352 = vld [vmem:[#allocation14 + $0xdd8] sm:$0xff]
    %v2353 = vld [vmem:[#allocation14 + $0xde0] sm:$0xff]
    %v2354 = vld [vmem:[#allocation14 + $0xde8] sm:$0xff]
    %v2355 = vld [vmem:[#allocation14 + $0xdf0] sm:$0xff]
    %v2356 = vld [vmem:[#allocation14 + $0xdf8] sm:$0xff]
    %v2357 = vld [vmem:[#allocation14 + $0xe00] sm:$0xff]
    %v2358 = vld [vmem:[#allocation14 + $0xe08] sm:$0xff]
    %v2359 = vld [vmem:[#allocation14 + $0xe10] sm:$0xff]
    %v2360 = vld [vmem:[#allocation14 + $0xe18] sm:$0xff]
    %v2361 = vld [vmem:[#allocation14 + $0xe20] sm:$0xff]
    %v2362 = vld [vmem:[#allocation14 + $0xe28] sm:$0xff]
    %v2363 = vld [vmem:[#allocation14 + $0xe30] sm:$0xff]
    %v2364 = vld [vmem:[#allocation14 + $0xe38] sm:$0xff]
    %v2365 = vld [vmem:[#allocation14 + $0xe40] sm:$0xff]
    %v2366 = vld [vmem:[#allocation14 + $0xe48] sm:$0xff]
    %v2367 = vld [vmem:[#allocation14 + $0xe50] sm:$0xff]
    %v2368 = vld [vmem:[#allocation14 + $0xe58] sm:$0xff]
    %v2369 = vld [vmem:[#allocation14 + $0xe60] sm:$0xff]
    %v2370 = vld [vmem:[#allocation14 + $0xe68] sm:$0xff]
    %v2371 = vld [vmem:[#allocation14 + $0xe70] sm:$0xff]
    %v2372 = vld [vmem:[#allocation14 + $0xe78] sm:$0xff]
    %v2373 = vld [vmem:[#allocation14 + $0xe80] sm:$0xff]
    %v2374 = vld [vmem:[#allocation14 + $0xe88] sm:$0xff]
    %v2375 = vld [vmem:[#allocation14 + $0xe90] sm:$0xff]
    %v2376 = vld [vmem:[#allocation14 + $0xe98] sm:$0xff]
    %v2377 = vld [vmem:[#allocation14 + $0xea0] sm:$0xff]
    %v2378 = vld [vmem:[#allocation14 + $0xea8] sm:$0xff]
    %v2379 = vld [vmem:[#allocation14 + $0xeb0] sm:$0xff]
    %v2380 = vld [vmem:[#allocation14 + $0xeb8] sm:$0xff]
    %v2381 = vld [vmem:[#allocation14 + $0xec0] sm:$0xff]
    %v2382 = vld [vmem:[#allocation14 + $0xec8] sm:$0xff]
    %v2383 = vld [vmem:[#allocation14 + $0xed0] sm:$0xff]
    %v2384 = vld [vmem:[#allocation14 + $0xed8] sm:$0xff]
    %v2385 = vld [vmem:[#allocation14 + $0xee0] sm:$0xff]
    %v2386 = vld [vmem:[#allocation14 + $0xee8] sm:$0xff]
    %v2387 = vld [vmem:[#allocation14 + $0xef0] sm:$0xff]
    %v2388 = vld [vmem:[#allocation14 + $0xef8] sm:$0xff]
    %v2389 = vld [vmem:[#allocation14 + $0xf00] sm:$0xff]
    %v2390 = vld [vmem:[#allocation14 + $0xf08] sm:$0xff]
    %v2391 = vld [vmem:[#allocation14 + $0xf10] sm:$0xff]
    %v2392 = vld [vmem:[#allocation14 + $0xf18] sm:$0xff]
    %v2393 = vld [vmem:[#allocation14 + $0xf20] sm:$0xff]
    %v2394 = vld [vmem:[#allocation14 + $0xf28] sm:$0xff]
    %v2395 = vld [vmem:[#allocation14 + $0xf30] sm:$0xff]
    %v2396 = vld [vmem:[#allocation14 + $0xf38] sm:$0xff]
    %v2397 = vld [vmem:[#allocation14 + $0xf40] sm:$0xff]
    %v2398 = vld [vmem:[#allocation14 + $0xf48] sm:$0xff]
    %v2399 = vld [vmem:[#allocation14 + $0xf50] sm:$0xff]
    %v2400 = vld [vmem:[#allocation14 + $0xf58] sm:$0xff]
    %v2401 = vld [vmem:[#allocation14 + $0xf60] sm:$0xff]
    %v2402 = vld [vmem:[#allocation14 + $0xf68] sm:$0xff]
    %v2403 = vld [vmem:[#allocation14 + $0xf70] sm:$0xff]
    %v2404 = vld [vmem:[#allocation14 + $0xf78] sm:$0xff]
    %v2405 = vld [vmem:[#allocation14 + $0xf80] sm:$0xff]
    %v2406 = vld [vmem:[#allocation14 + $0xf88] sm:$0xff]
    %v2407 = vld [vmem:[#allocation14 + $0xf90] sm:$0xff]
    %v2408 = vld [vmem:[#allocation14 + $0xf98] sm:$0xff]
    %v2409 = vld [vmem:[#allocation14 + $0xfa0] sm:$0xff]
    %v2410 = vld [vmem:[#allocation14 + $0xfa8] sm:$0xff]
    %v2411 = vld [vmem:[#allocation14 + $0xfb0] sm:$0xff]
    %v2412 = vld [vmem:[#allocation14 + $0xfb8] sm:$0xff]
    %v2413 = vld [vmem:[#allocation14 + $0xfc0] sm:$0xff]
    %v2414 = vld [vmem:[#allocation14 + $0xfc8] sm:$0xff]
    %v2415 = vld [vmem:[#allocation14 + $0xfd0] sm:$0xff]
    %v2416 = vld [vmem:[#allocation14 + $0xfd8] sm:$0xff]
    %v2417 = vld [vmem:[#allocation14 + $0xfe0] sm:$0xff]
    %v2418 = vld [vmem:[#allocation14 + $0xfe8] sm:$0xff]
    %v2419 = vld [vmem:[#allocation14 + $0xff0] sm:$0xff]
    %v2420 = vld [vmem:[#allocation14 + $0xff8] sm:$0xff]
    %v2421 = vld [vmem:[#allocation14 + $0x1000] sm:$0xff]
    %v2422 = vld [vmem:[#allocation14 + $0x1008] sm:$0xff]
    %v2423 = vld [vmem:[#allocation14 + $0x1010] sm:$0xff]
    %v2424 = vld [vmem:[#allocation14 + $0x1018] sm:$0xff]
    %v2425 = vld [vmem:[#allocation14 + $0x1020] sm:$0xff]
    %v2426 = vld [vmem:[#allocation14 + $0x1028] sm:$0xff]
    %v2427 = vld [vmem:[#allocation14 + $0x1030] sm:$0xff]
    %v2428 = vld [vmem:[#allocation14 + $0x1038] sm:$0xff]
    %v2429 = vld [vmem:[#allocation14 + $0x1040] sm:$0xff]
    %v2430 = vld [vmem:[#allocation14 + $0x1048] sm:$0xff]
    %v2431 = vld [vmem:[#allocation14 + $0x1050] sm:$0xff]
    %v2432 = vld [vmem:[#allocation14 + $0x1058] sm:$0xff]
    %v2433 = vld [vmem:[#allocation14 + $0x1060] sm:$0xff]
    %v2434 = vld [vmem:[#allocation14 + $0x1068] sm:$0xff]
    %v2435 = vld [vmem:[#allocation14 + $0x1070] sm:$0xff]
    %v2436 = vld [vmem:[#allocation14 + $0x1078] sm:$0xff]
    %v2437 = vld [vmem:[#allocation14 + $0x1080] sm:$0xff]
    %v2438 = vld [vmem:[#allocation14 + $0x1088] sm:$0xff]
    %v2439 = vld [vmem:[#allocation14 + $0x1090] sm:$0xff]
    %v2440 = vld [vmem:[#allocation14 + $0x1098] sm:$0xff]
    %v2441 = vld [vmem:[#allocation14 + $0x10a0] sm:$0xff]
    %v2442 = vld [vmem:[#allocation14 + $0x10a8] sm:$0xff]
    %v2443 = vld [vmem:[#allocation14 + $0x10b0] sm:$0xff]
    %v2444 = vld [vmem:[#allocation14 + $0x10b8] sm:$0xff]
    %v2445 = vld [vmem:[#allocation14 + $0x10c0] sm:$0xff]
    %v2446 = vld [vmem:[#allocation14 + $0x10c8] sm:$0xff]
    %v2447 = vld [vmem:[#allocation14 + $0x10d0] sm:$0xff]
    %v2448 = vld [vmem:[#allocation14 + $0x10d8] sm:$0xff]
    %v2449 = vld [vmem:[#allocation14 + $0x10e0] sm:$0xff]
    %v2450 = vld [vmem:[#allocation14 + $0x10e8] sm:$0xff]
    %v2451 = vld [vmem:[#allocation14 + $0x10f0] sm:$0xff]
    %v2452 = vld [vmem:[#allocation14 + $0x10f8] sm:$0xff]
    %v2453 = vld [vmem:[#allocation14 + $0x1100] sm:$0xff]
    %v2454 = vld [vmem:[#allocation14 + $0x1108] sm:$0xff]
    %v2455 = vld [vmem:[#allocation14 + $0x1110] sm:$0xff]
    %v2456 = vld [vmem:[#allocation14 + $0x1118] sm:$0xff]
    %v2457 = vld [vmem:[#allocation14 + $0x1120] sm:$0xff]
    %v2458 = vld [vmem:[#allocation14 + $0x1128] sm:$0xff]
    %v2459 = vld [vmem:[#allocation14 + $0x1130] sm:$0xff]
    %v2460 = vld [vmem:[#allocation14 + $0x1138] sm:$0xff]
    %v2461 = vld [vmem:[#allocation14 + $0x1140] sm:$0xff]
    %v2462 = vld [vmem:[#allocation14 + $0x1148] sm:$0xff]
    %v2463 = vld [vmem:[#allocation14 + $0x1150] sm:$0xff]
    %v2464 = vld [vmem:[#allocation14 + $0x1158] sm:$0xff]
    %v2465 = vld [vmem:[#allocation14 + $0x1160] sm:$0xff]
    %v2466 = vld [vmem:[#allocation14 + $0x1168] sm:$0xff]
    %v2467 = vld [vmem:[#allocation14 + $0x1170] sm:$0xff]
    %v2468 = vld [vmem:[#allocation14 + $0x1178] sm:$0xff]
    %v2469 = vld [vmem:[#allocation14 + $0x1180] sm:$0xff]
    %v2470 = vld [vmem:[#allocation14 + $0x1188] sm:$0xff]
    %v2471 = vld [vmem:[#allocation14 + $0x1190] sm:$0xff]
    %v2472 = vld [vmem:[#allocation14 + $0x1198] sm:$0xff]
    %v2473 = vld [vmem:[#allocation14 + $0x11a0] sm:$0xff]
    %v2474 = vld [vmem:[#allocation14 + $0x11a8] sm:$0xff]
    %v2475 = vld [vmem:[#allocation14 + $0x11b0] sm:$0xff]
    %v2476 = vld [vmem:[#allocation14 + $0x11b8] sm:$0xff]
    %v2477 = vld [vmem:[#allocation14 + $0x11c0] sm:$0xff]
    %v2478 = vld [vmem:[#allocation14 + $0x11c8] sm:$0xff]
    %v2479 = vld [vmem:[#allocation14 + $0x11d0] sm:$0xff]
    %v2480 = vld [vmem:[#allocation14 + $0x11d8] sm:$0xff]
    %v2481 = vld [vmem:[#allocation14 + $0x11e0] sm:$0xff]
    %v2482 = vld [vmem:[#allocation14 + $0x11e8] sm:$0xff]
    %v2483 = vld [vmem:[#allocation14 + $0x11f0] sm:$0xff]
    %v2484 = vld [vmem:[#allocation14 + $0x11f8] sm:$0xff]
    %v2485 = vld [vmem:[#allocation14 + $0x1200] sm:$0xff]
    %v2486 = vld [vmem:[#allocation14 + $0x1208] sm:$0xff]
    %v2487 = vld [vmem:[#allocation14 + $0x1210] sm:$0xff]
    %v2488 = vld [vmem:[#allocation14 + $0x1218] sm:$0xff]
    %v2489 = vld [vmem:[#allocation14 + $0x1220] sm:$0xff]
    %v2490 = vld [vmem:[#allocation14 + $0x1228] sm:$0xff]
    %v2491 = vld [vmem:[#allocation14 + $0x1230] sm:$0xff]
    %v2492 = vld [vmem:[#allocation14 + $0x1238] sm:$0xff]
    %v2493 = vld [vmem:[#allocation14 + $0x1240] sm:$0xff]
    %v2494 = vld [vmem:[#allocation14 + $0x1248] sm:$0xff]
    %v2495 = vld [vmem:[#allocation14 + $0x1250] sm:$0xff]
    %v2496 = vld [vmem:[#allocation14 + $0x1258] sm:$0xff]
    %v2497 = vld [vmem:[#allocation14 + $0x1260] sm:$0xff]
    %v2498 = vld [vmem:[#allocation14 + $0x1268] sm:$0xff]
    %v2499 = vld [vmem:[#allocation14 + $0x1270] sm:$0xff]
    %v2500 = vld [vmem:[#allocation14 + $0x1278] sm:$0xff]
    %v2501 = vld [vmem:[#allocation14 + $0x1280] sm:$0xff]
    %v2502 = vld [vmem:[#allocation14 + $0x1288] sm:$0xff]
    %v2503 = vld [vmem:[#allocation14 + $0x1290] sm:$0xff]
    %v2504 = vld [vmem:[#allocation14 + $0x1298] sm:$0xff]
    %v2505 = vld [vmem:[#allocation14 + $0x12a0] sm:$0xff]
    %v2506 = vld [vmem:[#allocation14 + $0x12a8] sm:$0xff]
    %v2507 = vld [vmem:[#allocation14 + $0x12b0] sm:$0xff]
    %v2508 = vld [vmem:[#allocation14 + $0x12b8] sm:$0xff]
    %v2509 = vld [vmem:[#allocation14 + $0x12c0] sm:$0xff]
    %v2510 = vld [vmem:[#allocation14 + $0x12c8] sm:$0xff]
    %v2511 = vld [vmem:[#allocation14 + $0x12d0] sm:$0xff]
    %v2512 = vld [vmem:[#allocation14 + $0x12d8] sm:$0xff]
    %v2513 = vld [vmem:[#allocation14 + $0x12e0] sm:$0xff]
    %v2514 = vld [vmem:[#allocation14 + $0x12e8] sm:$0xff]
    %v2515 = vld [vmem:[#allocation14 + $0x12f0] sm:$0xff]
    %v2516 = vld [vmem:[#allocation14 + $0x12f8] sm:$0xff]
    %v2517 = vld [vmem:[#allocation14 + $0x1300] sm:$0xff]
    %v2518 = vld [vmem:[#allocation14 + $0x1308] sm:$0xff]
    %v2519 = vld [vmem:[#allocation14 + $0x1310] sm:$0xff]
    %v2520 = vld [vmem:[#allocation14 + $0x1318] sm:$0xff]
    %v2521 = vld [vmem:[#allocation14 + $0x1320] sm:$0xff]
    %v2522 = vld [vmem:[#allocation14 + $0x1328] sm:$0xff]
    %v2523 = vld [vmem:[#allocation14 + $0x1330] sm:$0xff]
    %v2524 = vld [vmem:[#allocation14 + $0x1338] sm:$0xff]
    %v2525 = vld [vmem:[#allocation14 + $0x1340] sm:$0xff]
    %v2526 = vld [vmem:[#allocation14 + $0x1348] sm:$0xff]
    %v2527 = vld [vmem:[#allocation14 + $0x1350] sm:$0xff]
    %v2528 = vld [vmem:[#allocation14 + $0x1358] sm:$0xff]
    %v2529 = vld [vmem:[#allocation14 + $0x1360] sm:$0xff]
    %v2530 = vld [vmem:[#allocation14 + $0x1368] sm:$0xff]
    %v2531 = vld [vmem:[#allocation14 + $0x1370] sm:$0xff]
    %v2532 = vld [vmem:[#allocation14 + $0x1378] sm:$0xff]
    %v2533 = vld [vmem:[#allocation14 + $0x1380] sm:$0xff]
    %v2534 = vld [vmem:[#allocation14 + $0x1388] sm:$0xff]
    %v2535 = vld [vmem:[#allocation14 + $0x1390] sm:$0xff]
    %v2536 = vld [vmem:[#allocation14 + $0x1398] sm:$0xff]
    %v2537 = vld [vmem:[#allocation14 + $0x13a0] sm:$0xff]
    %v2538 = vld [vmem:[#allocation14 + $0x13a8] sm:$0xff]
    %v2539 = vld [vmem:[#allocation14 + $0x13b0] sm:$0xff]
    %v2540 = vld [vmem:[#allocation14 + $0x13b8] sm:$0xff]
    %v2541 = vld [vmem:[#allocation14 + $0x13c0] sm:$0xff]
    %v2542 = vld [vmem:[#allocation14 + $0x13c8] sm:$0xff]
    %v2543 = vld [vmem:[#allocation14 + $0x13d0] sm:$0xff]
    %v2544 = vld [vmem:[#allocation14 + $0x13d8] sm:$0xff]
    %v2545 = vld [vmem:[#allocation14 + $0x13e0] sm:$0xff]
    %v2546 = vld [vmem:[#allocation14 + $0x13e8] sm:$0xff]
    %v2547 = vld [vmem:[#allocation14 + $0x13f0] sm:$0xff]
    %v2548 = vld [vmem:[#allocation14 + $0x13f8] sm:$0xff]
    %v2549 = vld [vmem:[#allocation14 + $0x1400] sm:$0xff]
    %v2550 = vld [vmem:[#allocation14 + $0x1408] sm:$0xff]
    %v2551 = vld [vmem:[#allocation14 + $0x1410] sm:$0xff]
    %v2552 = vld [vmem:[#allocation14 + $0x1418] sm:$0xff]
    %v2553 = vld [vmem:[#allocation14 + $0x1420] sm:$0xff]
    %v2554 = vld [vmem:[#allocation14 + $0x1428] sm:$0xff]
    %v2555 = vld [vmem:[#allocation14 + $0x1430] sm:$0xff]
    %v2556 = vld [vmem:[#allocation14 + $0x1438] sm:$0xff]
    %v2557 = vld [vmem:[#allocation14 + $0x1440] sm:$0xff]
    %v2558 = vld [vmem:[#allocation14 + $0x1448] sm:$0xff]
    %v2559 = vld [vmem:[#allocation14 + $0x1450] sm:$0xff]
    %v2560 = vld [vmem:[#allocation14 + $0x1458] sm:$0xff]
    %v2561 = vld [vmem:[#allocation14 + $0x1460] sm:$0xff]
    %v2562 = vld [vmem:[#allocation14 + $0x1468] sm:$0xff]
    %v2563 = vld [vmem:[#allocation14 + $0x1470] sm:$0xff]
    %v2564 = vld [vmem:[#allocation14 + $0x1478] sm:$0xff]
    %v2565 = vld [vmem:[#allocation14 + $0x1480] sm:$0xff]
    %v2566 = vld [vmem:[#allocation14 + $0x1488] sm:$0xff]
    %v2567 = vld [vmem:[#allocation14 + $0x1490] sm:$0xff]
    %v2568 = vld [vmem:[#allocation14 + $0x1498] sm:$0xff]
    %v2569 = vld [vmem:[#allocation14 + $0x14a0] sm:$0xff]
    %v2570 = vld [vmem:[#allocation14 + $0x14a8] sm:$0xff]
    %v2571 = vld [vmem:[#allocation14 + $0x14b0] sm:$0xff]
    %v2572 = vld [vmem:[#allocation14 + $0x14b8] sm:$0xff]
    %v2573 = vld [vmem:[#allocation14 + $0x14c0] sm:$0xff]
    %v2574 = vld [vmem:[#allocation14 + $0x14c8] sm:$0xff]
    %v2575 = vld [vmem:[#allocation14 + $0x14d0] sm:$0xff]
    %v2576 = vld [vmem:[#allocation14 + $0x14d8] sm:$0xff]
    %v2577 = vld [vmem:[#allocation14 + $0x14e0] sm:$0xff]
    %v2578 = vld [vmem:[#allocation14 + $0x14e8] sm:$0xff]
    %v2579 = vld [vmem:[#allocation14 + $0x14f0] sm:$0xff]
    %v2580 = vld [vmem:[#allocation14 + $0x14f8] sm:$0xff]
    %v2581 = vld [vmem:[#allocation14 + $0x1500] sm:$0xff]
    %v2582 = vld [vmem:[#allocation14 + $0x1508] sm:$0xff]
    %v2583 = vld [vmem:[#allocation14 + $0x1510] sm:$0xff]
    %v2584 = vld [vmem:[#allocation14 + $0x1518] sm:$0xff]
    %v2585 = vld [vmem:[#allocation14 + $0x1520] sm:$0xff]
    %v2586 = vld [vmem:[#allocation14 + $0x1528] sm:$0xff]
    %v2587 = vld [vmem:[#allocation14 + $0x1530] sm:$0xff]
    %v2588 = vld [vmem:[#allocation14 + $0x1538] sm:$0xff]
    %v2589 = vld [vmem:[#allocation14 + $0x1540] sm:$0xff]
    %v2590 = vld [vmem:[#allocation14 + $0x1548] sm:$0xff]
    %v2591 = vld [vmem:[#allocation14 + $0x1550] sm:$0xff]
    %v2592 = vld [vmem:[#allocation14 + $0x1558] sm:$0xff]
    %v2593 = vld [vmem:[#allocation14 + $0x1560] sm:$0xff]
    %v2594 = vld [vmem:[#allocation14 + $0x1568] sm:$0xff]
    %v2595 = vld [vmem:[#allocation14 + $0x1570] sm:$0xff]
    %v2596 = vld [vmem:[#allocation14 + $0x1578] sm:$0xff]
    %v2597 = vld [vmem:[#allocation14 + $0x1580] sm:$0xff]
    %v2598 = vld [vmem:[#allocation14 + $0x1588] sm:$0xff]
    %v2599 = vld [vmem:[#allocation14 + $0x1590] sm:$0xff]
    %v2600 = vld [vmem:[#allocation14 + $0x1598] sm:$0xff]
    %v2601 = vld [vmem:[#allocation14 + $0x15a0] sm:$0xff]
    %v2602 = vld [vmem:[#allocation14 + $0x15a8] sm:$0xff]
    %v2603 = vld [vmem:[#allocation14 + $0x15b0] sm:$0xff]
    %v2604 = vld [vmem:[#allocation14 + $0x15b8] sm:$0xff]
    %v2605 = vld [vmem:[#allocation14 + $0x15c0] sm:$0xff]
    %v2606 = vld [vmem:[#allocation14 + $0x15c8] sm:$0xff]
    %v2607 = vld [vmem:[#allocation14 + $0x15d0] sm:$0xff]
    %v2608 = vld [vmem:[#allocation14 + $0x15d8] sm:$0xff]
    %v2609 = vld [vmem:[#allocation14 + $0x15e0] sm:$0xff]
    %v2610 = vld [vmem:[#allocation14 + $0x15e8] sm:$0xff]
    %v2611 = vld [vmem:[#allocation14 + $0x15f0] sm:$0xff]
    %v2612 = vld [vmem:[#allocation14 + $0x15f8] sm:$0xff]
    %v2613 = vld [vmem:[#allocation14 + $0x1600] sm:$0xff]
    %v2614 = vld [vmem:[#allocation14 + $0x1608] sm:$0xff]
    %v2615 = vld [vmem:[#allocation14 + $0x1610] sm:$0xff]
    %v2616 = vld [vmem:[#allocation14 + $0x1618] sm:$0xff]
    %v2617 = vld [vmem:[#allocation14 + $0x1620] sm:$0xff]
    %v2618 = vld [vmem:[#allocation14 + $0x1628] sm:$0xff]
    %v2619 = vld [vmem:[#allocation14 + $0x1630] sm:$0xff]
    %v2620 = vld [vmem:[#allocation14 + $0x1638] sm:$0xff]
    %v2621 = vld [vmem:[#allocation14 + $0x1640] sm:$0xff]
    %v2622 = vld [vmem:[#allocation14 + $0x1648] sm:$0xff]
    %v2623 = vld [vmem:[#allocation14 + $0x1650] sm:$0xff]
    %v2624 = vld [vmem:[#allocation14 + $0x1658] sm:$0xff]
    %v2625 = vld [vmem:[#allocation14 + $0x1660] sm:$0xff]
    %v2626 = vld [vmem:[#allocation14 + $0x1668] sm:$0xff]
    %v2627 = vld [vmem:[#allocation14 + $0x1670] sm:$0xff]
    %v2628 = vld [vmem:[#allocation14 + $0x1678] sm:$0xff]
    %v2629 = vld [vmem:[#allocation14 + $0x1680] sm:$0xff]
    %v2630 = vld [vmem:[#allocation14 + $0x1688] sm:$0xff]
    %v2631 = vld [vmem:[#allocation14 + $0x1690] sm:$0xff]
    %v2632 = vld [vmem:[#allocation14 + $0x1698] sm:$0xff]
    %v2633 = vld [vmem:[#allocation14 + $0x16a0] sm:$0xff]
    %v2634 = vld [vmem:[#allocation14 + $0x16a8] sm:$0xff]
    %v2635 = vld [vmem:[#allocation14 + $0x16b0] sm:$0xff]
    %v2636 = vld [vmem:[#allocation14 + $0x16b8] sm:$0xff]
    %v2637 = vld [vmem:[#allocation14 + $0x16c0] sm:$0xff]
    %v2638 = vld [vmem:[#allocation14 + $0x16c8] sm:$0xff]
    %v2639 = vld [vmem:[#allocation14 + $0x16d0] sm:$0xff]
    %v2640 = vld [vmem:[#allocation14 + $0x16d8] sm:$0xff]
    %v2641 = vld [vmem:[#allocation14 + $0x16e0] sm:$0xff]
    %v2642 = vld [vmem:[#allocation14 + $0x16e8] sm:$0xff]
    %v2643 = vld [vmem:[#allocation14 + $0x16f0] sm:$0xff]
    %v2644 = vld [vmem:[#allocation14 + $0x16f8] sm:$0xff]
    %v2645 = vld [vmem:[#allocation14 + $0x1700] sm:$0xff]
    %v2646 = vld [vmem:[#allocation14 + $0x1708] sm:$0xff]
    %v2647 = vld [vmem:[#allocation14 + $0x1710] sm:$0xff]
    %v2648 = vld [vmem:[#allocation14 + $0x1718] sm:$0xff]
    %v2649 = vld [vmem:[#allocation14 + $0x1720] sm:$0xff]
    %v2650 = vld [vmem:[#allocation14 + $0x1728] sm:$0xff]
    %v2651 = vld [vmem:[#allocation14 + $0x1730] sm:$0xff]
    %v2652 = vld [vmem:[#allocation14 + $0x1738] sm:$0xff]
    %v2653 = vld [vmem:[#allocation14 + $0x1740] sm:$0xff]
    %v2654 = vld [vmem:[#allocation14 + $0x1748] sm:$0xff]
    %v2655 = vld [vmem:[#allocation14 + $0x1750] sm:$0xff]
    %v2656 = vld [vmem:[#allocation14 + $0x1758] sm:$0xff]
    %v2657 = vld [vmem:[#allocation14 + $0x1760] sm:$0xff]
    %v2658 = vld [vmem:[#allocation14 + $0x1768] sm:$0xff]
    %v2659 = vld [vmem:[#allocation14 + $0x1770] sm:$0xff]
    %v2660 = vld [vmem:[#allocation14 + $0x1778] sm:$0xff]
    %v2661 = vld [vmem:[#allocation14 + $0x1780] sm:$0xff]
    %v2662 = vld [vmem:[#allocation14 + $0x1788] sm:$0xff]
    %v2663 = vld [vmem:[#allocation14 + $0x1790] sm:$0xff]
    %v2664 = vld [vmem:[#allocation14 + $0x1798] sm:$0xff]
    %v2665 = vld [vmem:[#allocation14 + $0x17a0] sm:$0xff]
    %v2666 = vld [vmem:[#allocation14 + $0x17a8] sm:$0xff]
    %v2667 = vld [vmem:[#allocation14 + $0x17b0] sm:$0xff]
    %v2668 = vld [vmem:[#allocation14 + $0x17b8] sm:$0xff]
    %v2669 = vld [vmem:[#allocation14 + $0x17c0] sm:$0xff]
    %v2670 = vld [vmem:[#allocation14 + $0x17c8] sm:$0xff]
    %v2671 = vld [vmem:[#allocation14 + $0x17d0] sm:$0xff]
    %v2672 = vld [vmem:[#allocation14 + $0x17d8] sm:$0xff]
    %v2673 = vld [vmem:[#allocation14 + $0x17e0] sm:$0xff]
    %v2674 = vld [vmem:[#allocation14 + $0x17e8] sm:$0xff]
    %v2675 = vld [vmem:[#allocation14 + $0x17f0] sm:$0xff]
    %v2676 = vld [vmem:[#allocation14 + $0x17f8] sm:$0xff]
    %v2677 = vld [vmem:[#allocation14 + $0x1800] sm:$0xff]
    %v2678 = vld [vmem:[#allocation14 + $0x1808] sm:$0xff]
    %v2679 = vld [vmem:[#allocation14 + $0x1810] sm:$0xff]
    %v2680 = vld [vmem:[#allocation14 + $0x1818] sm:$0xff]
    %v2681 = vld [vmem:[#allocation14 + $0x1820] sm:$0xff]
    %v2682 = vld [vmem:[#allocation14 + $0x1828] sm:$0xff]
    %v2683 = vld [vmem:[#allocation14 + $0x1830] sm:$0xff]
    %v2684 = vld [vmem:[#allocation14 + $0x1838] sm:$0xff]
    %v2685 = vld [vmem:[#allocation14 + $0x1840] sm:$0xff]
    %v2686 = vld [vmem:[#allocation14 + $0x1848] sm:$0xff]
    %v2687 = vld [vmem:[#allocation14 + $0x1850] sm:$0xff]
    %v2688 = vld [vmem:[#allocation14 + $0x1858] sm:$0xff]
    %v2689 = vld [vmem:[#allocation14 + $0x1860] sm:$0xff]
    %v2690 = vld [vmem:[#allocation14 + $0x1868] sm:$0xff]
    %v2691 = vld [vmem:[#allocation14 + $0x1870] sm:$0xff]
    %v2692 = vld [vmem:[#allocation14 + $0x1878] sm:$0xff]
    %v2693 = vld [vmem:[#allocation14 + $0x1880] sm:$0xff]
    %v2694 = vld [vmem:[#allocation14 + $0x1888] sm:$0xff]
    %v2695 = vld [vmem:[#allocation14 + $0x1890] sm:$0xff]
    %v2696 = vld [vmem:[#allocation14 + $0x1898] sm:$0xff]
    %v2697 = vld [vmem:[#allocation14 + $0x18a0] sm:$0xff]
    %v2698 = vld [vmem:[#allocation14 + $0x18a8] sm:$0xff]
    %v2699 = vld [vmem:[#allocation14 + $0x18b0] sm:$0xff]
    %v2700 = vld [vmem:[#allocation14 + $0x18b8] sm:$0xff]
    %v2701 = vld [vmem:[#allocation14 + $0x18c0] sm:$0xff]
    %v2702 = vld [vmem:[#allocation14 + $0x18c8] sm:$0xff]
    %v2703 = vld [vmem:[#allocation14 + $0x18d0] sm:$0xff]
    %v2704 = vld [vmem:[#allocation14 + $0x18d8] sm:$0xff]
    %v2705 = vld [vmem:[#allocation14 + $0x18e0] sm:$0xff]
    %v2706 = vld [vmem:[#allocation14 + $0x18e8] sm:$0xff]
    %v2707 = vld [vmem:[#allocation14 + $0x18f0] sm:$0xff]
    %v2708 = vld [vmem:[#allocation14 + $0x18f8] sm:$0xff]
    %v2709 = vld [vmem:[#allocation14 + $0x1900] sm:$0xff]
    %v2710 = vld [vmem:[#allocation14 + $0x1908] sm:$0xff]
    %v2711 = vld [vmem:[#allocation14 + $0x1910] sm:$0xff]
    %v2712 = vld [vmem:[#allocation14 + $0x1918] sm:$0xff]
    %v2713 = vld [vmem:[#allocation14 + $0x1920] sm:$0xff]
    %v2714 = vld [vmem:[#allocation14 + $0x1928] sm:$0xff]
    %v2715 = vld [vmem:[#allocation14 + $0x1930] sm:$0xff]
    %v2716 = vld [vmem:[#allocation14 + $0x1938] sm:$0xff]
    %v2717 = vld [vmem:[#allocation14 + $0x1940] sm:$0xff]
    %v2718 = vld [vmem:[#allocation14 + $0x1948] sm:$0xff]
    %v2719 = vld [vmem:[#allocation14 + $0x1950] sm:$0xff]
    %v2720 = vld [vmem:[#allocation14 + $0x1958] sm:$0xff]
    %v2721 = vld [vmem:[#allocation14 + $0x1960] sm:$0xff]
    %v2722 = vld [vmem:[#allocation14 + $0x1968] sm:$0xff]
    %v2723 = vld [vmem:[#allocation14 + $0x1970] sm:$0xff]
    %v2724 = vld [vmem:[#allocation14 + $0x1978] sm:$0xff]
    %v2725 = vld [vmem:[#allocation14 + $0x1980] sm:$0xff]
    %v2726 = vld [vmem:[#allocation14 + $0x1988] sm:$0xff]
    %v2727 = vld [vmem:[#allocation14 + $0x1990] sm:$0xff]
    %v2728 = vld [vmem:[#allocation14 + $0x1998] sm:$0xff]
    %v2729 = vld [vmem:[#allocation14 + $0x19a0] sm:$0xff]
    %v2730 = vld [vmem:[#allocation14 + $0x19a8] sm:$0xff]
    %v2731 = vld [vmem:[#allocation14 + $0x19b0] sm:$0xff]
    %v2732 = vld [vmem:[#allocation14 + $0x19b8] sm:$0xff]
    %v2733 = vld [vmem:[#allocation14 + $0x19c0] sm:$0xff]
    %v2734 = vld [vmem:[#allocation14 + $0x19c8] sm:$0xff]
    %v2735 = vld [vmem:[#allocation14 + $0x19d0] sm:$0xff]
    %v2736 = vld [vmem:[#allocation14 + $0x19d8] sm:$0xff]
    %v2737 = vld [vmem:[#allocation14 + $0x19e0] sm:$0xff]
    %v2738 = vld [vmem:[#allocation14 + $0x19e8] sm:$0xff]
    %v2739 = vld [vmem:[#allocation14 + $0x19f0] sm:$0xff]
    %v2740 = vld [vmem:[#allocation14 + $0x19f8] sm:$0xff]
    %v2741 = vld [vmem:[#allocation14 + $0x1a00] sm:$0xff]
    %v2742 = vld [vmem:[#allocation14 + $0x1a08] sm:$0xff]
    %v2743 = vld [vmem:[#allocation14 + $0x1a10] sm:$0xff]
    %v2744 = vld [vmem:[#allocation14 + $0x1a18] sm:$0xff]
    %v2745 = vld [vmem:[#allocation14 + $0x1a20] sm:$0xff]
    %v2746 = vld [vmem:[#allocation14 + $0x1a28] sm:$0xff]
    %v2747 = vld [vmem:[#allocation14 + $0x1a30] sm:$0xff]
    %v2748 = vld [vmem:[#allocation14 + $0x1a38] sm:$0xff]
    %v2749 = vld [vmem:[#allocation14 + $0x1a40] sm:$0xff]
    %v2750 = vld [vmem:[#allocation14 + $0x1a48] sm:$0xff]
    %v2751 = vld [vmem:[#allocation14 + $0x1a50] sm:$0xff]
    %v2752 = vld [vmem:[#allocation14 + $0x1a58] sm:$0xff]
    %v2753 = vld [vmem:[#allocation14 + $0x1a60] sm:$0xff]
    %v2754 = vld [vmem:[#allocation14 + $0x1a68] sm:$0xff]
    %v2755 = vld [vmem:[#allocation14 + $0x1a70] sm:$0xff]
    %v2756 = vld [vmem:[#allocation14 + $0x1a78] sm:$0xff]
    %v2757 = vld [vmem:[#allocation14 + $0x1a80] sm:$0xff]
    %v2758 = vld [vmem:[#allocation14 + $0x1a88] sm:$0xff]
    %v2759 = vld [vmem:[#allocation14 + $0x1a90] sm:$0xff]
    %v2760 = vld [vmem:[#allocation14 + $0x1a98] sm:$0xff]
    %v2761 = vld [vmem:[#allocation14 + $0x1aa0] sm:$0xff]
    %v2762 = vld [vmem:[#allocation14 + $0x1aa8] sm:$0xff]
    %v2763 = vld [vmem:[#allocation14 + $0x1ab0] sm:$0xff]
    %v2764 = vld [vmem:[#allocation14 + $0x1ab8] sm:$0xff]
    %v2765 = vld [vmem:[#allocation14 + $0x1ac0] sm:$0xff]
    %v2766 = vld [vmem:[#allocation14 + $0x1ac8] sm:$0xff]
    %v2767 = vld [vmem:[#allocation14 + $0x1ad0] sm:$0xff]
    %v2768 = vld [vmem:[#allocation14 + $0x1ad8] sm:$0xff]
    %v2769 = vld [vmem:[#allocation14 + $0x1ae0] sm:$0xff]
    %v2770 = vld [vmem:[#allocation14 + $0x1ae8] sm:$0xff]
    %v2771 = vld [vmem:[#allocation14 + $0x1af0] sm:$0xff]
    %v2772 = vld [vmem:[#allocation14 + $0x1af8] sm:$0xff]
    %v2773 = vld [vmem:[#allocation14 + $0x1b00] sm:$0xff]
    %v2774 = vld [vmem:[#allocation14 + $0x1b08] sm:$0xff]
    %v2775 = vld [vmem:[#allocation14 + $0x1b10] sm:$0xff]
    %v2776 = vld [vmem:[#allocation14 + $0x1b18] sm:$0xff]
    %v2777 = vld [vmem:[#allocation14 + $0x1b20] sm:$0xff]
    %v2778 = vld [vmem:[#allocation14 + $0x1b28] sm:$0xff]
    %v2779 = vld [vmem:[#allocation14 + $0x1b30] sm:$0xff]
    %v2780 = vld [vmem:[#allocation14 + $0x1b38] sm:$0xff]
    %v2781 = vld [vmem:[#allocation14 + $0x1b40] sm:$0xff]
    %v2782 = vld [vmem:[#allocation14 + $0x1b48] sm:$0xff]
    %v2783 = vld [vmem:[#allocation14 + $0x1b50] sm:$0xff]
    %v2784 = vld [vmem:[#allocation14 + $0x1b58] sm:$0xff]
    %v2785 = vld [vmem:[#allocation14 + $0x1b60] sm:$0xff]
    %v2786 = vld [vmem:[#allocation14 + $0x1b68] sm:$0xff]
    %v2787 = vld [vmem:[#allocation14 + $0x1b70] sm:$0xff]
    %v2788 = vld [vmem:[#allocation14 + $0x1b78] sm:$0xff]
    %v2789 = vld [vmem:[#allocation14 + $0x1b80] sm:$0xff]
    %v2790 = vld [vmem:[#allocation14 + $0x1b88] sm:$0xff]
    %v2791 = vld [vmem:[#allocation14 + $0x1b90] sm:$0xff]
    %v2792 = vld [vmem:[#allocation14 + $0x1b98] sm:$0xff]
    %v2793 = vld [vmem:[#allocation14 + $0x1ba0] sm:$0xff]
    %v2794 = vld [vmem:[#allocation14 + $0x1ba8] sm:$0xff]
    %v2795 = vld [vmem:[#allocation14 + $0x1bb0] sm:$0xff]
    %v2796 = vld [vmem:[#allocation14 + $0x1bb8] sm:$0xff]
    %v2797 = vld [vmem:[#allocation14 + $0x1bc0] sm:$0xff]
    %v2798 = vld [vmem:[#allocation14 + $0x1bc8] sm:$0xff]
    %v2799 = vld [vmem:[#allocation14 + $0x1bd0] sm:$0xff]
    %v2800 = vld [vmem:[#allocation14 + $0x1bd8] sm:$0xff]
    %v2801 = vld [vmem:[#allocation14 + $0x1be0] sm:$0xff]
    %v2802 = vld [vmem:[#allocation14 + $0x1be8] sm:$0xff]
    %v2803 = vld [vmem:[#allocation14 + $0x1bf0] sm:$0xff]
    %v2804 = vld [vmem:[#allocation14 + $0x1bf8] sm:$0xff]
    %v2805 = vld [vmem:[#allocation14 + $0x1c00] sm:$0xff]
    %v2806 = vld [vmem:[#allocation14 + $0x1c08] sm:$0xff]
    %v2807 = vld [vmem:[#allocation14 + $0x1c10] sm:$0xff]
    %v2808 = vld [vmem:[#allocation14 + $0x1c18] sm:$0xff]
    %v2809 = vld [vmem:[#allocation14 + $0x1c20] sm:$0xff]
    %v2810 = vld [vmem:[#allocation14 + $0x1c28] sm:$0xff]
    %v2811 = vld [vmem:[#allocation14 + $0x1c30] sm:$0xff]
    %v2812 = vld [vmem:[#allocation14 + $0x1c38] sm:$0xff]
    %v2813 = vld [vmem:[#allocation14 + $0x1c40] sm:$0xff]
    %v2814 = vld [vmem:[#allocation14 + $0x1c48] sm:$0xff]
    %v2815 = vld [vmem:[#allocation14 + $0x1c50] sm:$0xff]
    %v2816 = vld [vmem:[#allocation14 + $0x1c58] sm:$0xff]
    %v2817 = vld [vmem:[#allocation14 + $0x1c60] sm:$0xff]
    %v2818 = vld [vmem:[#allocation14 + $0x1c68] sm:$0xff]
    %v2819 = vld [vmem:[#allocation14 + $0x1c70] sm:$0xff]
    %v2820 = vld [vmem:[#allocation14 + $0x1c78] sm:$0xff]
    %v2821 = vld [vmem:[#allocation14 + $0x1c80] sm:$0xff]
    %v2822 = vld [vmem:[#allocation14 + $0x1c88] sm:$0xff]
    %v2823 = vld [vmem:[#allocation14 + $0x1c90] sm:$0xff]
    %v2824 = vld [vmem:[#allocation14 + $0x1c98] sm:$0xff]
    %v2825 = vld [vmem:[#allocation14 + $0x1ca0] sm:$0xff]
    %v2826 = vld [vmem:[#allocation14 + $0x1ca8] sm:$0xff]
    %v2827 = vld [vmem:[#allocation14 + $0x1cb0] sm:$0xff]
    %v2828 = vld [vmem:[#allocation14 + $0x1cb8] sm:$0xff]
    %v2829 = vld [vmem:[#allocation14 + $0x1cc0] sm:$0xff]
    %v2830 = vld [vmem:[#allocation14 + $0x1cc8] sm:$0xff]
    %v2831 = vld [vmem:[#allocation14 + $0x1cd0] sm:$0xff]
    %v2832 = vld [vmem:[#allocation14 + $0x1cd8] sm:$0xff]
    %v2833 = vld [vmem:[#allocation14 + $0x1ce0] sm:$0xff]
    %v2834 = vld [vmem:[#allocation14 + $0x1ce8] sm:$0xff]
    %v2835 = vld [vmem:[#allocation14 + $0x1cf0] sm:$0xff]
    %v2836 = vld [vmem:[#allocation14 + $0x1cf8] sm:$0xff]
    %v2837 = vld [vmem:[#allocation14 + $0x1d00] sm:$0xff]
    %v2838 = vld [vmem:[#allocation14 + $0x1d08] sm:$0xff]
    %v2839 = vld [vmem:[#allocation14 + $0x1d10] sm:$0xff]
    %v2840 = vld [vmem:[#allocation14 + $0x1d18] sm:$0xff]
    %v2841 = vld [vmem:[#allocation14 + $0x1d20] sm:$0xff]
    %v2842 = vld [vmem:[#allocation14 + $0x1d28] sm:$0xff]
    %v2843 = vld [vmem:[#allocation14 + $0x1d30] sm:$0xff]
    %v2844 = vld [vmem:[#allocation14 + $0x1d38] sm:$0xff]
    %v2845 = vld [vmem:[#allocation14 + $0x1d40] sm:$0xff]
    %v2846 = vld [vmem:[#allocation14 + $0x1d48] sm:$0xff]
    %v2847 = vld [vmem:[#allocation14 + $0x1d50] sm:$0xff]
    %v2848 = vld [vmem:[#allocation14 + $0x1d58] sm:$0xff]
    %v2849 = vld [vmem:[#allocation14 + $0x1d60] sm:$0xff]
    %v2850 = vld [vmem:[#allocation14 + $0x1d68] sm:$0xff]
    %v2851 = vld [vmem:[#allocation14 + $0x1d70] sm:$0xff]
    %v2852 = vld [vmem:[#allocation14 + $0x1d78] sm:$0xff]
    %v2853 = vld [vmem:[#allocation14 + $0x1d80] sm:$0xff]
    %v2854 = vld [vmem:[#allocation14 + $0x1d88] sm:$0xff]
    %v2855 = vld [vmem:[#allocation14 + $0x1d90] sm:$0xff]
    %v2856 = vld [vmem:[#allocation14 + $0x1d98] sm:$0xff]
    %v2857 = vld [vmem:[#allocation14 + $0x1da0] sm:$0xff]
    %v2858 = vld [vmem:[#allocation14 + $0x1da8] sm:$0xff]
    %v2859 = vld [vmem:[#allocation14 + $0x1db0] sm:$0xff]
    %v2860 = vld [vmem:[#allocation14 + $0x1db8] sm:$0xff]
    %v2861 = vld [vmem:[#allocation14 + $0x1dc0] sm:$0xff]
    %v2862 = vld [vmem:[#allocation14 + $0x1dc8] sm:$0xff]
    %v2863 = vld [vmem:[#allocation14 + $0x1dd0] sm:$0xff]
    %v2864 = vld [vmem:[#allocation14 + $0x1dd8] sm:$0xff]
    %v2865 = vld [vmem:[#allocation14 + $0x1de0] sm:$0xff]
    %v2866 = vld [vmem:[#allocation14 + $0x1de8] sm:$0xff]
    %v2867 = vld [vmem:[#allocation14 + $0x1df0] sm:$0xff]
    %v2868 = vld [vmem:[#allocation14 + $0x1df8] sm:$0xff]
    %v2869 = vld [vmem:[#allocation14 + $0x1e00] sm:$0xff]
    %v2870 = vld [vmem:[#allocation14 + $0x1e08] sm:$0xff]
    %v2871 = vld [vmem:[#allocation14 + $0x1e10] sm:$0xff]
    %v2872 = vld [vmem:[#allocation14 + $0x1e18] sm:$0xff]
    %v2873 = vld [vmem:[#allocation14 + $0x1e20] sm:$0xff]
    %v2874 = vld [vmem:[#allocation14 + $0x1e28] sm:$0xff]
    %v2875 = vld [vmem:[#allocation14 + $0x1e30] sm:$0xff]
    %v2876 = vld [vmem:[#allocation14 + $0x1e38] sm:$0xff]
    %v2877 = vld [vmem:[#allocation14 + $0x1e40] sm:$0xff]
    %v2878 = vld [vmem:[#allocation14 + $0x1e48] sm:$0xff]
    %v2879 = vld [vmem:[#allocation14 + $0x1e50] sm:$0xff]
    %v2880 = vld [vmem:[#allocation14 + $0x1e58] sm:$0xff]
    %v2881 = vld [vmem:[#allocation14 + $0x1e60] sm:$0xff]
    %v2882 = vld [vmem:[#allocation14 + $0x1e68] sm:$0xff]
    %v2883 = vld [vmem:[#allocation14 + $0x1e70] sm:$0xff]
    %v2884 = vld [vmem:[#allocation14 + $0x1e78] sm:$0xff]
    %v2885 = vld [vmem:[#allocation14 + $0x1e80] sm:$0xff]
    %v2886 = vld [vmem:[#allocation14 + $0x1e88] sm:$0xff]
    %v2887 = vld [vmem:[#allocation14 + $0x1e90] sm:$0xff]
    %v2888 = vld [vmem:[#allocation14 + $0x1e98] sm:$0xff]
    %v2889 = vld [vmem:[#allocation14 + $0x1ea0] sm:$0xff]
    %v2890 = vld [vmem:[#allocation14 + $0x1ea8] sm:$0xff]
    %v2891 = vld [vmem:[#allocation14 + $0x1eb0] sm:$0xff]
    %v2892 = vld [vmem:[#allocation14 + $0x1eb8] sm:$0xff]
    %v2893 = vld [vmem:[#allocation14 + $0x1ec0] sm:$0xff]
    %v2894 = vld [vmem:[#allocation14 + $0x1ec8] sm:$0xff]
    %v2895 = vld [vmem:[#allocation14 + $0x1ed0] sm:$0xff]
    %v2896 = vld [vmem:[#allocation14 + $0x1ed8] sm:$0xff]
    %v2897 = vld [vmem:[#allocation14 + $0x1ee0] sm:$0xff]
    %v2898 = vld [vmem:[#allocation14 + $0x1ee8] sm:$0xff]
    %v2899 = vld [vmem:[#allocation14 + $0x1ef0] sm:$0xff]
    %v2900 = vld [vmem:[#allocation14 + $0x1ef8] sm:$0xff]
    %v2901 = vld [vmem:[#allocation14 + $0x1f00] sm:$0xff]
    %v2902 = vld [vmem:[#allocation14 + $0x1f08] sm:$0xff]
    %v2903 = vld [vmem:[#allocation14 + $0x1f10] sm:$0xff]
    %v2904 = vld [vmem:[#allocation14 + $0x1f18] sm:$0xff]
    %v2905 = vld [vmem:[#allocation14 + $0x1f20] sm:$0xff]
    %v2906 = vld [vmem:[#allocation14 + $0x1f28] sm:$0xff]
    %v2907 = vld [vmem:[#allocation14 + $0x1f30] sm:$0xff]
    %v2908 = vld [vmem:[#allocation14 + $0x1f38] sm:$0xff]
    %v2909 = vld [vmem:[#allocation14 + $0x1f40] sm:$0xff]
    %v2910 = vld [vmem:[#allocation14 + $0x1f48] sm:$0xff]
    %v2911 = vld [vmem:[#allocation14 + $0x1f50] sm:$0xff]
    %v2912 = vld [vmem:[#allocation14 + $0x1f58] sm:$0xff]
    %v2913 = vld [vmem:[#allocation14 + $0x1f60] sm:$0xff]
    %v2914 = vld [vmem:[#allocation14 + $0x1f68] sm:$0xff]
    %v2915 = vld [vmem:[#allocation14 + $0x1f70] sm:$0xff]
    %v2916 = vld [vmem:[#allocation14 + $0x1f78] sm:$0xff]
    %v2917 = vld [vmem:[#allocation14 + $0x1f80] sm:$0xff]
    %v2918 = vld [vmem:[#allocation14 + $0x1f88] sm:$0xff]
    %v2919 = vld [vmem:[#allocation14 + $0x1f90] sm:$0xff]
    %v2920 = vld [vmem:[#allocation14 + $0x1f98] sm:$0xff]
    %v2921 = vld [vmem:[#allocation14 + $0x1fa0] sm:$0xff]
    %v2922 = vld [vmem:[#allocation14 + $0x1fa8] sm:$0xff]
    %v2923 = vld [vmem:[#allocation14 + $0x1fb0] sm:$0xff]
    %v2924 = vld [vmem:[#allocation14 + $0x1fb8] sm:$0xff]
    %v2925 = vld [vmem:[#allocation14 + $0x1fc0] sm:$0xff]
    %v2926 = vld [vmem:[#allocation14 + $0x1fc8] sm:$0xff]
    %v2927 = vld [vmem:[#allocation14 + $0x1fd0] sm:$0xff]
    %v2928 = vld [vmem:[#allocation14 + $0x1fd8] sm:$0xff]
    %v2929 = vld [vmem:[#allocation14 + $0x1fe0] sm:$0xff]
    %v2930 = vld [vmem:[#allocation14 + $0x1fe8] sm:$0xff]
    %v2931 = vld [vmem:[#allocation14 + $0x1ff0] sm:$0xff]
    %v2932 = vld [vmem:[#allocation14 + $0x1ff8] sm:$0xff]
    %v2933 = vld [vmem:[#allocation16] sm:$0xff]
    %v2935 = vlaneseq
    %v2936 = vshrl.u32 %v2935, 7
    %v2937 = vsub.s32 0, %v2936
    %v2938 = vrot.slane %v2933, %v2937
    %v2939 = vlaneseq
    %v2940 = vshrl.u32 %v2939, 7
    %v2941 = vsub.s32 1, %v2940
    %v2942 = vrot.slane %v2933, %v2941
    %v2943 = vlaneseq
    %v2944 = vshrl.u32 %v2943, 7
    %v2945 = vsub.s32 2, %v2944
    %v2946 = vrot.slane %v2933, %v2945
    %v2947 = vlaneseq
    %v2948 = vshrl.u32 %v2947, 7
    %v2949 = vsub.s32 3, %v2948
    %v2950 = vrot.slane %v2933, %v2949
    %v2951 = vlaneseq
    %v2952 = vshrl.u32 %v2951, 7
    %v2953 = vsub.s32 4, %v2952
    %v2954 = vrot.slane %v2933, %v2953
    %v2955 = vlaneseq
    %v2956 = vshrl.u32 %v2955, 7
    %v2957 = vsub.s32 5, %v2956
    %v2958 = vrot.slane %v2933, %v2957
    %v2959 = vlaneseq
    %v2960 = vshrl.u32 %v2959, 7
    %v2961 = vsub.s32 6, %v2960
    %v2962 = vrot.slane %v2933, %v2961
    %v2963 = vlaneseq
    %v2964 = vshrl.u32 %v2963, 7
    %v2965 = vsub.s32 7, %v2964
    %v2966 = vrot.slane %v2933, %v2965
    %2975 = vmatprep.subr.mxu0 %v1910
    %2976 = vmatpush1.msra.mxu0 %v1909
    %2977 = vmatprep.subr.mxu0 %v1918
    %2978 = vmatpush1.msra.mxu0 %v1917
    %2979 = vmatprep.subr.mxu0 %v1926
    %2980 = vmatpush1.msra.mxu0 %v1925
    %2981 = vmatprep.subr.mxu0 %v1934
    %2982 = vmatpush1.msra.mxu0 %v1933
    %2983 = vmatprep.subr.mxu0 %v1942
    %2984 = vmatpush1.msra.mxu0 %v1941
    %2985 = vmatprep.subr.mxu0 %v1950
    %2986 = vmatpush1.msra.mxu0 %v1949
    %2987 = vmatprep.subr.mxu0 %v1958
    %2988 = vmatpush1.msra.mxu0 %v1957
    %2989 = vmatprep.subr.mxu0 %v1966
    %2990 = vmatpush1.msra.mxu0 %v1965
    %2991 = vmatprep.subr.mxu0 %v1974
    %2992 = vmatpush1.msra.mxu0 %v1973
    %2993 = vmatprep.subr.mxu0 %v1982
    %2994 = vmatpush1.msra.mxu0 %v1981
    %2995 = vmatprep.subr.mxu0 %v1990
    %2996 = vmatpush1.msra.mxu0 %v1989
    %2997 = vmatprep.subr.mxu0 %v1998
    %2998 = vmatpush1.msra.mxu0 %v1997
    %2999 = vmatprep.subr.mxu0 %v2006
    %3000 = vmatpush1.msra.mxu0 %v2005
    %3001 = vmatprep.subr.mxu0 %v2014
    %3002 = vmatpush1.msra.mxu0 %v2013
    %3003 = vmatprep.subr.mxu0 %v2022
    %3004 = vmatpush1.msra.mxu0 %v2021
    %3005 = vmatprep.subr.mxu0 %v2030
    %3006 = vmatpush1.msra.mxu0 %v2029
    %3007 = vmatprep.subr.mxu0 %v2038
    %3008 = vmatpush1.msra.mxu0 %v2037
    %3009 = vmatprep.subr.mxu0 %v2046
    %3010 = vmatpush1.msra.mxu0 %v2045
    %3011 = vmatprep.subr.mxu0 %v2054
    %3012 = vmatpush1.msra.mxu0 %v2053
    %3013 = vmatprep.subr.mxu0 %v2062
    %3014 = vmatpush1.msra.mxu0 %v2061
    %3015 = vmatprep.subr.mxu0 %v2070
    %3016 = vmatpush1.msra.mxu0 %v2069
    %3017 = vmatprep.subr.mxu0 %v2078
    %3018 = vmatpush1.msra.mxu0 %v2077
    %3019 = vmatprep.subr.mxu0 %v2086
    %3020 = vmatpush1.msra.mxu0 %v2085
    %3021 = vmatprep.subr.mxu0 %v2094
    %3022 = vmatpush1.msra.mxu0 %v2093
    %3023 = vmatprep.subr.mxu0 %v2102
    %3024 = vmatpush1.msra.mxu0 %v2101
    %3025 = vmatprep.subr.mxu0 %v2110
    %3026 = vmatpush1.msra.mxu0 %v2109
    %3027 = vmatprep.subr.mxu0 %v2118
    %3028 = vmatpush1.msra.mxu0 %v2117
    %3029 = vmatprep.subr.mxu0 %v2126
    %3030 = vmatpush1.msra.mxu0 %v2125
    %3031 = vmatprep.subr.mxu0 %v2134
    %3032 = vmatpush1.msra.mxu0 %v2133
    %3033 = vmatprep.subr.mxu0 %v2142
    %3034 = vmatpush1.msra.mxu0 %v2141
    %3035 = vmatprep.subr.mxu0 %v2150
    %3036 = vmatpush1.msra.mxu0 %v2149
    %3037 = vmatprep.subr.mxu0 %v2158
    %3038 = vmatpush1.msra.mxu0 %v2157
    %3039 = vmatprep.mubr.f32.mxu0 %v1894
    %3040 = vmatmul.mubr.f32.gmra.mrb[0].mxu0 %v1893
    %v3041 = vpop.f32.mrb[0].mxu0
    %v3042 = vadd.f32 %v2938, %v3041
    %v3043 = vpop.f32.mrb[0].mxu0
    %v3044 = vadd.f32 %v2942, %v3043
    %3045 = vmatprep.mubr.f32.mxu0 %v1902
    %3046 = vmatmul.mubr.f32.gmra.mrb[0].mxu0 %v1901
    %v3047 = vpop.f32.mrb[0].mxu0
    %v3048 = vadd.f32 %v2938, %v3047
    %v3049 = vpop.f32.mrb[0].mxu0
    %v3050 = vadd.f32 %v2942, %v3049
    %3051 = vdwg.mxu0
    %3052 = vmatprep.subr.mxu0 %v2166
    %3053 = vmatpush1.msra.mxu0 %v2165
    %3054 = vmatprep.subr.mxu0 %v2174
    %3055 = vmatpush1.msra.mxu0 %v2173
    %3056 = vmatprep.subr.mxu0 %v2182
    %3057 = vmatpush1.msra.mxu0 %v2181
    %3058 = vmatprep.subr.mxu0 %v2190
    %3059 = vmatpush1.msra.mxu0 %v2189
    %3060 = vmatprep.subr.mxu0 %v2198
    %3061 = vmatpush1.msra.mxu0 %v2197
    %3062 = vmatprep.subr.mxu0 %v2206
    %3063 = vmatpush1.msra.mxu0 %v2205
    %3064 = vmatprep.subr.mxu0 %v2214
    %3065 = vmatpush1.msra.mxu0 %v2213
    %3066 = vmatprep.subr.mxu0 %v2222
    %3067 = vmatpush1.msra.mxu0 %v2221
    %3068 = vmatprep.subr.mxu0 %v2230
    %3069 = vmatpush1.msra.mxu0 %v2229
    %3070 = vmatprep.subr.mxu0 %v2238
    %3071 = vmatpush1.msra.mxu0 %v2237
    %3072 = vmatprep.subr.mxu0 %v2246
    %3073 = vmatpush1.msra.mxu0 %v2245
    %3074 = vmatprep.subr.mxu0 %v2254
    %3075 = vmatpush1.msra.mxu0 %v2253
    %3076 = vmatprep.subr.mxu0 %v2262
    %3077 = vmatpush1.msra.mxu0 %v2261
    %3078 = vmatprep.subr.mxu0 %v2270
    %3079 = vmatpush1.msra.mxu0 %v2269
    %3080 = vmatprep.subr.mxu0 %v2278
    %3081 = vmatpush1.msra.mxu0 %v2277
    %3082 = vmatprep.subr.mxu0 %v2286
    %3083 = vmatpush1.msra.mxu0 %v2285
    %3084 = vmatprep.subr.mxu0 %v2294
    %3085 = vmatpush1.msra.mxu0 %v2293
    %3086 = vmatprep.subr.mxu0 %v2302
    %3087 = vmatpush1.msra.mxu0 %v2301
    %3088 = vmatprep.subr.mxu0 %v2310
    %3089 = vmatpush1.msra.mxu0 %v2309
    %3090 = vmatprep.subr.mxu0 %v2318
    %3091 = vmatpush1.msra.mxu0 %v2317
    %3092 = vmatprep.subr.mxu0 %v2326
    %3093 = vmatpush1.msra.mxu0 %v2325
    %3094 = vmatprep.subr.mxu0 %v2334
    %3095 = vmatpush1.msra.mxu0 %v2333
    %3096 = vmatprep.subr.mxu0 %v2342
    %3097 = vmatpush1.msra.mxu0 %v2341
    %3098 = vmatprep.subr.mxu0 %v2350
    %3099 = vmatpush1.msra.mxu0 %v2349
    %3100 = vmatprep.subr.mxu0 %v2358
    %3101 = vmatpush1.msra.mxu0 %v2357
    %3102 = vmatprep.subr.mxu0 %v2366
    %3103 = vmatpush1.msra.mxu0 %v2365
    %3104 = vmatprep.subr.mxu0 %v2374
    %3105 = vmatpush1.msra.mxu0 %v2373
    %3106 = vmatprep.subr.mxu0 %v2382
    %3107 = vmatpush1.msra.mxu0 %v2381
    %3108 = vmatprep.subr.mxu0 %v2390
    %3109 = vmatpush1.msra.mxu0 %v2389
    %3110 = vmatprep.subr.mxu0 %v2398
    %3111 = vmatpush1.msra.mxu0 %v2397
    %3112 = vmatprep.subr.mxu0 %v2406
    %3113 = vmatpush1.msra.mxu0 %v2405
    %3114 = vmatprep.subr.mxu0 %v2414
    %3115 = vmatpush1.msra.mxu0 %v2413
    %3116 = vmatprep.mubr.f32.mxu0 %v1896
    %3117 = vmatmul.mubr.f32.gmra.mrb[0].mxu0 %v1895
    %v3118 = vpop.f32.mrb[0].mxu0
    %v3119 = vadd.f32 %v3042, %v3118
    %v3120 = vpop.f32.mrb[0].mxu0
    %v3121 = vadd.f32 %v3044, %v3120
    %3122 = vmatprep.mubr.f32.mxu0 %v1904
    %3123 = vmatmul.mubr.f32.gmra.mrb[0].mxu0 %v1903
    %v3124 = vpop.f32.mrb[0].mxu0
    %v3125 = vadd.f32 %v3048, %v3124
    %v3126 = vpop.f32.mrb[0].mxu0
    %v3127 = vadd.f32 %v3050, %v3126
    %3128 = vdwg.mxu0
    %3129 = vmatprep.subr.mxu0 %v2422
    %3130 = vmatpush1.msra.mxu0 %v2421
    %3131 = vmatprep.subr.mxu0 %v2430
    %3132 = vmatpush1.msra.mxu0 %v2429
    %3133 = vmatprep.subr.mxu0 %v2438
    %3134 = vmatpush1.msra.mxu0 %v2437
    %3135 = vmatprep.subr.mxu0 %v2446
    %3136 = vmatpush1.msra.mxu0 %v2445
    %3137 = vmatprep.subr.mxu0 %v2454
    %3138 = vmatpush1.msra.mxu0 %v2453
    %3139 = vmatprep.subr.mxu0 %v2462
    %3140 = vmatpush1.msra.mxu0 %v2461
    %3141 = vmatprep.subr.mxu0 %v2470
    %3142 = vmatpush1.msra.mxu0 %v2469
    %3143 = vmatprep.subr.mxu0 %v2478
    %3144 = vmatpush1.msra.mxu0 %v2477
    %3145 = vmatprep.subr.mxu0 %v2486
    %3146 = vmatpush1.msra.mxu0 %v2485
    %3147 = vmatprep.subr.mxu0 %v2494
    %3148 = vmatpush1.msra.mxu0 %v2493
    %3149 = vmatprep.subr.mxu0 %v2502
    %3150 = vmatpush1.msra.mxu0 %v2501
    %3151 = vmatprep.subr.mxu0 %v2510
    %3152 = vmatpush1.msra.mxu0 %v2509
    %3153 = vmatprep.subr.mxu0 %v2518
    %3154 = vmatpush1.msra.mxu0 %v2517
    %3155 = vmatprep.subr.mxu0 %v2526
    %3156 = vmatpush1.msra.mxu0 %v2525
    %3157 = vmatprep.subr.mxu0 %v2534
    %3158 = vmatpush1.msra.mxu0 %v2533
    %3159 = vmatprep.subr.mxu0 %v2542
    %3160 = vmatpush1.msra.mxu0 %v2541
    %3161 = vmatprep.subr.mxu0 %v2550
    %3162 = vmatpush1.msra.mxu0 %v2549
    %3163 = vmatprep.subr.mxu0 %v2558
    %3164 = vmatpush1.msra.mxu0 %v2557
    %3165 = vmatprep.subr.mxu0 %v2566
    %3166 = vmatpush1.msra.mxu0 %v2565
    %3167 = vmatprep.subr.mxu0 %v2574
    %3168 = vmatpush1.msra.mxu0 %v2573
    %3169 = vmatprep.subr.mxu0 %v2582
    %3170 = vmatpush1.msra.mxu0 %v2581
    %3171 = vmatprep.subr.mxu0 %v2590
    %3172 = vmatpush1.msra.mxu0 %v2589
    %3173 = vmatprep.subr.mxu0 %v2598
    %3174 = vmatpush1.msra.mxu0 %v2597
    %3175 = vmatprep.subr.mxu0 %v2606
    %3176 = vmatpush1.msra.mxu0 %v2605
    %3177 = vmatprep.subr.mxu0 %v2614
    %3178 = vmatpush1.msra.mxu0 %v2613
    %3179 = vmatprep.subr.mxu0 %v2622
    %3180 = vmatpush1.msra.mxu0 %v2621
    %3181 = vmatprep.subr.mxu0 %v2630
    %3182 = vmatpush1.msra.mxu0 %v2629
    %3183 = vmatprep.subr.mxu0 %v2638
    %3184 = vmatpush1.msra.mxu0 %v2637
    %3185 = vmatprep.subr.mxu0 %v2646
    %3186 = vmatpush1.msra.mxu0 %v2645
    %3187 = vmatprep.subr.mxu0 %v2654
    %3188 = vmatpush1.msra.mxu0 %v2653
    %3189 = vmatprep.subr.mxu0 %v2662
    %3190 = vmatpush1.msra.mxu0 %v2661
    %3191 = vmatprep.subr.mxu0 %v2670
    %3192 = vmatpush1.msra.mxu0 %v2669
    %3193 = vmatprep.mubr.f32.mxu0 %v1898
    %3194 = vmatmul.mubr.f32.gmra.mrb[0].mxu0 %v1897
    %v3195 = vpop.f32.mrb[0].mxu0
    %v3196 = vadd.f32 %v3119, %v3195
    %v3197 = vpop.f32.mrb[0].mxu0
    %v3198 = vadd.f32 %v3121, %v3197
    %3199 = vmatprep.mubr.f32.mxu0 %v1906
    %3200 = vmatmul.mubr.f32.gmra.mrb[0].mxu0 %v1905
    %v3201 = vpop.f32.mrb[0].mxu0
    %v3202 = vadd.f32 %v3125, %v3201
    %v3203 = vpop.f32.mrb[0].mxu0
    %v3204 = vadd.f32 %v3127, %v3203
    %3205 = vdwg.mxu0
    %3206 = vmatprep.subr.mxu0 %v2678
    %3207 = vmatpush1.msra.mxu0 %v2677
    %3208 = vmatprep.subr.mxu0 %v2686
    %3209 = vmatpush1.msra.mxu0 %v2685
    %3210 = vmatprep.subr.mxu0 %v2694
    %3211 = vmatpush1.msra.mxu0 %v2693
    %3212 = vmatprep.subr.mxu0 %v2702
    %3213 = vmatpush1.msra.mxu0 %v2701
    %3214 = vmatprep.subr.mxu0 %v2710
    %3215 = vmatpush1.msra.mxu0 %v2709
    %3216 = vmatprep.subr.mxu0 %v2718
    %3217 = vmatpush1.msra.mxu0 %v2717
    %3218 = vmatprep.subr.mxu0 %v2726
    %3219 = vmatpush1.msra.mxu0 %v2725
    %3220 = vmatprep.subr.mxu0 %v2734
    %3221 = vmatpush1.msra.mxu0 %v2733
    %3222 = vmatprep.subr.mxu0 %v2742
    %3223 = vmatpush1.msra.mxu0 %v2741
    %3224 = vmatprep.subr.mxu0 %v2750
    %3225 = vmatpush1.msra.mxu0 %v2749
    %3226 = vmatprep.subr.mxu0 %v2758
    %3227 = vmatpush1.msra.mxu0 %v2757
    %3228 = vmatprep.subr.mxu0 %v2766
    %3229 = vmatpush1.msra.mxu0 %v2765
    %3230 = vmatprep.subr.mxu0 %v2774
    %3231 = vmatpush1.msra.mxu0 %v2773
    %3232 = vmatprep.subr.mxu0 %v2782
    %3233 = vmatpush1.msra.mxu0 %v2781
    %3234 = vmatprep.subr.mxu0 %v2790
    %3235 = vmatpush1.msra.mxu0 %v2789
    %3236 = vmatprep.subr.mxu0 %v2798
    %3237 = vmatpush1.msra.mxu0 %v2797
    %3238 = vmatprep.subr.mxu0 %v2806
    %3239 = vmatpush1.msra.mxu0 %v2805
    %3240 = vmatprep.subr.mxu0 %v2814
    %3241 = vmatpush1.msra.mxu0 %v2813
    %3242 = vmatprep.subr.mxu0 %v2822
    %3243 = vmatpush1.msra.mxu0 %v2821
    %3244 = vmatprep.subr.mxu0 %v2830
    %3245 = vmatpush1.msra.mxu0 %v2829
    %3246 = vmatprep.subr.mxu0 %v2838
    %3247 = vmatpush1.msra.mxu0 %v2837
    %3248 = vmatprep.subr.mxu0 %v2846
    %3249 = vmatpush1.msra.mxu0 %v2845
    %3250 = vmatprep.subr.mxu0 %v2854
    %3251 = vmatpush1.msra.mxu0 %v2853
    %3252 = vmatprep.subr.mxu0 %v2862
    %3253 = vmatpush1.msra.mxu0 %v2861
    %3254 = vmatprep.subr.mxu0 %v2870
    %3255 = vmatpush1.msra.mxu0 %v2869
    %3256 = vmatprep.subr.mxu0 %v2878
    %3257 = vmatpush1.msra.mxu0 %v2877
    %3258 = vmatprep.subr.mxu0 %v2886
    %3259 = vmatpush1.msra.mxu0 %v2885
    %3260 = vmatprep.subr.mxu0 %v2894
    %3261 = vmatpush1.msra.mxu0 %v2893
    %3262 = vmatprep.subr.mxu0 %v2902
    %3263 = vmatpush1.msra.mxu0 %v2901
    %3264 = vmatprep.subr.mxu0 %v2910
    %3265 = vmatpush1.msra.mxu0 %v2909
    %3266 = vmatprep.subr.mxu0 %v2918
    %3267 = vmatpush1.msra.mxu0 %v2917
    %3268 = vmatprep.subr.mxu0 %v2926
    %3269 = vmatpush1.msra.mxu0 %v2925
    %3270 = vmatprep.mubr.f32.mxu0 %v1900
    %3271 = vmatmul.mubr.f32.gmra.mrb[0].mxu0 %v1899
    %v3272 = vpop.f32.mrb[0].mxu0
    %v3273 = vadd.f32 %v3196, %v3272
    %v3274 = vpop.f32.mrb[0].mxu0
    %v3275 = vadd.f32 %v3198, %v3274
    %3276 = vmatprep.mubr.f32.mxu0 %v1908
    %3277 = vmatmul.mubr.f32.gmra.mrb[0].mxu0 %v1907
    %v3278 = vpop.f32.mrb[0].mxu0
    %v3279 = vadd.f32 %v3202, %v3278
    %v3280 = vpop.f32.mrb[0].mxu0
    %v3281 = vadd.f32 %v3204, %v3280
    %3282 = vdwg.mxu0
    %3283 = vmatprep.subr.mxu0 %v1912
    %3284 = vmatpush1.msra.mxu0 %v1911
    %3285 = vmatprep.subr.mxu0 %v1920
    %3286 = vmatpush1.msra.mxu0 %v1919
    %3287 = vmatprep.subr.mxu0 %v1928
    %3288 = vmatpush1.msra.mxu0 %v1927
    %3289 = vmatprep.subr.mxu0 %v1936
    %3290 = vmatpush1.msra.mxu0 %v1935
    %3291 = vmatprep.subr.mxu0 %v1944
    %3292 = vmatpush1.msra.mxu0 %v1943
    %3293 = vmatprep.subr.mxu0 %v1952
    %3294 = vmatpush1.msra.mxu0 %v1951
    %3295 = vmatprep.subr.mxu0 %v1960
    %3296 = vmatpush1.msra.mxu0 %v1959
    %3297 = vmatprep.subr.mxu0 %v1968
    %3298 = vmatpush1.msra.mxu0 %v1967
    %3299 = vmatprep.subr.mxu0 %v1976
    %3300 = vmatpush1.msra.mxu0 %v1975
    %3301 = vmatprep.subr.mxu0 %v1984
    %3302 = vmatpush1.msra.mxu0 %v1983
    %3303 = vmatprep.subr.mxu0 %v1992
    %3304 = vmatpush1.msra.mxu0 %v1991
    %3305 = vmatprep.subr.mxu0 %v2000
    %3306 = vmatpush1.msra.mxu0 %v1999
    %3307 = vmatprep.subr.mxu0 %v2008
    %3308 = vmatpush1.msra.mxu0 %v2007
    %3309 = vmatprep.subr.mxu0 %v2016
    %3310 = vmatpush1.msra.mxu0 %v2015
    %3311 = vmatprep.subr.mxu0 %v2024
    %3312 = vmatpush1.msra.mxu0 %v2023
    %3313 = vmatprep.subr.mxu0 %v2032
    %3314 = vmatpush1.msra.mxu0 %v2031
    %3315 = vmatprep.subr.mxu0 %v2040
    %3316 = vmatpush1.msra.mxu0 %v2039
    %3317 = vmatprep.subr.mxu0 %v2048
    %3318 = vmatpush1.msra.mxu0 %v2047
    %3319 = vmatprep.subr.mxu0 %v2056
    %3320 = vmatpush1.msra.mxu0 %v2055
    %3321 = vmatprep.subr.mxu0 %v2064
    %3322 = vmatpush1.msra.mxu0 %v2063
    %3323 = vmatprep.subr.mxu0 %v2072
    %3324 = vmatpush1.msra.mxu0 %v2071
    %3325 = vmatprep.subr.mxu0 %v2080
    %3326 = vmatpush1.msra.mxu0 %v2079
    %3327 = vmatprep.subr.mxu0 %v2088
    %3328 = vmatpush1.msra.mxu0 %v2087
    %3329 = vmatprep.subr.mxu0 %v2096
    %3330 = vmatpush1.msra.mxu0 %v2095
    %3331 = vmatprep.subr.mxu0 %v2104
    %3332 = vmatpush1.msra.mxu0 %v2103
    %3333 = vmatprep.subr.mxu0 %v2112
    %3334 = vmatpush1.msra.mxu0 %v2111
    %3335 = vmatprep.subr.mxu0 %v2120
    %3336 = vmatpush1.msra.mxu0 %v2119
    %3337 = vmatprep.subr.mxu0 %v2128
    %3338 = vmatpush1.msra.mxu0 %v2127
    %3339 = vmatprep.subr.mxu0 %v2136
    %3340 = vmatpush1.msra.mxu0 %v2135
    %3341 = vmatprep.subr.mxu0 %v2144
    %3342 = vmatpush1.msra.mxu0 %v2143
    %3343 = vmatprep.subr.mxu0 %v2152
    %3344 = vmatpush1.msra.mxu0 %v2151
    %3345 = vmatprep.subr.mxu0 %v2160
    %3346 = vmatpush1.msra.mxu0 %v2159
    %3347 = vmatprep.mubr.f32.mxu0 %v1894
    %3348 = vmatmul.mubr.f32.gmra.mrb[0].mxu0 %v1893
    %v3349 = vpop.f32.mrb[0].mxu0
    %v3350 = vadd.f32 %v2946, %v3349
    %v3351 = vpop.f32.mrb[0].mxu0
    %v3352 = vadd.f32 %v2950, %v3351
    %3353 = vmatprep.mubr.f32.mxu0 %v1902
    %3354 = vmatmul.mubr.f32.gmra.mrb[0].mxu0 %v1901
    %v3355 = vpop.f32.mrb[0].mxu0
    %v3356 = vadd.f32 %v2946, %v3355
    %v3357 = vpop.f32.mrb[0].mxu0
    %v3358 = vadd.f32 %v2950, %v3357
    %3359 = vdwg.mxu0
    %3360 = vmatprep.subr.mxu0 %v2168
    %3361 = vmatpush1.msra.mxu0 %v2167
    %3362 = vmatprep.subr.mxu0 %v2176
    %3363 = vmatpush1.msra.mxu0 %v2175
    %3364 = vmatprep.subr.mxu0 %v2184
    %3365 = vmatpush1.msra.mxu0 %v2183
    %3366 = vmatprep.subr.mxu0 %v2192
    %3367 = vmatpush1.msra.mxu0 %v2191
    %3368 = vmatprep.subr.mxu0 %v2200
    %3369 = vmatpush1.msra.mxu0 %v2199
    %3370 = vmatprep.subr.mxu0 %v2208
    %3371 = vmatpush1.msra.mxu0 %v2207
    %3372 = vmatprep.subr.mxu0 %v2216
    %3373 = vmatpush1.msra.mxu0 %v2215
    %3374 = vmatprep.subr.mxu0 %v2224
    %3375 = vmatpush1.msra.mxu0 %v2223
    %3376 = vmatprep.subr.mxu0 %v2232
    %3377 = vmatpush1.msra.mxu0 %v2231
    %3378 = vmatprep.subr.mxu0 %v2240
    %3379 = vmatpush1.msra.mxu0 %v2239
    %3380 = vmatprep.subr.mxu0 %v2248
    %3381 = vmatpush1.msra.mxu0 %v2247
    %3382 = vmatprep.subr.mxu0 %v2256
    %3383 = vmatpush1.msra.mxu0 %v2255
    %3384 = vmatprep.subr.mxu0 %v2264
    %3385 = vmatpush1.msra.mxu0 %v2263
    %3386 = vmatprep.subr.mxu0 %v2272
    %3387 = vmatpush1.msra.mxu0 %v2271
    %3388 = vmatprep.subr.mxu0 %v2280
    %3389 = vmatpush1.msra.mxu0 %v2279
    %3390 = vmatprep.subr.mxu0 %v2288
    %3391 = vmatpush1.msra.mxu0 %v2287
    %3392 = vmatprep.subr.mxu0 %v2296
    %3393 = vmatpush1.msra.mxu0 %v2295
    %3394 = vmatprep.subr.mxu0 %v2304
    %3395 = vmatpush1.msra.mxu0 %v2303
    %3396 = vmatprep.subr.mxu0 %v2312
    %3397 = vmatpush1.msra.mxu0 %v2311
    %3398 = vmatprep.subr.mxu0 %v2320
    %3399 = vmatpush1.msra.mxu0 %v2319
    %3400 = vmatprep.subr.mxu0 %v2328
    %3401 = vmatpush1.msra.mxu0 %v2327
    %3402 = vmatprep.subr.mxu0 %v2336
    %3403 = vmatpush1.msra.mxu0 %v2335
    %3404 = vmatprep.subr.mxu0 %v2344
    %3405 = vmatpush1.msra.mxu0 %v2343
    %3406 = vmatprep.subr.mxu0 %v2352
    %3407 = vmatpush1.msra.mxu0 %v2351
    %3408 = vmatprep.subr.mxu0 %v2360
    %3409 = vmatpush1.msra.mxu0 %v2359
    %3410 = vmatprep.subr.mxu0 %v2368
    %3411 = vmatpush1.msra.mxu0 %v2367
    %3412 = vmatprep.subr.mxu0 %v2376
    %3413 = vmatpush1.msra.mxu0 %v2375
    %3414 = vmatprep.subr.mxu0 %v2384
    %3415 = vmatpush1.msra.mxu0 %v2383
    %3416 = vmatprep.subr.mxu0 %v2392
    %3417 = vmatpush1.msra.mxu0 %v2391
    %3418 = vmatprep.subr.mxu0 %v2400
    %3419 = vmatpush1.msra.mxu0 %v2399
    %3420 = vmatprep.subr.mxu0 %v2408
    %3421 = vmatpush1.msra.mxu0 %v2407
    %3422 = vmatprep.subr.mxu0 %v2416
    %3423 = vmatpush1.msra.mxu0 %v2415
    %3424 = vmatprep.mubr.f32.mxu0 %v1896
    %3425 = vmatmul.mubr.f32.gmra.mrb[0].mxu0 %v1895
    %v3426 = vpop.f32.mrb[0].mxu0
    %v3427 = vadd.f32 %v3350, %v3426
    %v3428 = vpop.f32.mrb[0].mxu0
    %v3429 = vadd.f32 %v3352, %v3428
    %3430 = vmatprep.mubr.f32.mxu0 %v1904
    %3431 = vmatmul.mubr.f32.gmra.mrb[0].mxu0 %v1903
    %v3432 = vpop.f32.mrb[0].mxu0
    %v3433 = vadd.f32 %v3356, %v3432
    %v3434 = vpop.f32.mrb[0].mxu0
    %v3435 = vadd.f32 %v3358, %v3434
    %3436 = vdwg.mxu0
    %3437 = vmatprep.subr.mxu0 %v2424
    %3438 = vmatpush1.msra.mxu0 %v2423
    %3439 = vmatprep.subr.mxu0 %v2432
    %3440 = vmatpush1.msra.mxu0 %v2431
    %3441 = vmatprep.subr.mxu0 %v2440
    %3442 = vmatpush1.msra.mxu0 %v2439
    %3443 = vmatprep.subr.mxu0 %v2448
    %3444 = vmatpush1.msra.mxu0 %v2447
    %3445 = vmatprep.subr.mxu0 %v2456
    %3446 = vmatpush1.msra.mxu0 %v2455
    %3447 = vmatprep.subr.mxu0 %v2464
    %3448 = vmatpush1.msra.mxu0 %v2463
    %3449 = vmatprep.subr.mxu0 %v2472
    %3450 = vmatpush1.msra.mxu0 %v2471
    %3451 = vmatprep.subr.mxu0 %v2480
    %3452 = vmatpush1.msra.mxu0 %v2479
    %3453 = vmatprep.subr.mxu0 %v2488
    %3454 = vmatpush1.msra.mxu0 %v2487
    %3455 = vmatprep.subr.mxu0 %v2496
    %3456 = vmatpush1.msra.mxu0 %v2495
    %3457 = vmatprep.subr.mxu0 %v2504
    %3458 = vmatpush1.msra.mxu0 %v2503
    %3459 = vmatprep.subr.mxu0 %v2512
    %3460 = vmatpush1.msra.mxu0 %v2511
    %3461 = vmatprep.subr.mxu0 %v2520
    %3462 = vmatpush1.msra.mxu0 %v2519
    %3463 = vmatprep.subr.mxu0 %v2528
    %3464 = vmatpush1.msra.mxu0 %v2527
    %3465 = vmatprep.subr.mxu0 %v2536
    %3466 = vmatpush1.msra.mxu0 %v2535
    %3467 = vmatprep.subr.mxu0 %v2544
    %3468 = vmatpush1.msra.mxu0 %v2543
    %3469 = vmatprep.subr.mxu0 %v2552
    %3470 = vmatpush1.msra.mxu0 %v2551
    %3471 = vmatprep.subr.mxu0 %v2560
    %3472 = vmatpush1.msra.mxu0 %v2559
    %3473 = vmatprep.subr.mxu0 %v2568
    %3474 = vmatpush1.msra.mxu0 %v2567
    %3475 = vmatprep.subr.mxu0 %v2576
    %3476 = vmatpush1.msra.mxu0 %v2575
    %3477 = vmatprep.subr.mxu0 %v2584
    %3478 = vmatpush1.msra.mxu0 %v2583
    %3479 = vmatprep.subr.mxu0 %v2592
    %3480 = vmatpush1.msra.mxu0 %v2591
    %3481 = vmatprep.subr.mxu0 %v2600
    %3482 = vmatpush1.msra.mxu0 %v2599
    %3483 = vmatprep.subr.mxu0 %v2608
    %3484 = vmatpush1.msra.mxu0 %v2607
    %3485 = vmatprep.subr.mxu0 %v2616
    %3486 = vmatpush1.msra.mxu0 %v2615
    %3487 = vmatprep.subr.mxu0 %v2624
    %3488 = vmatpush1.msra.mxu0 %v2623
    %3489 = vmatprep.subr.mxu0 %v2632
    %3490 = vmatpush1.msra.mxu0 %v2631
    %3491 = vmatprep.subr.mxu0 %v2640
    %3492 = vmatpush1.msra.mxu0 %v2639
    %3493 = vmatprep.subr.mxu0 %v2648
    %3494 = vmatpush1.msra.mxu0 %v2647
    %3495 = vmatprep.subr.mxu0 %v2656
    %3496 = vmatpush1.msra.mxu0 %v2655
    %3497 = vmatprep.subr.mxu0 %v2664
    %3498 = vmatpush1.msra.mxu0 %v2663
    %3499 = vmatprep.subr.mxu0 %v2672
    %3500 = vmatpush1.msra.mxu0 %v2671
    %3501 = vmatprep.mubr.f32.mxu0 %v1898
    %3502 = vmatmul.mubr.f32.gmra.mrb[0].mxu0 %v1897
    %v3503 = vpop.f32.mrb[0].mxu0
    %v3504 = vadd.f32 %v3427, %v3503
    %v3505 = vpop.f32.mrb[0].mxu0
    %v3506 = vadd.f32 %v3429, %v3505
    %3507 = vmatprep.mubr.f32.mxu0 %v1906
    %3508 = vmatmul.mubr.f32.gmra.mrb[0].mxu0 %v1905
    %v3509 = vpop.f32.mrb[0].mxu0
    %v3510 = vadd.f32 %v3433, %v3509
    %v3511 = vpop.f32.mrb[0].mxu0
    %v3512 = vadd.f32 %v3435, %v3511
    %3513 = vdwg.mxu0
    %3514 = vmatprep.subr.mxu0 %v2680
    %3515 = vmatpush1.msra.mxu0 %v2679
    %3516 = vmatprep.subr.mxu0 %v2688
    %3517 = vmatpush1.msra.mxu0 %v2687
    %3518 = vmatprep.subr.mxu0 %v2696
    %3519 = vmatpush1.msra.mxu0 %v2695
    %3520 = vmatprep.subr.mxu0 %v2704
    %3521 = vmatpush1.msra.mxu0 %v2703
    %3522 = vmatprep.subr.mxu0 %v2712
    %3523 = vmatpush1.msra.mxu0 %v2711
    %3524 = vmatprep.subr.mxu0 %v2720
    %3525 = vmatpush1.msra.mxu0 %v2719
    %3526 = vmatprep.subr.mxu0 %v2728
    %3527 = vmatpush1.msra.mxu0 %v2727
    %3528 = vmatprep.subr.mxu0 %v2736
    %3529 = vmatpush1.msra.mxu0 %v2735
    %3530 = vmatprep.subr.mxu0 %v2744
    %3531 = vmatpush1.msra.mxu0 %v2743
    %3532 = vmatprep.subr.mxu0 %v2752
    %3533 = vmatpush1.msra.mxu0 %v2751
    %3534 = vmatprep.subr.mxu0 %v2760
    %3535 = vmatpush1.msra.mxu0 %v2759
    %3536 = vmatprep.subr.mxu0 %v2768
    %3537 = vmatpush1.msra.mxu0 %v2767
    %3538 = vmatprep.subr.mxu0 %v2776
    %3539 = vmatpush1.msra.mxu0 %v2775
    %3540 = vmatprep.subr.mxu0 %v2784
    %3541 = vmatpush1.msra.mxu0 %v2783
    %3542 = vmatprep.subr.mxu0 %v2792
    %3543 = vmatpush1.msra.mxu0 %v2791
    %3544 = vmatprep.subr.mxu0 %v2800
    %3545 = vmatpush1.msra.mxu0 %v2799
    %3546 = vmatprep.subr.mxu0 %v2808
    %3547 = vmatpush1.msra.mxu0 %v2807
    %3548 = vmatprep.subr.mxu0 %v2816
    %3549 = vmatpush1.msra.mxu0 %v2815
    %3550 = vmatprep.subr.mxu0 %v2824
    %3551 = vmatpush1.msra.mxu0 %v2823
    %3552 = vmatprep.subr.mxu0 %v2832
    %3553 = vmatpush1.msra.mxu0 %v2831
    %3554 = vmatprep.subr.mxu0 %v2840
    %3555 = vmatpush1.msra.mxu0 %v2839
    %3556 = vmatprep.subr.mxu0 %v2848
    %3557 = vmatpush1.msra.mxu0 %v2847
    %3558 = vmatprep.subr.mxu0 %v2856
    %3559 = vmatpush1.msra.mxu0 %v2855
    %3560 = vmatprep.subr.mxu0 %v2864
    %3561 = vmatpush1.msra.mxu0 %v2863
    %3562 = vmatprep.subr.mxu0 %v2872
    %3563 = vmatpush1.msra.mxu0 %v2871
    %3564 = vmatprep.subr.mxu0 %v2880
    %3565 = vmatpush1.msra.mxu0 %v2879
    %3566 = vmatprep.subr.mxu0 %v2888
    %3567 = vmatpush1.msra.mxu0 %v2887
    %3568 = vmatprep.subr.mxu0 %v2896
    %3569 = vmatpush1.msra.mxu0 %v2895
    %3570 = vmatprep.subr.mxu0 %v2904
    %3571 = vmatpush1.msra.mxu0 %v2903
    %3572 = vmatprep.subr.mxu0 %v2912
    %3573 = vmatpush1.msra.mxu0 %v2911
    %3574 = vmatprep.subr.mxu0 %v2920
    %3575 = vmatpush1.msra.mxu0 %v2919
    %3576 = vmatprep.subr.mxu0 %v2928
    %3577 = vmatpush1.msra.mxu0 %v2927
    %3578 = vmatprep.mubr.f32.mxu0 %v1900
    %3579 = vmatmul.mubr.f32.gmra.mrb[0].mxu0 %v1899
    %v3580 = vpop.f32.mrb[0].mxu0
    %v3581 = vadd.f32 %v3504, %v3580
    %v3582 = vpop.f32.mrb[0].mxu0
    %v3583 = vadd.f32 %v3506, %v3582
    %3584 = vmatprep.mubr.f32.mxu0 %v1908
    %3585 = vmatmul.mubr.f32.gmra.mrb[0].mxu0 %v1907
    %v3586 = vpop.f32.mrb[0].mxu0
    %v3587 = vadd.f32 %v3510, %v3586
    %v3588 = vpop.f32.mrb[0].mxu0
    %v3589 = vadd.f32 %v3512, %v3588
    %3590 = vdwg.mxu0
    %3591 = vmatprep.subr.mxu0 %v1914
    %3592 = vmatpush1.msra.mxu0 %v1913
    %3593 = vmatprep.subr.mxu0 %v1922
    %3594 = vmatpush1.msra.mxu0 %v1921
    %3595 = vmatprep.subr.mxu0 %v1930
    %3596 = vmatpush1.msra.mxu0 %v1929
    %3597 = vmatprep.subr.mxu0 %v1938
    %3598 = vmatpush1.msra.mxu0 %v1937
    %3599 = vmatprep.subr.mxu0 %v1946
    %3600 = vmatpush1.msra.mxu0 %v1945
    %3601 = vmatprep.subr.mxu0 %v1954
    %3602 = vmatpush1.msra.mxu0 %v1953
    %3603 = vmatprep.subr.mxu0 %v1962
    %3604 = vmatpush1.msra.mxu0 %v1961
    %3605 = vmatprep.subr.mxu0 %v1970
    %3606 = vmatpush1.msra.mxu0 %v1969
    %3607 = vmatprep.subr.mxu0 %v1978
    %3608 = vmatpush1.msra.mxu0 %v1977
    %3609 = vmatprep.subr.mxu0 %v1986
    %3610 = vmatpush1.msra.mxu0 %v1985
    %3611 = vmatprep.subr.mxu0 %v1994
    %3612 = vmatpush1.msra.mxu0 %v1993
    %3613 = vmatprep.subr.mxu0 %v2002
    %3614 = vmatpush1.msra.mxu0 %v2001
    %3615 = vmatprep.subr.mxu0 %v2010
    %3616 = vmatpush1.msra.mxu0 %v2009
    %3617 = vmatprep.subr.mxu0 %v2018
    %3618 = vmatpush1.msra.mxu0 %v2017
    %3619 = vmatprep.subr.mxu0 %v2026
    %3620 = vmatpush1.msra.mxu0 %v2025
    %3621 = vmatprep.subr.mxu0 %v2034
    %3622 = vmatpush1.msra.mxu0 %v2033
    %3623 = vmatprep.subr.mxu0 %v2042
    %3624 = vmatpush1.msra.mxu0 %v2041
    %3625 = vmatprep.subr.mxu0 %v2050
    %3626 = vmatpush1.msra.mxu0 %v2049
    %3627 = vmatprep.subr.mxu0 %v2058
    %3628 = vmatpush1.msra.mxu0 %v2057
    %3629 = vmatprep.subr.mxu0 %v2066
    %3630 = vmatpush1.msra.mxu0 %v2065
    %3631 = vmatprep.subr.mxu0 %v2074
    %3632 = vmatpush1.msra.mxu0 %v2073
    %3633 = vmatprep.subr.mxu0 %v2082
    %3634 = vmatpush1.msra.mxu0 %v2081
    %3635 = vmatprep.subr.mxu0 %v2090
    %3636 = vmatpush1.msra.mxu0 %v2089
    %3637 = vmatprep.subr.mxu0 %v2098
    %3638 = vmatpush1.msra.mxu0 %v2097
    %3639 = vmatprep.subr.mxu0 %v2106
    %3640 = vmatpush1.msra.mxu0 %v2105
    %3641 = vmatprep.subr.mxu0 %v2114
    %3642 = vmatpush1.msra.mxu0 %v2113
    %3643 = vmatprep.subr.mxu0 %v2122
    %3644 = vmatpush1.msra.mxu0 %v2121
    %3645 = vmatprep.subr.mxu0 %v2130
    %3646 = vmatpush1.msra.mxu0 %v2129
    %3647 = vmatprep.subr.mxu0 %v2138
    %3648 = vmatpush1.msra.mxu0 %v2137
    %3649 = vmatprep.subr.mxu0 %v2146
    %3650 = vmatpush1.msra.mxu0 %v2145
    %3651 = vmatprep.subr.mxu0 %v2154
    %3652 = vmatpush1.msra.mxu0 %v2153
    %3653 = vmatprep.subr.mxu0 %v2162
    %3654 = vmatpush1.msra.mxu0 %v2161
    %3655 = vmatprep.mubr.f32.mxu0 %v1894
    %3656 = vmatmul.mubr.f32.gmra.mrb[0].mxu0 %v1893
    %v3657 = vpop.f32.mrb[0].mxu0
    %v3658 = vadd.f32 %v2954, %v3657
    %v3659 = vpop.f32.mrb[0].mxu0
    %v3660 = vadd.f32 %v2958, %v3659
    %3661 = vmatprep.mubr.f32.mxu0 %v1902
    %3662 = vmatmul.mubr.f32.gmra.mrb[0].mxu0 %v1901
    %v3663 = vpop.f32.mrb[0].mxu0
    %v3664 = vadd.f32 %v2954, %v3663
    %v3665 = vpop.f32.mrb[0].mxu0
    %v3666 = vadd.f32 %v2958, %v3665
    %3667 = vdwg.mxu0
    %3668 = vmatprep.subr.mxu0 %v2170
    %3669 = vmatpush1.msra.mxu0 %v2169
    %3670 = vmatprep.subr.mxu0 %v2178
    %3671 = vmatpush1.msra.mxu0 %v2177
    %3672 = vmatprep.subr.mxu0 %v2186
    %3673 = vmatpush1.msra.mxu0 %v2185
    %3674 = vmatprep.subr.mxu0 %v2194
    %3675 = vmatpush1.msra.mxu0 %v2193
    %3676 = vmatprep.subr.mxu0 %v2202
    %3677 = vmatpush1.msra.mxu0 %v2201
    %3678 = vmatprep.subr.mxu0 %v2210
    %3679 = vmatpush1.msra.mxu0 %v2209
    %3680 = vmatprep.subr.mxu0 %v2218
    %3681 = vmatpush1.msra.mxu0 %v2217
    %3682 = vmatprep.subr.mxu0 %v2226
    %3683 = vmatpush1.msra.mxu0 %v2225
    %3684 = vmatprep.subr.mxu0 %v2234
    %3685 = vmatpush1.msra.mxu0 %v2233
    %3686 = vmatprep.subr.mxu0 %v2242
    %3687 = vmatpush1.msra.mxu0 %v2241
    %3688 = vmatprep.subr.mxu0 %v2250
    %3689 = vmatpush1.msra.mxu0 %v2249
    %3690 = vmatprep.subr.mxu0 %v2258
    %3691 = vmatpush1.msra.mxu0 %v2257
    %3692 = vmatprep.subr.mxu0 %v2266
    %3693 = vmatpush1.msra.mxu0 %v2265
    %3694 = vmatprep.subr.mxu0 %v2274
    %3695 = vmatpush1.msra.mxu0 %v2273
    %3696 = vmatprep.subr.mxu0 %v2282
    %3697 = vmatpush1.msra.mxu0 %v2281
    %3698 = vmatprep.subr.mxu0 %v2290
    %3699 = vmatpush1.msra.mxu0 %v2289
    %3700 = vmatprep.subr.mxu0 %v2298
    %3701 = vmatpush1.msra.mxu0 %v2297
    %3702 = vmatprep.subr.mxu0 %v2306
    %3703 = vmatpush1.msra.mxu0 %v2305
    %3704 = vmatprep.subr.mxu0 %v2314
    %3705 = vmatpush1.msra.mxu0 %v2313
    %3706 = vmatprep.subr.mxu0 %v2322
    %3707 = vmatpush1.msra.mxu0 %v2321
    %3708 = vmatprep.subr.mxu0 %v2330
    %3709 = vmatpush1.msra.mxu0 %v2329
    %3710 = vmatprep.subr.mxu0 %v2338
    %3711 = vmatpush1.msra.mxu0 %v2337
    %3712 = vmatprep.subr.mxu0 %v2346
    %3713 = vmatpush1.msra.mxu0 %v2345
    %3714 = vmatprep.subr.mxu0 %v2354
    %3715 = vmatpush1.msra.mxu0 %v2353
    %3716 = vmatprep.subr.mxu0 %v2362
    %3717 = vmatpush1.msra.mxu0 %v2361
    %3718 = vmatprep.subr.mxu0 %v2370
    %3719 = vmatpush1.msra.mxu0 %v2369
    %3720 = vmatprep.subr.mxu0 %v2378
    %3721 = vmatpush1.msra.mxu0 %v2377
    %3722 = vmatprep.subr.mxu0 %v2386
    %3723 = vmatpush1.msra.mxu0 %v2385
    %3724 = vmatprep.subr.mxu0 %v2394
    %3725 = vmatpush1.msra.mxu0 %v2393
    %3726 = vmatprep.subr.mxu0 %v2402
    %3727 = vmatpush1.msra.mxu0 %v2401
    %3728 = vmatprep.subr.mxu0 %v2410
    %3729 = vmatpush1.msra.mxu0 %v2409
    %3730 = vmatprep.subr.mxu0 %v2418
    %3731 = vmatpush1.msra.mxu0 %v2417
    %3732 = vmatprep.mubr.f32.mxu0 %v1896
    %3733 = vmatmul.mubr.f32.gmra.mrb[0].mxu0 %v1895
    %v3734 = vpop.f32.mrb[0].mxu0
    %v3735 = vadd.f32 %v3658, %v3734
    %v3736 = vpop.f32.mrb[0].mxu0
    %v3737 = vadd.f32 %v3660, %v3736
    %3738 = vmatprep.mubr.f32.mxu0 %v1904
    %3739 = vmatmul.mubr.f32.gmra.mrb[0].mxu0 %v1903
    %v3740 = vpop.f32.mrb[0].mxu0
    %v3741 = vadd.f32 %v3664, %v3740
    %v3742 = vpop.f32.mrb[0].mxu0
    %v3743 = vadd.f32 %v3666, %v3742
    %3744 = vdwg.mxu0
    %3745 = vmatprep.subr.mxu0 %v2426
    %3746 = vmatpush1.msra.mxu0 %v2425
    %3747 = vmatprep.subr.mxu0 %v2434
    %3748 = vmatpush1.msra.mxu0 %v2433
    %3749 = vmatprep.subr.mxu0 %v2442
    %3750 = vmatpush1.msra.mxu0 %v2441
    %3751 = vmatprep.subr.mxu0 %v2450
    %3752 = vmatpush1.msra.mxu0 %v2449
    %3753 = vmatprep.subr.mxu0 %v2458
    %3754 = vmatpush1.msra.mxu0 %v2457
    %3755 = vmatprep.subr.mxu0 %v2466
    %3756 = vmatpush1.msra.mxu0 %v2465
    %3757 = vmatprep.subr.mxu0 %v2474
    %3758 = vmatpush1.msra.mxu0 %v2473
    %3759 = vmatprep.subr.mxu0 %v2482
    %3760 = vmatpush1.msra.mxu0 %v2481
    %3761 = vmatprep.subr.mxu0 %v2490
    %3762 = vmatpush1.msra.mxu0 %v2489
    %3763 = vmatprep.subr.mxu0 %v2498
    %3764 = vmatpush1.msra.mxu0 %v2497
    %3765 = vmatprep.subr.mxu0 %v2506
    %3766 = vmatpush1.msra.mxu0 %v2505
    %3767 = vmatprep.subr.mxu0 %v2514
    %3768 = vmatpush1.msra.mxu0 %v2513
    %3769 = vmatprep.subr.mxu0 %v2522
    %3770 = vmatpush1.msra.mxu0 %v2521
    %3771 = vmatprep.subr.mxu0 %v2530
    %3772 = vmatpush1.msra.mxu0 %v2529
    %3773 = vmatprep.subr.mxu0 %v2538
    %3774 = vmatpush1.msra.mxu0 %v2537
    %3775 = vmatprep.subr.mxu0 %v2546
    %3776 = vmatpush1.msra.mxu0 %v2545
    %3777 = vmatprep.subr.mxu0 %v2554
    %3778 = vmatpush1.msra.mxu0 %v2553
    %3779 = vmatprep.subr.mxu0 %v2562
    %3780 = vmatpush1.msra.mxu0 %v2561
    %3781 = vmatprep.subr.mxu0 %v2570
    %3782 = vmatpush1.msra.mxu0 %v2569
    %3783 = vmatprep.subr.mxu0 %v2578
    %3784 = vmatpush1.msra.mxu0 %v2577
    %3785 = vmatprep.subr.mxu0 %v2586
    %3786 = vmatpush1.msra.mxu0 %v2585
    %3787 = vmatprep.subr.mxu0 %v2594
    %3788 = vmatpush1.msra.mxu0 %v2593
    %3789 = vmatprep.subr.mxu0 %v2602
    %3790 = vmatpush1.msra.mxu0 %v2601
    %3791 = vmatprep.subr.mxu0 %v2610
    %3792 = vmatpush1.msra.mxu0 %v2609
    %3793 = vmatprep.subr.mxu0 %v2618
    %3794 = vmatpush1.msra.mxu0 %v2617
    %3795 = vmatprep.subr.mxu0 %v2626
    %3796 = vmatpush1.msra.mxu0 %v2625
    %3797 = vmatprep.subr.mxu0 %v2634
    %3798 = vmatpush1.msra.mxu0 %v2633
    %3799 = vmatprep.subr.mxu0 %v2642
    %3800 = vmatpush1.msra.mxu0 %v2641
    %3801 = vmatprep.subr.mxu0 %v2650
    %3802 = vmatpush1.msra.mxu0 %v2649
    %3803 = vmatprep.subr.mxu0 %v2658
    %3804 = vmatpush1.msra.mxu0 %v2657
    %3805 = vmatprep.subr.mxu0 %v2666
    %3806 = vmatpush1.msra.mxu0 %v2665
    %3807 = vmatprep.subr.mxu0 %v2674
    %3808 = vmatpush1.msra.mxu0 %v2673
    %3809 = vmatprep.mubr.f32.mxu0 %v1898
    %3810 = vmatmul.mubr.f32.gmra.mrb[0].mxu0 %v1897
    %v3811 = vpop.f32.mrb[0].mxu0
    %v3812 = vadd.f32 %v3735, %v3811
    %v3813 = vpop.f32.mrb[0].mxu0
    %v3814 = vadd.f32 %v3737, %v3813
    %3815 = vmatprep.mubr.f32.mxu0 %v1906
    %3816 = vmatmul.mubr.f32.gmra.mrb[0].mxu0 %v1905
    %v3817 = vpop.f32.mrb[0].mxu0
    %v3818 = vadd.f32 %v3741, %v3817
    %v3819 = vpop.f32.mrb[0].mxu0
    %v3820 = vadd.f32 %v3743, %v3819
    %3821 = vdwg.mxu0
    %3822 = vmatprep.subr.mxu0 %v2682
    %3823 = vmatpush1.msra.mxu0 %v2681
    %3824 = vmatprep.subr.mxu0 %v2690
    %3825 = vmatpush1.msra.mxu0 %v2689
    %3826 = vmatprep.subr.mxu0 %v2698
    %3827 = vmatpush1.msra.mxu0 %v2697
    %3828 = vmatprep.subr.mxu0 %v2706
    %3829 = vmatpush1.msra.mxu0 %v2705
    %3830 = vmatprep.subr.mxu0 %v2714
    %3831 = vmatpush1.msra.mxu0 %v2713
    %3832 = vmatprep.subr.mxu0 %v2722
    %3833 = vmatpush1.msra.mxu0 %v2721
    %3834 = vmatprep.subr.mxu0 %v2730
    %3835 = vmatpush1.msra.mxu0 %v2729
    %3836 = vmatprep.subr.mxu0 %v2738
    %3837 = vmatpush1.msra.mxu0 %v2737
    %3838 = vmatprep.subr.mxu0 %v2746
    %3839 = vmatpush1.msra.mxu0 %v2745
    %3840 = vmatprep.subr.mxu0 %v2754
    %3841 = vmatpush1.msra.mxu0 %v2753
    %3842 = vmatprep.subr.mxu0 %v2762
    %3843 = vmatpush1.msra.mxu0 %v2761
    %3844 = vmatprep.subr.mxu0 %v2770
    %3845 = vmatpush1.msra.mxu0 %v2769
    %3846 = vmatprep.subr.mxu0 %v2778
    %3847 = vmatpush1.msra.mxu0 %v2777
    %3848 = vmatprep.subr.mxu0 %v2786
    %3849 = vmatpush1.msra.mxu0 %v2785
    %3850 = vmatprep.subr.mxu0 %v2794
    %3851 = vmatpush1.msra.mxu0 %v2793
    %3852 = vmatprep.subr.mxu0 %v2802
    %3853 = vmatpush1.msra.mxu0 %v2801
    %3854 = vmatprep.subr.mxu0 %v2810
    %3855 = vmatpush1.msra.mxu0 %v2809
    %3856 = vmatprep.subr.mxu0 %v2818
    %3857 = vmatpush1.msra.mxu0 %v2817
    %3858 = vmatprep.subr.mxu0 %v2826
    %3859 = vmatpush1.msra.mxu0 %v2825
    %3860 = vmatprep.subr.mxu0 %v2834
    %3861 = vmatpush1.msra.mxu0 %v2833
    %3862 = vmatprep.subr.mxu0 %v2842
    %3863 = vmatpush1.msra.mxu0 %v2841
    %3864 = vmatprep.subr.mxu0 %v2850
    %3865 = vmatpush1.msra.mxu0 %v2849
    %3866 = vmatprep.subr.mxu0 %v2858
    %3867 = vmatpush1.msra.mxu0 %v2857
    %3868 = vmatprep.subr.mxu0 %v2866
    %3869 = vmatpush1.msra.mxu0 %v2865
    %3870 = vmatprep.subr.mxu0 %v2874
    %3871 = vmatpush1.msra.mxu0 %v2873
    %3872 = vmatprep.subr.mxu0 %v2882
    %3873 = vmatpush1.msra.mxu0 %v2881
    %3874 = vmatprep.subr.mxu0 %v2890
    %3875 = vmatpush1.msra.mxu0 %v2889
    %3876 = vmatprep.subr.mxu0 %v2898
    %3877 = vmatpush1.msra.mxu0 %v2897
    %3878 = vmatprep.subr.mxu0 %v2906
    %3879 = vmatpush1.msra.mxu0 %v2905
    %3880 = vmatprep.subr.mxu0 %v2914
    %3881 = vmatpush1.msra.mxu0 %v2913
    %3882 = vmatprep.subr.mxu0 %v2922
    %3883 = vmatpush1.msra.mxu0 %v2921
    %3884 = vmatprep.subr.mxu0 %v2930
    %3885 = vmatpush1.msra.mxu0 %v2929
    %3886 = vmatprep.mubr.f32.mxu0 %v1900
    %3887 = vmatmul.mubr.f32.gmra.mrb[0].mxu0 %v1899
    %v3888 = vpop.f32.mrb[0].mxu0
    %v3889 = vadd.f32 %v3812, %v3888
    %v3890 = vpop.f32.mrb[0].mxu0
    %v3891 = vadd.f32 %v3814, %v3890
    %3892 = vmatprep.mubr.f32.mxu0 %v1908
    %3893 = vmatmul.mubr.f32.gmra.mrb[0].mxu0 %v1907
    %v3894 = vpop.f32.mrb[0].mxu0
    %v3895 = vadd.f32 %v3818, %v3894
    %v3896 = vpop.f32.mrb[0].mxu0
    %v3897 = vadd.f32 %v3820, %v3896
    %3898 = vdwg.mxu0
    %3899 = vmatprep.subr.mxu0 %v1916
    %3900 = vmatpush1.msra.mxu0 %v1915
    %3901 = vmatprep.subr.mxu0 %v1924
    %3902 = vmatpush1.msra.mxu0 %v1923
    %3903 = vmatprep.subr.mxu0 %v1932
    %3904 = vmatpush1.msra.mxu0 %v1931
    %3905 = vmatprep.subr.mxu0 %v1940
    %3906 = vmatpush1.msra.mxu0 %v1939
    %3907 = vmatprep.subr.mxu0 %v1948
    %3908 = vmatpush1.msra.mxu0 %v1947
    %3909 = vmatprep.subr.mxu0 %v1956
    %3910 = vmatpush1.msra.mxu0 %v1955
    %3911 = vmatprep.subr.mxu0 %v1964
    %3912 = vmatpush1.msra.mxu0 %v1963
    %3913 = vmatprep.subr.mxu0 %v1972
    %3914 = vmatpush1.msra.mxu0 %v1971
    %3915 = vmatprep.subr.mxu0 %v1980
    %3916 = vmatpush1.msra.mxu0 %v1979
    %3917 = vmatprep.subr.mxu0 %v1988
    %3918 = vmatpush1.msra.mxu0 %v1987
    %3919 = vmatprep.subr.mxu0 %v1996
    %3920 = vmatpush1.msra.mxu0 %v1995
    %3921 = vmatprep.subr.mxu0 %v2004
    %3922 = vmatpush1.msra.mxu0 %v2003
    %3923 = vmatprep.subr.mxu0 %v2012
    %3924 = vmatpush1.msra.mxu0 %v2011
    %3925 = vmatprep.subr.mxu0 %v2020
    %3926 = vmatpush1.msra.mxu0 %v2019
    %3927 = vmatprep.subr.mxu0 %v2028
    %3928 = vmatpush1.msra.mxu0 %v2027
    %3929 = vmatprep.subr.mxu0 %v2036
    %3930 = vmatpush1.msra.mxu0 %v2035
    %3931 = vmatprep.subr.mxu0 %v2044
    %3932 = vmatpush1.msra.mxu0 %v2043
    %3933 = vmatprep.subr.mxu0 %v2052
    %3934 = vmatpush1.msra.mxu0 %v2051
    %3935 = vmatprep.subr.mxu0 %v2060
    %3936 = vmatpush1.msra.mxu0 %v2059
    %3937 = vmatprep.subr.mxu0 %v2068
    %3938 = vmatpush1.msra.mxu0 %v2067
    %3939 = vmatprep.subr.mxu0 %v2076
    %3940 = vmatpush1.msra.mxu0 %v2075
    %3941 = vmatprep.subr.mxu0 %v2084
    %3942 = vmatpush1.msra.mxu0 %v2083
    %3943 = vmatprep.subr.mxu0 %v2092
    %3944 = vmatpush1.msra.mxu0 %v2091
    %3945 = vmatprep.subr.mxu0 %v2100
    %3946 = vmatpush1.msra.mxu0 %v2099
    %3947 = vmatprep.subr.mxu0 %v2108
    %3948 = vmatpush1.msra.mxu0 %v2107
    %3949 = vmatprep.subr.mxu0 %v2116
    %3950 = vmatpush1.msra.mxu0 %v2115
    %3951 = vmatprep.subr.mxu0 %v2124
    %3952 = vmatpush1.msra.mxu0 %v2123
    %3953 = vmatprep.subr.mxu0 %v2132
    %3954 = vmatpush1.msra.mxu0 %v2131
    %3955 = vmatprep.subr.mxu0 %v2140
    %3956 = vmatpush1.msra.mxu0 %v2139
    %3957 = vmatprep.subr.mxu0 %v2148
    %3958 = vmatpush1.msra.mxu0 %v2147
    %3959 = vmatprep.subr.mxu0 %v2156
    %3960 = vmatpush1.msra.mxu0 %v2155
    %3961 = vmatprep.subr.mxu0 %v2164
    %3962 = vmatpush1.msra.mxu0 %v2163
    %3963 = vmatprep.mubr.f32.mxu0 %v1894
    %3964 = vmatmul.mubr.f32.gmra.mrb[0].mxu0 %v1893
    %v3965 = vpop.f32.mrb[0].mxu0
    %v3966 = vadd.f32 %v2962, %v3965
    %v3967 = vpop.f32.mrb[0].mxu0
    %v3968 = vadd.f32 %v2966, %v3967
    %3969 = vmatprep.mubr.f32.mxu0 %v1902
    %3970 = vmatmul.mubr.f32.gmra.mrb[0].mxu0 %v1901
    %v3971 = vpop.f32.mrb[0].mxu0
    %v3972 = vadd.f32 %v2962, %v3971
    %v3973 = vpop.f32.mrb[0].mxu0
    %v3974 = vadd.f32 %v2966, %v3973
    %3975 = vdwg.mxu0
    %3976 = vmatprep.subr.mxu0 %v2172
    %3977 = vmatpush1.msra.mxu0 %v2171
    %3978 = vmatprep.subr.mxu0 %v2180
    %3979 = vmatpush1.msra.mxu0 %v2179
    %3980 = vmatprep.subr.mxu0 %v2188
    %3981 = vmatpush1.msra.mxu0 %v2187
    %3982 = vmatprep.subr.mxu0 %v2196
    %3983 = vmatpush1.msra.mxu0 %v2195
    %3984 = vmatprep.subr.mxu0 %v2204
    %3985 = vmatpush1.msra.mxu0 %v2203
    %3986 = vmatprep.subr.mxu0 %v2212
    %3987 = vmatpush1.msra.mxu0 %v2211
    %3988 = vmatprep.subr.mxu0 %v2220
    %3989 = vmatpush1.msra.mxu0 %v2219
    %3990 = vmatprep.subr.mxu0 %v2228
    %3991 = vmatpush1.msra.mxu0 %v2227
    %3992 = vmatprep.subr.mxu0 %v2236
    %3993 = vmatpush1.msra.mxu0 %v2235
    %3994 = vmatprep.subr.mxu0 %v2244
    %3995 = vmatpush1.msra.mxu0 %v2243
    %3996 = vmatprep.subr.mxu0 %v2252
    %3997 = vmatpush1.msra.mxu0 %v2251
    %3998 = vmatprep.subr.mxu0 %v2260
    %3999 = vmatpush1.msra.mxu0 %v2259
    %4000 = vmatprep.subr.mxu0 %v2268
    %4001 = vmatpush1.msra.mxu0 %v2267
    %4002 = vmatprep.subr.mxu0 %v2276
    %4003 = vmatpush1.msra.mxu0 %v2275
    %4004 = vmatprep.subr.mxu0 %v2284
    %4005 = vmatpush1.msra.mxu0 %v2283
    %4006 = vmatprep.subr.mxu0 %v2292
    %4007 = vmatpush1.msra.mxu0 %v2291
    %4008 = vmatprep.subr.mxu0 %v2300
    %4009 = vmatpush1.msra.mxu0 %v2299
    %4010 = vmatprep.subr.mxu0 %v2308
    %4011 = vmatpush1.msra.mxu0 %v2307
    %4012 = vmatprep.subr.mxu0 %v2316
    %4013 = vmatpush1.msra.mxu0 %v2315
    %4014 = vmatprep.subr.mxu0 %v2324
    %4015 = vmatpush1.msra.mxu0 %v2323
    %4016 = vmatprep.subr.mxu0 %v2332
    %4017 = vmatpush1.msra.mxu0 %v2331
    %4018 = vmatprep.subr.mxu0 %v2340
    %4019 = vmatpush1.msra.mxu0 %v2339
    %4020 = vmatprep.subr.mxu0 %v2348
    %4021 = vmatpush1.msra.mxu0 %v2347
    %4022 = vmatprep.subr.mxu0 %v2356
    %4023 = vmatpush1.msra.mxu0 %v2355
    %4024 = vmatprep.subr.mxu0 %v2364
    %4025 = vmatpush1.msra.mxu0 %v2363
    %4026 = vmatprep.subr.mxu0 %v2372
    %4027 = vmatpush1.msra.mxu0 %v2371
    %4028 = vmatprep.subr.mxu0 %v2380
    %4029 = vmatpush1.msra.mxu0 %v2379
    %4030 = vmatprep.subr.mxu0 %v2388
    %4031 = vmatpush1.msra.mxu0 %v2387
    %4032 = vmatprep.subr.mxu0 %v2396
    %4033 = vmatpush1.msra.mxu0 %v2395
    %4034 = vmatprep.subr.mxu0 %v2404
    %4035 = vmatpush1.msra.mxu0 %v2403
    %4036 = vmatprep.subr.mxu0 %v2412
    %4037 = vmatpush1.msra.mxu0 %v2411
    %4038 = vmatprep.subr.mxu0 %v2420
    %4039 = vmatpush1.msra.mxu0 %v2419
    %4040 = vmatprep.mubr.f32.mxu0 %v1896
    %4041 = vmatmul.mubr.f32.gmra.mrb[0].mxu0 %v1895
    %v4042 = vpop.f32.mrb[0].mxu0
    %v4043 = vadd.f32 %v3966, %v4042
    %v4044 = vpop.f32.mrb[0].mxu0
    %v4045 = vadd.f32 %v3968, %v4044
    %4046 = vmatprep.mubr.f32.mxu0 %v1904
    %4047 = vmatmul.mubr.f32.gmra.mrb[0].mxu0 %v1903
    %v4048 = vpop.f32.mrb[0].mxu0
    %v4049 = vadd.f32 %v3972, %v4048
    %v4050 = vpop.f32.mrb[0].mxu0
    %v4051 = vadd.f32 %v3974, %v4050
    %4052 = vdwg.mxu0
    %4053 = vmatprep.subr.mxu0 %v2428
    %4054 = vmatpush1.msra.mxu0 %v2427
    %4055 = vmatprep.subr.mxu0 %v2436
    %4056 = vmatpush1.msra.mxu0 %v2435
    %4057 = vmatprep.subr.mxu0 %v2444
    %4058 = vmatpush1.msra.mxu0 %v2443
    %4059 = vmatprep.subr.mxu0 %v2452
    %4060 = vmatpush1.msra.mxu0 %v2451
    %4061 = vmatprep.subr.mxu0 %v2460
    %4062 = vmatpush1.msra.mxu0 %v2459
    %4063 = vmatprep.subr.mxu0 %v2468
    %4064 = vmatpush1.msra.mxu0 %v2467
    %4065 = vmatprep.subr.mxu0 %v2476
    %4066 = vmatpush1.msra.mxu0 %v2475
    %4067 = vmatprep.subr.mxu0 %v2484
    %4068 = vmatpush1.msra.mxu0 %v2483
    %4069 = vmatprep.subr.mxu0 %v2492
    %4070 = vmatpush1.msra.mxu0 %v2491
    %4071 = vmatprep.subr.mxu0 %v2500
    %4072 = vmatpush1.msra.mxu0 %v2499
    %4073 = vmatprep.subr.mxu0 %v2508
    %4074 = vmatpush1.msra.mxu0 %v2507
    %4075 = vmatprep.subr.mxu0 %v2516
    %4076 = vmatpush1.msra.mxu0 %v2515
    %4077 = vmatprep.subr.mxu0 %v2524
    %4078 = vmatpush1.msra.mxu0 %v2523
    %4079 = vmatprep.subr.mxu0 %v2532
    %4080 = vmatpush1.msra.mxu0 %v2531
    %4081 = vmatprep.subr.mxu0 %v2540
    %4082 = vmatpush1.msra.mxu0 %v2539
    %4083 = vmatprep.subr.mxu0 %v2548
    %4084 = vmatpush1.msra.mxu0 %v2547
    %4085 = vmatprep.subr.mxu0 %v2556
    %4086 = vmatpush1.msra.mxu0 %v2555
    %4087 = vmatprep.subr.mxu0 %v2564
    %4088 = vmatpush1.msra.mxu0 %v2563
    %4089 = vmatprep.subr.mxu0 %v2572
    %4090 = vmatpush1.msra.mxu0 %v2571
    %4091 = vmatprep.subr.mxu0 %v2580
    %4092 = vmatpush1.msra.mxu0 %v2579
    %4093 = vmatprep.subr.mxu0 %v2588
    %4094 = vmatpush1.msra.mxu0 %v2587
    %4095 = vmatprep.subr.mxu0 %v2596
    %4096 = vmatpush1.msra.mxu0 %v2595
    %4097 = vmatprep.subr.mxu0 %v2604
    %4098 = vmatpush1.msra.mxu0 %v2603
    %4099 = vmatprep.subr.mxu0 %v2612
    %4100 = vmatpush1.msra.mxu0 %v2611
    %4101 = vmatprep.subr.mxu0 %v2620
    %4102 = vmatpush1.msra.mxu0 %v2619
    %4103 = vmatprep.subr.mxu0 %v2628
    %4104 = vmatpush1.msra.mxu0 %v2627
    %4105 = vmatprep.subr.mxu0 %v2636
    %4106 = vmatpush1.msra.mxu0 %v2635
    %4107 = vmatprep.subr.mxu0 %v2644
    %4108 = vmatpush1.msra.mxu0 %v2643
    %4109 = vmatprep.subr.mxu0 %v2652
    %4110 = vmatpush1.msra.mxu0 %v2651
    %4111 = vmatprep.subr.mxu0 %v2660
    %4112 = vmatpush1.msra.mxu0 %v2659
    %4113 = vmatprep.subr.mxu0 %v2668
    %4114 = vmatpush1.msra.mxu0 %v2667
    %4115 = vmatprep.subr.mxu0 %v2676
    %4116 = vmatpush1.msra.mxu0 %v2675
    %4117 = vmatprep.mubr.f32.mxu0 %v1898
    %4118 = vmatmul.mubr.f32.gmra.mrb[0].mxu0 %v1897
    %v4119 = vpop.f32.mrb[0].mxu0
    %v4120 = vadd.f32 %v4043, %v4119
    %v4121 = vpop.f32.mrb[0].mxu0
    %v4122 = vadd.f32 %v4045, %v4121
    %4123 = vmatprep.mubr.f32.mxu0 %v1906
    %4124 = vmatmul.mubr.f32.gmra.mrb[0].mxu0 %v1905
    %v4125 = vpop.f32.mrb[0].mxu0
    %v4126 = vadd.f32 %v4049, %v4125
    %v4127 = vpop.f32.mrb[0].mxu0
    %v4128 = vadd.f32 %v4051, %v4127
    %4129 = vdwg.mxu0
    %4130 = vmatprep.subr.mxu0 %v2684
    %4131 = vmatpush1.msra.mxu0 %v2683
    %4132 = vmatprep.subr.mxu0 %v2692
    %4133 = vmatpush1.msra.mxu0 %v2691
    %4134 = vmatprep.subr.mxu0 %v2700
    %4135 = vmatpush1.msra.mxu0 %v2699
    %4136 = vmatprep.subr.mxu0 %v2708
    %4137 = vmatpush1.msra.mxu0 %v2707
    %4138 = vmatprep.subr.mxu0 %v2716
    %4139 = vmatpush1.msra.mxu0 %v2715
    %4140 = vmatprep.subr.mxu0 %v2724
    %4141 = vmatpush1.msra.mxu0 %v2723
    %4142 = vmatprep.subr.mxu0 %v2732
    %4143 = vmatpush1.msra.mxu0 %v2731
    %4144 = vmatprep.subr.mxu0 %v2740
    %4145 = vmatpush1.msra.mxu0 %v2739
    %4146 = vmatprep.subr.mxu0 %v2748
    %4147 = vmatpush1.msra.mxu0 %v2747
    %4148 = vmatprep.subr.mxu0 %v2756
    %4149 = vmatpush1.msra.mxu0 %v2755
    %4150 = vmatprep.subr.mxu0 %v2764
    %4151 = vmatpush1.msra.mxu0 %v2763
    %4152 = vmatprep.subr.mxu0 %v2772
    %4153 = vmatpush1.msra.mxu0 %v2771
    %4154 = vmatprep.subr.mxu0 %v2780
    %4155 = vmatpush1.msra.mxu0 %v2779
    %4156 = vmatprep.subr.mxu0 %v2788
    %4157 = vmatpush1.msra.mxu0 %v2787
    %4158 = vmatprep.subr.mxu0 %v2796
    %4159 = vmatpush1.msra.mxu0 %v2795
    %4160 = vmatprep.subr.mxu0 %v2804
    %4161 = vmatpush1.msra.mxu0 %v2803
    %4162 = vmatprep.subr.mxu0 %v2812
    %4163 = vmatpush1.msra.mxu0 %v2811
    %4164 = vmatprep.subr.mxu0 %v2820
    %4165 = vmatpush1.msra.mxu0 %v2819
    %4166 = vmatprep.subr.mxu0 %v2828
    %4167 = vmatpush1.msra.mxu0 %v2827
    %4168 = vmatprep.subr.mxu0 %v2836
    %4169 = vmatpush1.msra.mxu0 %v2835
    %4170 = vmatprep.subr.mxu0 %v2844
    %4171 = vmatpush1.msra.mxu0 %v2843
    %4172 = vmatprep.subr.mxu0 %v2852
    %4173 = vmatpush1.msra.mxu0 %v2851
    %4174 = vmatprep.subr.mxu0 %v2860
    %4175 = vmatpush1.msra.mxu0 %v2859
    %4176 = vmatprep.subr.mxu0 %v2868
    %4177 = vmatpush1.msra.mxu0 %v2867
    %4178 = vmatprep.subr.mxu0 %v2876
    %4179 = vmatpush1.msra.mxu0 %v2875
    %4180 = vmatprep.subr.mxu0 %v2884
    %4181 = vmatpush1.msra.mxu0 %v2883
    %4182 = vmatprep.subr.mxu0 %v2892
    %4183 = vmatpush1.msra.mxu0 %v2891
    %4184 = vmatprep.subr.mxu0 %v2900
    %4185 = vmatpush1.msra.mxu0 %v2899
    %4186 = vmatprep.subr.mxu0 %v2908
    %4187 = vmatpush1.msra.mxu0 %v2907
    %4188 = vmatprep.subr.mxu0 %v2916
    %4189 = vmatpush1.msra.mxu0 %v2915
    %4190 = vmatprep.subr.mxu0 %v2924
    %4191 = vmatpush1.msra.mxu0 %v2923
    %4192 = vmatprep.subr.mxu0 %v2932
    %4193 = vmatpush1.msra.mxu0 %v2931
    %4194 = vmatprep.mubr.f32.mxu0 %v1900
    %4195 = vmatmul.mubr.f32.gmra.mrb[0].mxu0 %v1899
    %v4196 = vpop.f32.mrb[0].mxu0
    %v4197 = vadd.f32 %v4120, %v4196
    %v4198 = vpop.f32.mrb[0].mxu0
    %v4199 = vadd.f32 %v4122, %v4198
    %4200 = vmatprep.mubr.f32.mxu0 %v1908
    %4201 = vmatmul.mubr.f32.gmra.mrb[0].mxu0 %v1907
    %v4202 = vpop.f32.mrb[0].mxu0
    %v4203 = vadd.f32 %v4126, %v4202
    %v4204 = vpop.f32.mrb[0].mxu0
    %v4205 = vadd.f32 %v4128, %v4204
    %4206 = vdwg.mxu0
    %v4207 = vmax.f32 %v3273, 0.0
    %v4208 = vmax.f32 %v3275, 0.0
    %v4209 = vmax.f32 %v3581, 0.0
    %v4210 = vmax.f32 %v3583, 0.0
    %v4211 = vmax.f32 %v3889, 0.0
    %v4212 = vmax.f32 %v3891, 0.0
    %v4213 = vmax.f32 %v4197, 0.0
    %v4214 = vmax.f32 %v4199, 0.0
    %v4215 = vmax.f32 %v3279, 0.0
    %v4216 = vmax.f32 %v3281, 0.0
    %v4217 = vmax.f32 %v3587, 0.0
    %v4218 = vmax.f32 %v3589, 0.0
    %v4219 = vmax.f32 %v3895, 0.0
    %v4220 = vmax.f32 %v3897, 0.0
    %v4221 = vmax.f32 %v4203, 0.0
    %v4222 = vmax.f32 %v4205, 0.0
    %v4223 = vld [vmem:[%s10] sm:$0xff]
    %v4224 = vld [vmem:[%s10 + $0x8] sm:$0xff]
    %v4225 = vld [vmem:[%s10 + $0x10] sm:$0xff]
    %v4226 = vld [vmem:[%s10 + $0x18] sm:$0xff]
    %v4227 = vld [vmem:[%s10 + $0x20] sm:$0xff]
    %v4228 = vld [vmem:[%s10 + $0x28] sm:$0xff]
    %v4229 = vld [vmem:[%s10 + $0x30] sm:$0xff]
    %v4230 = vld [vmem:[%s10 + $0x38] sm:$0xff]
    %v4231 = vld [vmem:[%s10 + $0x40] sm:$0xff]
    %v4232 = vld [vmem:[%s10 + $0x48] sm:$0xff]
    %v4233 = vld [vmem:[%s10 + $0x50] sm:$0xff]
    %v4234 = vld [vmem:[%s10 + $0x58] sm:$0xff]
    %v4235 = vld [vmem:[%s10 + $0x60] sm:$0xff]
    %v4236 = vld [vmem:[%s10 + $0x68] sm:$0xff]
    %v4237 = vld [vmem:[%s10 + $0x70] sm:$0xff]
    %v4238 = vld [vmem:[%s10 + $0x78] sm:$0xff]
    %v4239 = vld [vmem:[%s10 + $0x80] sm:$0xff]
    %v4240 = vld [vmem:[%s10 + $0x88] sm:$0xff]
    %v4241 = vld [vmem:[%s10 + $0x90] sm:$0xff]
    %v4242 = vld [vmem:[%s10 + $0x98] sm:$0xff]
    %v4243 = vld [vmem:[%s10 + $0xa0] sm:$0xff]
    %v4244 = vld [vmem:[%s10 + $0xa8] sm:$0xff]
    %v4245 = vld [vmem:[%s10 + $0xb0] sm:$0xff]
    %v4246 = vld [vmem:[%s10 + $0xb8] sm:$0xff]
    %v4247 = vld [vmem:[%s10 + $0xc0] sm:$0xff]
    %v4248 = vld [vmem:[%s10 + $0xc8] sm:$0xff]
    %v4249 = vld [vmem:[%s10 + $0xd0] sm:$0xff]
    %v4250 = vld [vmem:[%s10 + $0xd8] sm:$0xff]
    %v4251 = vld [vmem:[%s10 + $0xe0] sm:$0xff]
    %v4252 = vld [vmem:[%s10 + $0xe8] sm:$0xff]
    %v4253 = vld [vmem:[%s10 + $0xf0] sm:$0xff]
    %v4254 = vld [vmem:[%s10 + $0xf8] sm:$0xff]
    %v4255 = vld [vmem:[%s10 + $0x100] sm:$0xff]
    %v4256 = vld [vmem:[%s10 + $0x108] sm:$0xff]
    %v4257 = vld [vmem:[%s10 + $0x110] sm:$0xff]
    %v4258 = vld [vmem:[%s10 + $0x118] sm:$0xff]
    %v4259 = vld [vmem:[%s10 + $0x120] sm:$0xff]
    %v4260 = vld [vmem:[%s10 + $0x128] sm:$0xff]
    %v4261 = vld [vmem:[%s10 + $0x130] sm:$0xff]
    %v4262 = vld [vmem:[%s10 + $0x138] sm:$0xff]
    %v4263 = vld [vmem:[%s10 + $0x140] sm:$0xff]
    %v4264 = vld [vmem:[%s10 + $0x148] sm:$0xff]
    %v4265 = vld [vmem:[%s10 + $0x150] sm:$0xff]
    %v4266 = vld [vmem:[%s10 + $0x158] sm:$0xff]
    %v4267 = vld [vmem:[%s10 + $0x160] sm:$0xff]
    %v4268 = vld [vmem:[%s10 + $0x168] sm:$0xff]
    %v4269 = vld [vmem:[%s10 + $0x170] sm:$0xff]
    %v4270 = vld [vmem:[%s10 + $0x178] sm:$0xff]
    %v4271 = vld [vmem:[%s10 + $0x180] sm:$0xff]
    %v4272 = vld [vmem:[%s10 + $0x188] sm:$0xff]
    %v4273 = vld [vmem:[%s10 + $0x190] sm:$0xff]
    %v4274 = vld [vmem:[%s10 + $0x198] sm:$0xff]
    %v4275 = vld [vmem:[%s10 + $0x1a0] sm:$0xff]
    %v4276 = vld [vmem:[%s10 + $0x1a8] sm:$0xff]
    %v4277 = vld [vmem:[%s10 + $0x1b0] sm:$0xff]
    %v4278 = vld [vmem:[%s10 + $0x1b8] sm:$0xff]
    %v4279 = vld [vmem:[%s10 + $0x1c0] sm:$0xff]
    %v4280 = vld [vmem:[%s10 + $0x1c8] sm:$0xff]
    %v4281 = vld [vmem:[%s10 + $0x1d0] sm:$0xff]
    %v4282 = vld [vmem:[%s10 + $0x1d8] sm:$0xff]
    %v4283 = vld [vmem:[%s10 + $0x1e0] sm:$0xff]
    %v4284 = vld [vmem:[%s10 + $0x1e8] sm:$0xff]
    %v4285 = vld [vmem:[%s10 + $0x1f0] sm:$0xff]
    %v4286 = vld [vmem:[%s10 + $0x1f8] sm:$0xff]
    %v4287 = vld [vmem:[%s10 + $0x200] sm:$0xff]
    %v4288 = vld [vmem:[%s10 + $0x208] sm:$0xff]
    %v4289 = vld [vmem:[%s10 + $0x210] sm:$0xff]
    %v4290 = vld [vmem:[%s10 + $0x218] sm:$0xff]
    %v4291 = vld [vmem:[%s10 + $0x220] sm:$0xff]
    %v4292 = vld [vmem:[%s10 + $0x228] sm:$0xff]
    %v4293 = vld [vmem:[%s10 + $0x230] sm:$0xff]
    %v4294 = vld [vmem:[%s10 + $0x238] sm:$0xff]
    %v4295 = vld [vmem:[%s10 + $0x240] sm:$0xff]
    %v4296 = vld [vmem:[%s10 + $0x248] sm:$0xff]
    %v4297 = vld [vmem:[%s10 + $0x250] sm:$0xff]
    %v4298 = vld [vmem:[%s10 + $0x258] sm:$0xff]
    %v4299 = vld [vmem:[%s10 + $0x260] sm:$0xff]
    %v4300 = vld [vmem:[%s10 + $0x268] sm:$0xff]
    %v4301 = vld [vmem:[%s10 + $0x270] sm:$0xff]
    %v4302 = vld [vmem:[%s10 + $0x278] sm:$0xff]
    %v4303 = vld [vmem:[%s10 + $0x280] sm:$0xff]
    %v4304 = vld [vmem:[%s10 + $0x288] sm:$0xff]
    %v4305 = vld [vmem:[%s10 + $0x290] sm:$0xff]
    %v4306 = vld [vmem:[%s10 + $0x298] sm:$0xff]
    %v4307 = vld [vmem:[%s10 + $0x2a0] sm:$0xff]
    %v4308 = vld [vmem:[%s10 + $0x2a8] sm:$0xff]
    %v4309 = vld [vmem:[%s10 + $0x2b0] sm:$0xff]
    %v4310 = vld [vmem:[%s10 + $0x2b8] sm:$0xff]
    %v4311 = vld [vmem:[%s10 + $0x2c0] sm:$0xff]
    %v4312 = vld [vmem:[%s10 + $0x2c8] sm:$0xff]
    %v4313 = vld [vmem:[%s10 + $0x2d0] sm:$0xff]
    %v4314 = vld [vmem:[%s10 + $0x2d8] sm:$0xff]
    %v4315 = vld [vmem:[%s10 + $0x2e0] sm:$0xff]
    %v4316 = vld [vmem:[%s10 + $0x2e8] sm:$0xff]
    %v4317 = vld [vmem:[%s10 + $0x2f0] sm:$0xff]
    %v4318 = vld [vmem:[%s10 + $0x2f8] sm:$0xff]
    %v4319 = vld [vmem:[%s10 + $0x300] sm:$0xff]
    %v4320 = vld [vmem:[%s10 + $0x308] sm:$0xff]
    %v4321 = vld [vmem:[%s10 + $0x310] sm:$0xff]
    %v4322 = vld [vmem:[%s10 + $0x318] sm:$0xff]
    %v4323 = vld [vmem:[%s10 + $0x320] sm:$0xff]
    %v4324 = vld [vmem:[%s10 + $0x328] sm:$0xff]
    %v4325 = vld [vmem:[%s10 + $0x330] sm:$0xff]
    %v4326 = vld [vmem:[%s10 + $0x338] sm:$0xff]
    %v4327 = vld [vmem:[%s10 + $0x340] sm:$0xff]
    %v4328 = vld [vmem:[%s10 + $0x348] sm:$0xff]
    %v4329 = vld [vmem:[%s10 + $0x350] sm:$0xff]
    %v4330 = vld [vmem:[%s10 + $0x358] sm:$0xff]
    %v4331 = vld [vmem:[%s10 + $0x360] sm:$0xff]
    %v4332 = vld [vmem:[%s10 + $0x368] sm:$0xff]
    %v4333 = vld [vmem:[%s10 + $0x370] sm:$0xff]
    %v4334 = vld [vmem:[%s10 + $0x378] sm:$0xff]
    %v4335 = vld [vmem:[%s10 + $0x380] sm:$0xff]
    %v4336 = vld [vmem:[%s10 + $0x388] sm:$0xff]
    %v4337 = vld [vmem:[%s10 + $0x390] sm:$0xff]
    %v4338 = vld [vmem:[%s10 + $0x398] sm:$0xff]
    %v4339 = vld [vmem:[%s10 + $0x3a0] sm:$0xff]
    %v4340 = vld [vmem:[%s10 + $0x3a8] sm:$0xff]
    %v4341 = vld [vmem:[%s10 + $0x3b0] sm:$0xff]
    %v4342 = vld [vmem:[%s10 + $0x3b8] sm:$0xff]
    %v4343 = vld [vmem:[%s10 + $0x3c0] sm:$0xff]
    %v4344 = vld [vmem:[%s10 + $0x3c8] sm:$0xff]
    %v4345 = vld [vmem:[%s10 + $0x3d0] sm:$0xff]
    %v4346 = vld [vmem:[%s10 + $0x3d8] sm:$0xff]
    %v4347 = vld [vmem:[%s10 + $0x3e0] sm:$0xff]
    %v4348 = vld [vmem:[%s10 + $0x3e8] sm:$0xff]
    %v4349 = vld [vmem:[%s10 + $0x3f0] sm:$0xff]
    %v4350 = vld [vmem:[%s10 + $0x3f8] sm:$0xff]
    %v4351 = vld [vmem:[#allocation17] sm:$0x1]
    %v4353 = vlaneseq
    %v4354 = vshrl.u32 %v4353, 7
    %v4355 = vsub.s32 0, %v4354
    %v4356 = vrot.slane %v4351, %v4355
    %4358 = vmatprep.subr.mxu0 0.0
    %4359 = vmatpush1.msra.mxu0 %v4223
    %4360 = vmatprep.subr.mxu0 0.0
    %4361 = vmatpush1.msra.mxu0 %v4224
    %4362 = vmatprep.subr.mxu0 0.0
    %4363 = vmatpush1.msra.mxu0 %v4225
    %4364 = vmatprep.subr.mxu0 0.0
    %4365 = vmatpush1.msra.mxu0 %v4226
    %4366 = vmatprep.subr.mxu0 0.0
    %4367 = vmatpush1.msra.mxu0 %v4227
    %4368 = vmatprep.subr.mxu0 0.0
    %4369 = vmatpush1.msra.mxu0 %v4228
    %4370 = vmatprep.subr.mxu0 0.0
    %4371 = vmatpush1.msra.mxu0 %v4229
    %4372 = vmatprep.subr.mxu0 0.0
    %4373 = vmatpush1.msra.mxu0 %v4230
    %4374 = vmatprep.subr.mxu0 0.0
    %4375 = vmatpush1.msra.mxu0 %v4231
    %4376 = vmatprep.subr.mxu0 0.0
    %4377 = vmatpush1.msra.mxu0 %v4232
    %4378 = vmatprep.subr.mxu0 0.0
    %4379 = vmatpush1.msra.mxu0 %v4233
    %4380 = vmatprep.subr.mxu0 0.0
    %4381 = vmatpush1.msra.mxu0 %v4234
    %4382 = vmatprep.subr.mxu0 0.0
    %4383 = vmatpush1.msra.mxu0 %v4235
    %4384 = vmatprep.subr.mxu0 0.0
    %4385 = vmatpush1.msra.mxu0 %v4236
    %4386 = vmatprep.subr.mxu0 0.0
    %4387 = vmatpush1.msra.mxu0 %v4237
    %4388 = vmatprep.subr.mxu0 0.0
    %4389 = vmatpush1.msra.mxu0 %v4238
    %4390 = vmatprep.subr.mxu0 0.0
    %4391 = vmatpush1.msra.mxu0 %v4239
    %4392 = vmatprep.subr.mxu0 0.0
    %4393 = vmatpush1.msra.mxu0 %v4240
    %4394 = vmatprep.subr.mxu0 0.0
    %4395 = vmatpush1.msra.mxu0 %v4241
    %4396 = vmatprep.subr.mxu0 0.0
    %4397 = vmatpush1.msra.mxu0 %v4242
    %4398 = vmatprep.subr.mxu0 0.0
    %4399 = vmatpush1.msra.mxu0 %v4243
    %4400 = vmatprep.subr.mxu0 0.0
    %4401 = vmatpush1.msra.mxu0 %v4244
    %4402 = vmatprep.subr.mxu0 0.0
    %4403 = vmatpush1.msra.mxu0 %v4245
    %4404 = vmatprep.subr.mxu0 0.0
    %4405 = vmatpush1.msra.mxu0 %v4246
    %4406 = vmatprep.subr.mxu0 0.0
    %4407 = vmatpush1.msra.mxu0 %v4247
    %4408 = vmatprep.subr.mxu0 0.0
    %4409 = vmatpush1.msra.mxu0 %v4248
    %4410 = vmatprep.subr.mxu0 0.0
    %4411 = vmatpush1.msra.mxu0 %v4249
    %4412 = vmatprep.subr.mxu0 0.0
    %4413 = vmatpush1.msra.mxu0 %v4250
    %4414 = vmatprep.subr.mxu0 0.0
    %4415 = vmatpush1.msra.mxu0 %v4251
    %4416 = vmatprep.subr.mxu0 0.0
    %4417 = vmatpush1.msra.mxu0 %v4252
    %4418 = vmatprep.subr.mxu0 0.0
    %4419 = vmatpush1.msra.mxu0 %v4253
    %4420 = vmatprep.subr.mxu0 0.0
    %4421 = vmatpush1.msra.mxu0 %v4254
    %4422 = vmatprep.mubr.f32.mxu0 %v4208
    %4423 = vmatmul.mubr.f32.gmra.mrb[0].mxu0 %v4207
    %v4424 = vpop.f32.mrb[0].mxu0
    %v4425 = vadd.f32 %v4356, %v4424
    %v4426 = vpop.f32.mrb[0].mxu0
    %4427 = vmatprep.mubr.f32.mxu0 %v4216
    %4428 = vmatmul.mubr.f32.gmra.mrb[0].mxu0 %v4215
    %v4429 = vpop.f32.mrb[0].mxu0
    %v4430 = vadd.f32 %v4356, %v4429
    %v4431 = vpop.f32.mrb[0].mxu0
    %4432 = vdwg.mxu0
    %4433 = vmatprep.subr.mxu0 0.0
    %4434 = vmatpush1.msra.mxu0 %v4255
    %4435 = vmatprep.subr.mxu0 0.0
    %4436 = vmatpush1.msra.mxu0 %v4256
    %4437 = vmatprep.subr.mxu0 0.0
    %4438 = vmatpush1.msra.mxu0 %v4257
    %4439 = vmatprep.subr.mxu0 0.0
    %4440 = vmatpush1.msra.mxu0 %v4258
    %4441 = vmatprep.subr.mxu0 0.0
    %4442 = vmatpush1.msra.mxu0 %v4259
    %4443 = vmatprep.subr.mxu0 0.0
    %4444 = vmatpush1.msra.mxu0 %v4260
    %4445 = vmatprep.subr.mxu0 0.0
    %4446 = vmatpush1.msra.mxu0 %v4261
    %4447 = vmatprep.subr.mxu0 0.0
    %4448 = vmatpush1.msra.mxu0 %v4262
    %4449 = vmatprep.subr.mxu0 0.0
    %4450 = vmatpush1.msra.mxu0 %v4263
    %4451 = vmatprep.subr.mxu0 0.0
    %4452 = vmatpush1.msra.mxu0 %v4264
    %4453 = vmatprep.subr.mxu0 0.0
    %4454 = vmatpush1.msra.mxu0 %v4265
    %4455 = vmatprep.subr.mxu0 0.0
    %4456 = vmatpush1.msra.mxu0 %v4266
    %4457 = vmatprep.subr.mxu0 0.0
    %4458 = vmatpush1.msra.mxu0 %v4267
    %4459 = vmatprep.subr.mxu0 0.0
    %4460 = vmatpush1.msra.mxu0 %v4268
    %4461 = vmatprep.subr.mxu0 0.0
    %4462 = vmatpush1.msra.mxu0 %v4269
    %4463 = vmatprep.subr.mxu0 0.0
    %4464 = vmatpush1.msra.mxu0 %v4270
    %4465 = vmatprep.subr.mxu0 0.0
    %4466 = vmatpush1.msra.mxu0 %v4271
    %4467 = vmatprep.subr.mxu0 0.0
    %4468 = vmatpush1.msra.mxu0 %v4272
    %4469 = vmatprep.subr.mxu0 0.0
    %4470 = vmatpush1.msra.mxu0 %v4273
    %4471 = vmatprep.subr.mxu0 0.0
    %4472 = vmatpush1.msra.mxu0 %v4274
    %4473 = vmatprep.subr.mxu0 0.0
    %4474 = vmatpush1.msra.mxu0 %v4275
    %4475 = vmatprep.subr.mxu0 0.0
    %4476 = vmatpush1.msra.mxu0 %v4276
    %4477 = vmatprep.subr.mxu0 0.0
    %4478 = vmatpush1.msra.mxu0 %v4277
    %4479 = vmatprep.subr.mxu0 0.0
    %4480 = vmatpush1.msra.mxu0 %v4278
    %4481 = vmatprep.subr.mxu0 0.0
    %4482 = vmatpush1.msra.mxu0 %v4279
    %4483 = vmatprep.subr.mxu0 0.0
    %4484 = vmatpush1.msra.mxu0 %v4280
    %4485 = vmatprep.subr.mxu0 0.0
    %4486 = vmatpush1.msra.mxu0 %v4281
    %4487 = vmatprep.subr.mxu0 0.0
    %4488 = vmatpush1.msra.mxu0 %v4282
    %4489 = vmatprep.subr.mxu0 0.0
    %4490 = vmatpush1.msra.mxu0 %v4283
    %4491 = vmatprep.subr.mxu0 0.0
    %4492 = vmatpush1.msra.mxu0 %v4284
    %4493 = vmatprep.subr.mxu0 0.0
    %4494 = vmatpush1.msra.mxu0 %v4285
    %4495 = vmatprep.subr.mxu0 0.0
    %4496 = vmatpush1.msra.mxu0 %v4286
    %4497 = vmatprep.mubr.f32.mxu0 %v4210
    %4498 = vmatmul.mubr.f32.gmra.mrb[0].mxu0 %v4209
    %v4499 = vpop.f32.mrb[0].mxu0
    %v4500 = vadd.f32 %v4425, %v4499
    %v4501 = vpop.f32.mrb[0].mxu0
    %4502 = vmatprep.mubr.f32.mxu0 %v4218
    %4503 = vmatmul.mubr.f32.gmra.mrb[0].mxu0 %v4217
    %v4504 = vpop.f32.mrb[0].mxu0
    %v4505 = vadd.f32 %v4430, %v4504
    %v4506 = vpop.f32.mrb[0].mxu0
    %4507 = vdwg.mxu0
    %4508 = vmatprep.subr.mxu0 0.0
    %4509 = vmatpush1.msra.mxu0 %v4287
    %4510 = vmatprep.subr.mxu0 0.0
    %4511 = vmatpush1.msra.mxu0 %v4288
    %4512 = vmatprep.subr.mxu0 0.0
    %4513 = vmatpush1.msra.mxu0 %v4289
    %4514 = vmatprep.subr.mxu0 0.0
    %4515 = vmatpush1.msra.mxu0 %v4290
    %4516 = vmatprep.subr.mxu0 0.0
    %4517 = vmatpush1.msra.mxu0 %v4291
    %4518 = vmatprep.subr.mxu0 0.0
    %4519 = vmatpush1.msra.mxu0 %v4292
    %4520 = vmatprep.subr.mxu0 0.0
    %4521 = vmatpush1.msra.mxu0 %v4293
    %4522 = vmatprep.subr.mxu0 0.0
    %4523 = vmatpush1.msra.mxu0 %v4294
    %4524 = vmatprep.subr.mxu0 0.0
    %4525 = vmatpush1.msra.mxu0 %v4295
    %4526 = vmatprep.subr.mxu0 0.0
    %4527 = vmatpush1.msra.mxu0 %v4296
    %4528 = vmatprep.subr.mxu0 0.0
    %4529 = vmatpush1.msra.mxu0 %v4297
    %4530 = vmatprep.subr.mxu0 0.0
    %4531 = vmatpush1.msra.mxu0 %v4298
    %4532 = vmatprep.subr.mxu0 0.0
    %4533 = vmatpush1.msra.mxu0 %v4299
    %4534 = vmatprep.subr.mxu0 0.0
    %4535 = vmatpush1.msra.mxu0 %v4300
    %4536 = vmatprep.subr.mxu0 0.0
    %4537 = vmatpush1.msra.mxu0 %v4301
    %4538 = vmatprep.subr.mxu0 0.0
    %4539 = vmatpush1.msra.mxu0 %v4302
    %4540 = vmatprep.subr.mxu0 0.0
    %4541 = vmatpush1.msra.mxu0 %v4303
    %4542 = vmatprep.subr.mxu0 0.0
    %4543 = vmatpush1.msra.mxu0 %v4304
    %4544 = vmatprep.subr.mxu0 0.0
    %4545 = vmatpush1.msra.mxu0 %v4305
    %4546 = vmatprep.subr.mxu0 0.0
    %4547 = vmatpush1.msra.mxu0 %v4306
    %4548 = vmatprep.subr.mxu0 0.0
    %4549 = vmatpush1.msra.mxu0 %v4307
    %4550 = vmatprep.subr.mxu0 0.0
    %4551 = vmatpush1.msra.mxu0 %v4308
    %4552 = vmatprep.subr.mxu0 0.0
    %4553 = vmatpush1.msra.mxu0 %v4309
    %4554 = vmatprep.subr.mxu0 0.0
    %4555 = vmatpush1.msra.mxu0 %v4310
    %4556 = vmatprep.subr.mxu0 0.0
    %4557 = vmatpush1.msra.mxu0 %v4311
    %4558 = vmatprep.subr.mxu0 0.0
    %4559 = vmatpush1.msra.mxu0 %v4312
    %4560 = vmatprep.subr.mxu0 0.0
    %4561 = vmatpush1.msra.mxu0 %v4313
    %4562 = vmatprep.subr.mxu0 0.0
    %4563 = vmatpush1.msra.mxu0 %v4314
    %4564 = vmatprep.subr.mxu0 0.0
    %4565 = vmatpush1.msra.mxu0 %v4315
    %4566 = vmatprep.subr.mxu0 0.0
    %4567 = vmatpush1.msra.mxu0 %v4316
    %4568 = vmatprep.subr.mxu0 0.0
    %4569 = vmatpush1.msra.mxu0 %v4317
    %4570 = vmatprep.subr.mxu0 0.0
    %4571 = vmatpush1.msra.mxu0 %v4318
    %4572 = vmatprep.mubr.f32.mxu0 %v4212
    %4573 = vmatmul.mubr.f32.gmra.mrb[0].mxu0 %v4211
    %v4574 = vpop.f32.mrb[0].mxu0
    %v4575 = vadd.f32 %v4500, %v4574
    %v4576 = vpop.f32.mrb[0].mxu0
    %4577 = vmatprep.mubr.f32.mxu0 %v4220
    %4578 = vmatmul.mubr.f32.gmra.mrb[0].mxu0 %v4219
    %v4579 = vpop.f32.mrb[0].mxu0
    %v4580 = vadd.f32 %v4505, %v4579
    %v4581 = vpop.f32.mrb[0].mxu0
    %4582 = vdwg.mxu0
    %4583 = vmatprep.subr.mxu0 0.0
    %4584 = vmatpush1.msra.mxu0 %v4319
    %4585 = vmatprep.subr.mxu0 0.0
    %4586 = vmatpush1.msra.mxu0 %v4320
    %4587 = vmatprep.subr.mxu0 0.0
    %4588 = vmatpush1.msra.mxu0 %v4321
    %4589 = vmatprep.subr.mxu0 0.0
    %4590 = vmatpush1.msra.mxu0 %v4322
    %4591 = vmatprep.subr.mxu0 0.0
    %4592 = vmatpush1.msra.mxu0 %v4323
    %4593 = vmatprep.subr.mxu0 0.0
    %4594 = vmatpush1.msra.mxu0 %v4324
    %4595 = vmatprep.subr.mxu0 0.0
    %4596 = vmatpush1.msra.mxu0 %v4325
    %4597 = vmatprep.subr.mxu0 0.0
    %4598 = vmatpush1.msra.mxu0 %v4326
    %4599 = vmatprep.subr.mxu0 0.0
    %4600 = vmatpush1.msra.mxu0 %v4327
    %4601 = vmatprep.subr.mxu0 0.0
    %4602 = vmatpush1.msra.mxu0 %v4328
    %4603 = vmatprep.subr.mxu0 0.0
    %4604 = vmatpush1.msra.mxu0 %v4329
    %4605 = vmatprep.subr.mxu0 0.0
    %4606 = vmatpush1.msra.mxu0 %v4330
    %4607 = vmatprep.subr.mxu0 0.0
    %4608 = vmatpush1.msra.mxu0 %v4331
    %4609 = vmatprep.subr.mxu0 0.0
    %4610 = vmatpush1.msra.mxu0 %v4332
    %4611 = vmatprep.subr.mxu0 0.0
    %4612 = vmatpush1.msra.mxu0 %v4333
    %4613 = vmatprep.subr.mxu0 0.0
    %4614 = vmatpush1.msra.mxu0 %v4334
    %4615 = vmatprep.subr.mxu0 0.0
    %4616 = vmatpush1.msra.mxu0 %v4335
    %4617 = vmatprep.subr.mxu0 0.0
    %4618 = vmatpush1.msra.mxu0 %v4336
    %4619 = vmatprep.subr.mxu0 0.0
    %4620 = vmatpush1.msra.mxu0 %v4337
    %4621 = vmatprep.subr.mxu0 0.0
    %4622 = vmatpush1.msra.mxu0 %v4338
    %4623 = vmatprep.subr.mxu0 0.0
    %4624 = vmatpush1.msra.mxu0 %v4339
    %4625 = vmatprep.subr.mxu0 0.0
    %4626 = vmatpush1.msra.mxu0 %v4340
    %4627 = vmatprep.subr.mxu0 0.0
    %4628 = vmatpush1.msra.mxu0 %v4341
    %4629 = vmatprep.subr.mxu0 0.0
    %4630 = vmatpush1.msra.mxu0 %v4342
    %4631 = vmatprep.subr.mxu0 0.0
    %4632 = vmatpush1.msra.mxu0 %v4343
    %4633 = vmatprep.subr.mxu0 0.0
    %4634 = vmatpush1.msra.mxu0 %v4344
    %4635 = vmatprep.subr.mxu0 0.0
    %4636 = vmatpush1.msra.mxu0 %v4345
    %4637 = vmatprep.subr.mxu0 0.0
    %4638 = vmatpush1.msra.mxu0 %v4346
    %4639 = vmatprep.subr.mxu0 0.0
    %4640 = vmatpush1.msra.mxu0 %v4347
    %4641 = vmatprep.subr.mxu0 0.0
    %4642 = vmatpush1.msra.mxu0 %v4348
    %4643 = vmatprep.subr.mxu0 0.0
    %4644 = vmatpush1.msra.mxu0 %v4349
    %4645 = vmatprep.subr.mxu0 0.0
    %4646 = vmatpush1.msra.mxu0 %v4350
    %4647 = vmatprep.mubr.f32.mxu0 %v4214
    %4648 = vmatmul.mubr.f32.gmra.mrb[0].mxu0 %v4213
    %v4649 = vpop.f32.mrb[0].mxu0
    %v4650 = vadd.f32 %v4575, %v4649
    %v4651 = vpop.f32.mrb[0].mxu0
    %4652 = vmatprep.mubr.f32.mxu0 %v4222
    %4653 = vmatmul.mubr.f32.gmra.mrb[0].mxu0 %v4221
    %v4654 = vpop.f32.mrb[0].mxu0
    %v4655 = vadd.f32 %v4580, %v4654
    %v4656 = vpop.f32.mrb[0].mxu0
    %4657 = vdwg.mxu0
    %vm4658 = vcmask 80896
    %4659 = vst.msk [vmem:[#allocation19] sm:$0xff] %vm4658, %v4650
    %4660 = vst.msk [vmem:[#allocation19 + $0x8] sm:$0xff] %vm4658, %v4655
    // Predicated region
    $region90: #{tpu_custom_call.1} parent=1 // pred_check
      _
    $region91: #{tpu_custom_call.1} parent=1 // pred_check_branch
      %4662 = sbr.rel (0) target = $region93
    $region92: #{tpu_custom_call.1} parent=1 // pred_region
      %s4664 = ssub.s32 256, 256
      %4665 = vsyncadd [#allocation4], %s4664
      %s4666 = sshll.u32 [#allocation19], 4
      %s4667 = int_to_ptr.vmem [resolvable:$true] %s4666
      %4672 = dma.vmem_to_hbm [thread:$0]  %s4667, 256, %s12, [#allocation4], 128, 128, 8
    $region93: #{tpu_custom_call.1} parent=1 // pred_fallthru
      _
    // Predicated region
    $region94: #{tpu_custom_call.1} parent=1 // pred_check
      _
    $region95: #{tpu_custom_call.1} parent=1 // pred_check_branch
      %4674 = sbr.rel (0) target = $region97
    $region96: #{tpu_custom_call.1} parent=1 // pred_region
      %4675 = dma.done [#allocation4], 256
    $region97: #{tpu_custom_call.1} parent=1 // pred_fallthru
      _
    %4676 = vsyncpa [#allocation3], 1
    %4677 = vsyncpa [#allocation6], 1
    %4678 = vsyncpa [#allocation9], 1
    %4679 = vsyncpa [#allocation12], 1
    %4680 = vsyncpa [#allocation15], 1
    %4681 = vsyncpa [#allocation18], 1
    %4682 = vsyncpa [#allocation4], 1

</llo_original>
